<compile_context>
chip_gen: v7x
topology: tpu7x:2x2x1
jax: 0.10.0
libtpu: 0.0.40
codegen_flags: <defaults>
</compile_context>

<pallas_src>
import math
import functools

import jax
import jax.numpy as jnp
from jax.experimental import pallas as pl
from jax.experimental.pallas import tpu as pltpu

NEG_INF_FILL = -1000000000.0   # same fill constants as the PyTorch module
SELF_FILL = -100000.0
NORM_EPS = 1e-12


# --------------------------------------------------------------------------
# Pallas kernels (hot path)
# --------------------------------------------------------------------------
def _lsh_attention_kernel(q_ref, k_ref, v_ref, hq_ref, hk_ref, bql_ref,
                          icnt_ref, att_ref, lse_ref):
    # Block shapes (leading batch dim squeezed away via None in the BlockSpec):
    #   q        [G, bl, dk]  bf16   reordered query
    #   k        [G, kl, dk]  bf16   normalized+scaled query, look-back window
    #   v        [G, kl, dk]  bf16   reordered value, look-back window
    #   hq       [G, bl]      int32  sorted hash (= bucket*L + original position)
    #   hk       [G, kl]      int32  look-back of hq
    #   bql      [G, bl]      int32  bucket_q * L (= hq - original position)
    #   icnt     [G, bl, kl]  bf16   reciprocal duplicate-key counts
    #   att out  [G, bl, dk]  f32
    #   lse out  [G, bl]      f32
    q = q_ref[...]
    k = k_ref[...]
    v = v_ref[...]
    hq = hq_ref[...][:, :, None]          # [G, bl, 1]
    hk = hk_ref[...][:, None, :]          # [G, 1, kl]
    bql = bql_ref[...][:, :, None]        # [G, bl, 1]

    # Shared-QK scores on the MXU (bf16 operands, f32 accumulate); the
    # 1/sqrt(d_k) scale is folded into k by the wrapper.
    qk = jnp.einsum('gqd,gkd->gqk', q, k, preferred_element_type=jnp.float32)

    # Bucket + causal masks fused into one select:
    #   keep  <=>  same bucket AND pos_k <= pos_q  <=>  bql <= hk <= hq
    keep = (hk >= bql) & (hk <= hq)
    qk = jnp.where(keep, qk, NEG_INF_FILL)
    qk = jnp.where(hk == hq, SELF_FILL, qk)          # self-attention fill

    # Numerically-stable softmax over the key window; `e` is reused for both
    # the normalizer and the probabilities (single exp pass).
    m = jnp.max(qk, axis=-1, keepdims=True)
    e = jnp.exp(qk - m)
    den = jnp.sum(e, axis=-1, keepdims=True)
    lse = m + jnp.log(den)

    # exp(qk - log(cnt) - lse) == e * (1/cnt) * (1/den); 1/cnt is precomputed.
    soft = (e * icnt_ref[...].astype(jnp.float32)
            * pl.reciprocal(den, approx=True)).astype(jnp.bfloat16)

    att = jnp.einsum('gqk,gkd->gqd', soft, v, preferred_element_type=jnp.float32)

    # Outputs kept in their natural (bl, dk) / (bl,) layouts; flattening to a
    # 128-lane store would need an in-kernel sublane->lane relayout.
    att_ref[...] = att
    lse_ref[...] = lse[..., 0]


def _dup_count_kernel(key_ref, cnt_ref, *, chunk):
    # key block [L, K] int32: count how many times each entry occurs within its
    # own row (exact get_dup_keys semantics).  The K-axis reduction is chunked
    # so no [L, K, K] int32 intermediate is ever materialized.
    x = key_ref[...]
    L, K = x.shape
    acc = jnp.zeros((L, K), jnp.int32)
    for c in range(0, K, chunk):
        cols = x[:, c:c + chunk]
        acc = acc + jnp.sum((x[:, :, None] == cols[:, None, :]).astype(jnp.int32),
                            axis=-1)
    cnt_ref[...] = acc


# --------------------------------------------------------------------------
# Pallas wrappers
# --------------------------------------------------------------------------
def _bucketed_attention(q, k, v, hq, hk, bql, icnt, *, group_chunk=None):
    N, G, bl, dk = q.shape
    kl = k.shape[2]
    # group_chunk: for production shapes (bl=64, dk=64, rounds>=4, long seqs)
    # split G across the second grid axis to keep double-buffered blocks inside
    # v7x's 64 MiB VMEM; groups are independent, so any divisor of G is valid.
    gc = G if group_chunk is None else group_chunk
    assert G % gc == 0
    im4 = lambda n, g: (n, g, 0, 0)
    im3 = lambda n, g: (n, g, 0)
    return pl.pallas_call(
        _lsh_attention_kernel,
        out_shape=(jax.ShapeDtypeStruct((N, G, bl, dk), jnp.float32),
                   jax.ShapeDtypeStruct((N, G, bl), jnp.float32)),
        grid=(N, G // gc),
        in_specs=[
            pl.BlockSpec((None, gc, bl, dk), im4),
            pl.BlockSpec((None, gc, kl, dk), im4),
            pl.BlockSpec((None, gc, kl, dk), im4),
            pl.BlockSpec((None, gc, bl), im3),
            pl.BlockSpec((None, gc, kl), im3),
            pl.BlockSpec((None, gc, bl), im3),
            pl.BlockSpec((None, gc, bl, kl), im4),
        ],
        out_specs=(pl.BlockSpec((None, gc, bl, dk), im4),
                   pl.BlockSpec((None, gc, bl), im3)),
        compiler_params=pltpu.CompilerParams(
            dimension_semantics=("parallel", "parallel")),
    )(q, k, v, hq, hk, bql, icnt)


def _dup_counts(key_flat):
    N, L, K = key_flat.shape
    return pl.pallas_call(
        functools.partial(_dup_count_kernel, chunk=min(K, 128)),
        out_shape=jax.ShapeDtypeStruct((N, L, K), jnp.int32),
        grid=(N,),
        in_specs=[pl.BlockSpec((None, L, K), lambda n: (n, 0, 0))],
        out_specs=pl.BlockSpec((None, L, K), lambda n: (n, 0, 0)),
        compiler_params=pltpu.CompilerParams(dimension_semantics=("parallel",)),
    )(key_flat)


# --------------------------------------------------------------------------
# JAX glue (hashing, sorting, gathers) — mirrors the PyTorch code
# --------------------------------------------------------------------------
def _look_back(x):
    # x: [N, R, n_buckets, window, ...]; prepend the previous bucket (wrapping
    # within the round), doubling the window axis.
    prev = jnp.concatenate([x[:, :, -1:], x[:, :, :-1]], axis=2)
    return jnp.concatenate([prev, x], axis=3)


@functools.partial(jax.jit, static_argnames=("bucket_length",))
def lsh_attention_forward(query, value, rand_matrix, *, bucket_length):
    N, length, d_k = query.shape
    rounds = rand_matrix.shape[2]
    bl = bucket_length
    nb = length // bl
    kl = 2 * bl
    G = rounds * nb

    # ---- LSH hashing (F.normalize + random projection + argmax) ----
    norm = jnp.sqrt(jnp.sum(query * query, axis=-1, keepdims=True))
    q_n = query / jnp.maximum(norm, NORM_EPS)                        # [N, L, dk]
    mm = jnp.einsum('nld,ndrh->nlrh', q_n, rand_matrix)              # [N, L, R, nb//2]
    hashes = jnp.argmax(jnp.concatenate([mm, -mm], axis=-1), axis=-1).astype(jnp.int32)
    hashes = hashes * length + jnp.arange(length, dtype=jnp.int32)[None, :, None]

    hash_indice = jnp.argsort(hashes, axis=1).astype(jnp.int32)        # [N, L, R]
    sorted_hashes = jnp.take_along_axis(hashes, hash_indice, axis=1)   # [N, L, R]
    original_indice = jnp.argsort(hash_indice, axis=1).astype(jnp.int32)

    batch_idx = jnp.arange(N)[:, None, None]

    def reorder(x):    # [N, L, C] -> [N, R, nb, bl, C] in hash-sorted order
        g = x[batch_idx, hash_indice]                # [N, L, R, C]
        g = jnp.transpose(g, (0, 2, 1, 3))           # [N, R, L, C]
        return g.reshape(N, rounds, nb, bl, -1)

    def to_blocks(x):  # [N, L, R] -> [N, R, nb, bl]
        return jnp.transpose(x, (0, 2, 1)).reshape(N, rounds, nb, bl)

    # Matmul operands shipped in bf16 (f32 accumulation in the kernel); the key
    # normalization and 1/sqrt(d_k) scale are folded in here so the kernel does
    # no normalization / scaling work (and the gathers move half the bytes).
    q_s = reorder(query.astype(jnp.bfloat16))                        # [N,R,nb,bl,dk]
    k_s = reorder((q_n * (1.0 / math.sqrt(d_k))).astype(jnp.bfloat16))
    v_s = reorder(value.astype(jnp.bfloat16))
    # TODO(synk): the look-back key/value windows are still materialized in HBM
    # by XLA; for long sequences they could be gathered in-kernel (or via
    # scalar-prefetch index maps) to halve the K/V HBM traffic.
    k_w = _look_back(k_s)                                            # [N,R,nb,kl,dk]
    v_w = _look_back(v_s)

    hq_b = to_blocks(sorted_hashes)                                  # [N,R,nb,bl]
    hk_b = _look_back(hq_b)                                          # [N,R,nb,kl]
    bql_b = to_blocks(sorted_hashes - hash_indice)                   # bucket * L

    # ---- duplicate-key counts (get_dup_keys), computed in original order ----
    iq_b = to_blocks(hash_indice)
    ik_b = _look_back(iq_b)                                          # [N,R,nb,kl]
    ki = jnp.broadcast_to(ik_b[:, :, :, None, :], (N, rounds, nb, bl, kl))
    ki = jnp.transpose(ki.reshape(N, rounds, length, kl), (0, 2, 3, 1))  # [N,L,kl,R]
    oi = jnp.broadcast_to(original_indice[:, :, None, :], (N, length, kl, rounds))
    ki_orig = jnp.take_along_axis(ki, oi, axis=1)
    counts = _dup_counts(ki_orig.reshape(N, length, kl * rounds))
    inv = (1.0 / counts.astype(jnp.float32)).astype(jnp.bfloat16)    # 1/cnt, bf16
    inv = inv.reshape(N, length, kl, rounds)
    hi = jnp.broadcast_to(hash_indice[:, :, None, :], (N, length, kl, rounds))
    inv_sorted = jnp.take_along_axis(inv, hi, axis=1)                # [N,L,kl,R]
    icnt = jnp.transpose(inv_sorted, (0, 3, 1, 2)).reshape(N, G, bl, kl)

    # ---- Pallas hot path: all (round, bucket) groups of one batch*head ----
    att_k, lse_k = _bucketed_attention(
        q_s.reshape(N, G, bl, d_k), k_w.reshape(N, G, kl, d_k),
        v_w.reshape(N, G, kl, d_k), hq_b.reshape(N, G, bl),
        hk_b.reshape(N, G, kl), bql_b.reshape(N, G, bl), icnt)

    att = jnp.transpose(att_k.reshape(N, rounds, length, d_k), (0, 2, 3, 1))
    lse = jnp.transpose(lse_k.reshape(N, rounds, length), (0, 2, 1))

    # TODO(synk): deterministic_dropout (training mode) uses a torch.Generator
    # bernoulli stream with no matching JAX RNG; eval-mode semantics are kept.

    # Un-sort back to original positions and combine rounds (softmax over dim=1,
    # exactly as in the reference code).
    oi_d = jnp.broadcast_to(original_indice[:, :, None, :], (N, length, d_k, rounds))
    att = jnp.take_along_axis(att, oi_d, axis=1)
    lse = jnp.take_along_axis(lse, original_indice, axis=1)
    weights = jax.nn.softmax(lse, axis=1)
    return jnp.einsum('npdr,npr->npd', att, weights)


# --------------------------------------------------------------------------
if __name__ == "__main__":
    # hp.model: d_model=32, head=2 -> d_k=16; rounds=2; bucket_length=8
    batch, head = 2, 2
    d_model, n_heads = 32, 2
    d_k = d_model // n_heads          # 16
    rounds = 2
    bucket_length = 8
    length = 32
    N = batch * head                  # LSHAttention inputs are [batch*head, L, d_k]
    n_buckets = length // bucket_length

    key = jax.random.PRNGKey(0)
    kq, kv, kr = jax.random.split(key, 3)
    query = jax.random.normal(kq, (N, length, d_k), dtype=jnp.float32)
    value = jax.random.normal(kv, (N, length, d_k), dtype=jnp.float32)

    # deterministic stand-in for torch.randn / norm(dim=1) in LocalitySensitiveHash
    rand_matrix = jax.random.normal(kr, (N, d_k, rounds, n_buckets // 2),
                                    dtype=jnp.float32)
    rand_matrix = rand_matrix / jnp.linalg.norm(rand_matrix, axis=1, keepdims=True)

    out = lsh_attention_forward(query, value, rand_matrix,
                                bucket_length=bucket_length)
    out = jax.block_until_ready(out)

    assert out.shape == (N, length, d_k), out.shape
    assert bool(jnp.all(jnp.isfinite(out)))
    print("KERNEL_OK")
</pallas_src>

<mosaic_0001>
module attributes {stable_mosaic.version = 11 : i64} {
  func.func private @main(%arg0: i32) attributes {dimension_semantics = [#tpu.dimension_semantics<core_parallel>], iteration_bounds = array<i64: 2>, tpu.core_type = #tpu.core_type<sc_scalar_subcore>, window_params = []} {
    return
  }
}

module attributes {stable_mosaic.version = 11 : i64} {
  func.func private @main(%arg0: i32) attributes {dimension_semantics = [#tpu.dimension_semantics<core_parallel>], iteration_bounds = array<i64: 2>, tpu.core_type = #tpu.core_type<sc_scalar_subcore>, window_params = []} {
    return
  }
}

module attributes {stable_mosaic.version = 11 : i64} {
  func.func @_dup_count_kernel(%arg0: i32, %arg1: memref<1x32x32xi32, #tpu.memory_space<vmem>>, %arg2: memref<1x32x32xi32, #tpu.memory_space<vmem>>) attributes {dimension_semantics = [#tpu.dimension_semantics<parallel>], iteration_bounds = array<i64: 4>, scalar_prefetch = 0 : i64, scratch_operands = 0 : i64, tpu.core_type = #tpu.core_type<tc>, window_params = [{transform_indices = @transform_0, window_bounds = array<i64: 1, 32, 32>}, {transform_indices = @transform_1, window_bounds = array<i64: 1, 32, 32>}]} {
    %c0 = arith.constant 0 : index
    %c0_0 = arith.constant 0 : index
    %c0_1 = arith.constant 0 : index
    %0 = vector.load %arg1[%c0, %c0_0, %c0_1] : memref<1x32x32xi32, #tpu.memory_space<vmem>>, vector<1x32x32xi32>
    %1 = vector.shape_cast %0 : vector<1x32x32xi32> to vector<32x32xi32>
    %c0_i32 = arith.constant 0 : i32
    %2 = vector.broadcast %c0_i32 : i32 to vector<32x32xi32>
    %3 = vector.shape_cast %1 : vector<32x32xi32> to vector<32x32x1xi32>
    %4 = vector.shape_cast %1 : vector<32x32xi32> to vector<32x1x32xi32>
    %5 = vector.broadcast %3 : vector<32x32x1xi32> to vector<32x32x32xi32>
    %6 = vector.broadcast %4 : vector<32x1x32xi32> to vector<32x32x32xi32>
    %7 = arith.cmpi eq, %5, %6 : vector<32x32x32xi32>
    %8 = arith.extui %7 : vector<32x32x32xi1> to vector<32x32x32xi32>
    %cst = arith.constant dense<0> : vector<32x32xi32>
    %9 = vector.multi_reduction <add>, %8, %cst [2] : vector<32x32x32xi32> to vector<32x32xi32>
    %10 = arith.addi %2, %9 : vector<32x32xi32>
    %c0_2 = arith.constant 0 : index
    %c0_3 = arith.constant 0 : index
    %c0_4 = arith.constant 0 : index
    %11 = vector.load %arg2[%c0_2, %c0_3, %c0_4] : memref<1x32x32xi32, #tpu.memory_space<vmem>>, vector<1x32x32xi32>
    %12 = vector.shape_cast %11 : vector<1x32x32xi32> to vector<32x32xi32>
    %13 = vector.shape_cast %10 : vector<32x32xi32> to vector<1x32x32xi32>
    tpu.vector_store %arg2[%c0_2, %c0_3, %c0_4], %13 {strides = array<i32>} : memref<1x32x32xi32, #tpu.memory_space<vmem>>, vector<1x32x32xi32>,
    return
  }
  func.func @transform_0(%arg0: i32) -> (i32, i32, i32) {
    %c0_i32 = arith.constant 0 : i32
    %c0_i32_0 = arith.constant 0 : i32
    %c0_i32_1 = arith.constant 0 : i32
    return %arg0, %c0_i32, %c0_i32_0 : i32, i32, i32
  }
  func.func @transform_1(%arg0: i32) -> (i32, i32, i32) {
    %c0_i32 = arith.constant 0 : i32
    %c0_i32_0 = arith.constant 0 : i32
    %c0_i32_1 = arith.constant 0 : i32
    return %arg0, %c0_i32, %c0_i32_0 : i32, i32, i32
  }
}

module attributes {stable_mosaic.version = 11 : i64} {
  func.func @_lsh_attention_kernel(%arg0: i32, %arg1: i32, %arg2: memref<1x8x8x16xbf16, #tpu.memory_space<vmem>>, %arg3: memref<1x8x16x16xbf16, #tpu.memory_space<vmem>>, %arg4: memref<1x8x16x16xbf16, #tpu.memory_space<vmem>>, %arg5: memref<1x8x8xi32, #tpu.memory_space<vmem>>, %arg6: memref<1x8x16xi32, #tpu.memory_space<vmem>>, %arg7: memref<1x8x8xi32, #tpu.memory_space<vmem>>, %arg8: memref<1x8x8x16xbf16, #tpu.memory_space<vmem>>, %arg9: memref<1x8x8x16xf32, #tpu.memory_space<vmem>>, %arg10: memref<1x8x8xf32, #tpu.memory_space<vmem>>) attributes {dimension_semantics = [#tpu.dimension_semantics<parallel>, #tpu.dimension_semantics<parallel>], iteration_bounds = array<i64: 4, 1>, scalar_prefetch = 0 : i64, scratch_operands = 0 : i64, tpu.core_type = #tpu.core_type<tc>, window_params = [{transform_indices = @transform_0, window_bounds = array<i64: 1, 8, 8, 16>}, {transform_indices = @transform_1, window_bounds = array<i64: 1, 8, 16, 16>}, {transform_indices = @transform_2, window_bounds = array<i64: 1, 8, 16, 16>}, {transform_indices = @transform_3, window_bounds = array<i64: 1, 8, 8>}, {transform_indices = @transform_4, window_bounds = array<i64: 1, 8, 16>}, {transform_indices = @transform_5, window_bounds = array<i64: 1, 8, 8>}, {transform_indices = @transform_6, window_bounds = array<i64: 1, 8, 8, 16>}, {transform_indices = @transform_7, window_bounds = array<i64: 1, 8, 8, 16>}, {transform_indices = @transform_8, window_bounds = array<i64: 1, 8, 8>}]} {
    %c0 = arith.constant 0 : index
    %c0_0 = arith.constant 0 : index
    %c0_1 = arith.constant 0 : index
    %c0_2 = arith.constant 0 : index
    %0 = vector.load %arg2[%c0, %c0_0, %c0_1, %c0_2] : memref<1x8x8x16xbf16, #tpu.memory_space<vmem>>, vector<1x8x8x16xbf16>
    %1 = vector.shape_cast %0 : vector<1x8x8x16xbf16> to vector<8x8x16xbf16>
    %c0_3 = arith.constant 0 : index
    %c0_4 = arith.constant 0 : index
    %c0_5 = arith.constant 0 : index
    %c0_6 = arith.constant 0 : index
    %2 = vector.load %arg3[%c0_3, %c0_4, %c0_5, %c0_6] : memref<1x8x16x16xbf16, #tpu.memory_space<vmem>>, vector<1x8x16x16xbf16>
    %3 = vector.shape_cast %2 : vector<1x8x16x16xbf16> to vector<8x16x16xbf16>
    %c0_7 = arith.constant 0 : index
    %c0_8 = arith.constant 0 : index
    %c0_9 = arith.constant 0 : index
    %c0_10 = arith.constant 0 : index
    %4 = vector.load %arg4[%c0_7, %c0_8, %c0_9, %c0_10] : memref<1x8x16x16xbf16, #tpu.memory_space<vmem>>, vector<1x8x16x16xbf16>
    %5 = vector.shape_cast %4 : vector<1x8x16x16xbf16> to vector<8x16x16xbf16>
    %c0_11 = arith.constant 0 : index
    %c0_12 = arith.constant 0 : index
    %c0_13 = arith.constant 0 : index
    %6 = vector.load %arg5[%c0_11, %c0_12, %c0_13] : memref<1x8x8xi32, #tpu.memory_space<vmem>>, vector<1x8x8xi32>
    %7 = vector.shape_cast %6 : vector<1x8x8xi32> to vector<8x8xi32>
    %8 = vector.shape_cast %7 : vector<8x8xi32> to vector<8x8x1xi32>
    %c0_14 = arith.constant 0 : index
    %c0_15 = arith.constant 0 : index
    %c0_16 = arith.constant 0 : index
    %9 = vector.load %arg6[%c0_14, %c0_15, %c0_16] : memref<1x8x16xi32, #tpu.memory_space<vmem>>, vector<1x8x16xi32>
    %10 = vector.shape_cast %9 : vector<1x8x16xi32> to vector<8x16xi32>
    %11 = vector.shape_cast %10 : vector<8x16xi32> to vector<8x1x16xi32>
    %c0_17 = arith.constant 0 : index
    %c0_18 = arith.constant 0 : index
    %c0_19 = arith.constant 0 : index
    %12 = vector.load %arg7[%c0_17, %c0_18, %c0_19] : memref<1x8x8xi32, #tpu.memory_space<vmem>>, vector<1x8x8xi32>
    %13 = vector.shape_cast %12 : vector<1x8x8xi32> to vector<8x8xi32>
    %14 = vector.shape_cast %13 : vector<8x8xi32> to vector<8x8x1xi32>
    "tpu.trace_start"() <{level = 10 : i32, message = "gqd,gkd->gqk"}> : () -> ()
    %cst = arith.constant dense<0.000000e+00> : vector<8x8x16xf32>
    %15 = tpu.matmul %1, %3, %cst {dimension_numbers = #tpu.dot_dimension_numbers<[2], [2], [1], [1], [0, 0, 0, 1, 1, 1], [0], [0]>} : vector<8x8x16xbf16>, vector<8x16x16xbf16>, vector<8x8x16xf32> -> vector<8x8x16xf32>
    "tpu.trace_stop"() : () -> ()
    %16 = vector.broadcast %11 : vector<8x1x16xi32> to vector<8x8x16xi32>
    %17 = vector.broadcast %14 : vector<8x8x1xi32> to vector<8x8x16xi32>
    %18 = arith.cmpi sge, %16, %17 : vector<8x8x16xi32>
    %19 = vector.broadcast %11 : vector<8x1x16xi32> to vector<8x8x16xi32>
    %20 = vector.broadcast %8 : vector<8x8x1xi32> to vector<8x8x16xi32>
    %21 = arith.cmpi sle, %19, %20 : vector<8x8x16xi32>
    %22 = arith.andi %18, %21 : vector<8x8x16xi1>
    %cst_20 = arith.constant -1.000000e+09 : f32
    %23 = vector.broadcast %cst_20 : f32 to vector<8x8x16xf32>
    %24 = arith.select %22, %15, %23 : vector<8x8x16xi1>, vector<8x8x16xf32>
    %25 = vector.broadcast %11 : vector<8x1x16xi32> to vector<8x8x16xi32>
    %26 = vector.broadcast %8 : vector<8x8x1xi32> to vector<8x8x16xi32>
    %27 = arith.cmpi eq, %25, %26 : vector<8x8x16xi32>
    %cst_21 = arith.constant -1.000000e+05 : f32
    %28 = vector.broadcast %cst_21 : f32 to vector<8x8x16xf32>
    %29 = arith.select %27, %28, %24 : vector<8x8x16xi1>, vector<8x8x16xf32>
    %cst_22 = arith.constant dense<0xFF800000> : vector<8x8xf32>
    %30 = vector.multi_reduction <maximumf>, %29, %cst_22 [2] : vector<8x8x16xf32> to vector<8x8xf32>
    %31 = vector.shape_cast %30 : vector<8x8xf32> to vector<8x8x1xf32>
    %32 = vector.broadcast %31 : vector<8x8x1xf32> to vector<8x8x16xf32>
    %33 = arith.subf %29, %32 : vector<8x8x16xf32>
    %34 = math.exp %33 : vector<8x8x16xf32>
    %cst_23 = arith.constant dense<0.000000e+00> : vector<8x8xf32>
    %35 = vector.multi_reduction <add>, %34, %cst_23 [2] : vector<8x8x16xf32> to vector<8x8xf32>
    %36 = vector.shape_cast %35 : vector<8x8xf32> to vector<8x8x1xf32>
    %37 = math.log %36 : vector<8x8x1xf32>
    %38 = arith.addf %31, %37 : vector<8x8x1xf32>
    %c0_24 = arith.constant 0 : index
    %c0_25 = arith.constant 0 : index
    %c0_26 = arith.constant 0 : index
    %c0_27 = arith.constant 0 : index
    %39 = vector.load %arg8[%c0_24, %c0_25, %c0_26, %c0_27] : memref<1x8x8x16xbf16, #tpu.memory_space<vmem>>, vector<1x8x8x16xbf16>
    %40 = vector.shape_cast %39 : vector<1x8x8x16xbf16> to vector<8x8x16xbf16>
    %41 = arith.extf %40 : vector<8x8x16xbf16> to vector<8x8x16xf32>
    %42 = arith.mulf %34, %41 : vector<8x8x16xf32>
    %43 = tpu.reciprocal %36 {approx = true} : vector<8x8x1xf32> -> vector<8x8x1xf32>
    %44 = vector.broadcast %43 : vector<8x8x1xf32> to vector<8x8x16xf32>
    %45 = arith.mulf %42, %44 : vector<8x8x16xf32>
    %46 = arith.truncf %45 : vector<8x8x16xf32> to vector<8x8x16xbf16>
    "tpu.trace_start"() <{level = 10 : i32, message = "gqk,gkd->gqd"}> : () -> ()
    %cst_28 = arith.constant dense<0.000000e+00> : vector<8x8x16xf32>
    %47 = tpu.matmul %46, %5, %cst_28 {dimension_numbers = #tpu.dot_dimension_numbers<[2], [1], [1], [2], [0, 0, 0, 1, 1, 2], [0], [0]>} : vector<8x8x16xbf16>, vector<8x16x16xbf16>, vector<8x8x16xf32> -> vector<8x8x16xf32>
    "tpu.trace_stop"() : () -> ()
    %c0_29 = arith.constant 0 : index
    %c0_30 = arith.constant 0 : index
    %c0_31 = arith.constant 0 : index
    %c0_32 = arith.constant 0 : index
    %48 = vector.load %arg9[%c0_29, %c0_30, %c0_31, %c0_32] : memref<1x8x8x16xf32, #tpu.memory_space<vmem>>, vector<1x8x8x16xf32>
    %49 = vector.shape_cast %48 : vector<1x8x8x16xf32> to vector<8x8x16xf32>
    %50 = vector.shape_cast %47 : vector<8x8x16xf32> to vector<1x8x8x16xf32>
    tpu.vector_store %arg9[%c0_29, %c0_30, %c0_31, %c0_32], %50 {strides = array<i32>} : memref<1x8x8x16xf32, #tpu.memory_space<vmem>>, vector<1x8x8x16xf32>,
    %51 = vector.shape_cast %38 : vector<8x8x1xf32> to vector<8x8xf32>
    %c0_33 = arith.constant 0 : index
    %c0_34 = arith.constant 0 : index
    %c0_35 = arith.constant 0 : index
    %52 = vector.load %arg10[%c0_33, %c0_34, %c0_35] : memref<1x8x8xf32, #tpu.memory_space<vmem>>, vector<1x8x8xf32>
    %53 = vector.shape_cast %52 : vector<1x8x8xf32> to vector<8x8xf32>
    %54 = vector.shape_cast %51 : vector<8x8xf32> to vector<1x8x8xf32>
    tpu.vector_store %arg10[%c0_33, %c0_34, %c0_35], %54 {strides = array<i32>} : memref<1x8x8xf32, #tpu.memory_space<vmem>>, vector<1x8x8xf32>,
    return
  }
  func.func @transform_0(%arg0: i32, %arg1: i32) -> (i32, i32, i32, i32) {
    %c0_i32 = arith.constant 0 : i32
    %c0_i32_0 = arith.constant 0 : i32
    %c0_i32_1 = arith.constant 0 : i32
    return %arg0, %arg1, %c0_i32, %c0_i32_0 : i32, i32, i32, i32
  }
  func.func @transform_1(%arg0: i32, %arg1: i32) -> (i32, i32, i32, i32) {
    %c0_i32 = arith.constant 0 : i32
    %c0_i32_0 = arith.constant 0 : i32
    %c0_i32_1 = arith.constant 0 : i32
    return %arg0, %arg1, %c0_i32, %c0_i32_0 : i32, i32, i32, i32
  }
  func.func @transform_2(%arg0: i32, %arg1: i32) -> (i32, i32, i32, i32) {
    %c0_i32 = arith.constant 0 : i32
    %c0_i32_0 = arith.constant 0 : i32
    %c0_i32_1 = arith.constant 0 : i32
    return %arg0, %arg1, %c0_i32, %c0_i32_0 : i32, i32, i32, i32
  }
  func.func @transform_3(%arg0: i32, %arg1: i32) -> (i32, i32, i32) {
    %c0_i32 = arith.constant 0 : i32
    %c0_i32_0 = arith.constant 0 : i32
    return %arg0, %arg1, %c0_i32 : i32, i32, i32
  }
  func.func @transform_4(%arg0: i32, %arg1: i32) -> (i32, i32, i32) {
    %c0_i32 = arith.constant 0 : i32
    %c0_i32_0 = arith.constant 0 : i32
    return %arg0, %arg1, %c0_i32 : i32, i32, i32
  }
  func.func @transform_5(%arg0: i32, %arg1: i32) -> (i32, i32, i32) {
    %c0_i32 = arith.constant 0 : i32
    %c0_i32_0 = arith.constant 0 : i32
    return %arg0, %arg1, %c0_i32 : i32, i32, i32
  }
  func.func @transform_6(%arg0: i32, %arg1: i32) -> (i32, i32, i32, i32) {
    %c0_i32 = arith.constant 0 : i32
    %c0_i32_0 = arith.constant 0 : i32
    %c0_i32_1 = arith.constant 0 : i32
    return %arg0, %arg1, %c0_i32, %c0_i32_0 : i32, i32, i32, i32
  }
  func.func @transform_7(%arg0: i32, %arg1: i32) -> (i32, i32, i32, i32) {
    %c0_i32 = arith.constant 0 : i32
    %c0_i32_0 = arith.constant 0 : i32
    %c0_i32_1 = arith.constant 0 : i32
    return %arg0, %arg1, %c0_i32, %c0_i32_0 : i32, i32, i32, i32
  }
  func.func @transform_8(%arg0: i32, %arg1: i32) -> (i32, i32, i32) {
    %c0_i32 = arith.constant 0 : i32
    %c0_i32_0 = arith.constant 0 : i32
    return %arg0, %arg1, %c0_i32 : i32, i32, i32
  }
}

</mosaic_0001>

<llo_original>
// kernel: lsh_attention_forward.2
$region0: #{lsh_attention_forward.2}
  #allocation0 [shape = 'u32[]', space=smem, size = 0x4, offset = 0x4, fixed_abs, tag = 'smem constant byte address 0x4 - core index']
  #allocation1 [shape = 'u32[144,128]{1,0:T(1,128)}', space=vmem, size = 0x12000, scoped, tag = 'internal scratch']
  %s0 = inlined_call_operand.vmem [shape: s32[4,32,32], index: 0, kind: input, shape index: {}]
  %s1 = inlined_call_operand.vmem [shape: s32[4,32,32], index: 1, kind: output, shape index: {}]
  %s2 = sld [smem:[#allocation0]]
  $region37: #{lsh_attention_forward.2} parent=0
    _
  %s4 = ssub.s32 1, %s2
  %s5 = scalar_select 0, %s4, %s2
  loop: start=0, step=1, limit=6
  $region2: #{lsh_attention_forward.2} parent=0 // loop_pre_header
    _
  $region3: #{lsh_attention_forward.2} parent=0 // loop_header
    %s7 = sphi 0, %s11
    %p8 = scmp.ge.s32.totalorder %s7, 6
    %s17 = sphi 0, %s19
    %s20 = sphi 0, %s17
    %s21 = sphi 0, %s20
    %s37 = sphi 0, %s21
    %s43 = sphi 0, %s45
    %s46 = sphi 0, %s43
    %s47 = sphi 0, %s46
    %s63 = sphi 0, %s47
  $region4: #{lsh_attention_forward.2} parent=0 // loop_header_branch
    %10 = sbr.rel (%p8) target = $region8
  $region5: #{lsh_attention_forward.2} parent=0 // loop_body
    %s12 = ssub.s32 %s7, 1
    %s13 = ssub.s32 %s7, 2
    %s14 = sadd.s32 %s7, 1
    %s15 = ssub.s32 %s7, %s14
    %p16 = scmp.eq.s32.totalorder %s15, 0
    %s18 = sadd.s32 %s17, 1
    %s19 = scalar_select %p16, %s17, %s18
    %p22 = pneg %p16
    %p23 = scmp.eq.s32.totalorder %s7, 3
    %p24 = por %p22, %p23
    %p25 = scmp.ne.s32.totalorder %s17, %s20
    %p26 = scmp.eq.s32.totalorder %s7, 0
    %p27 = por %p25, %p26
    %p28 = scmp.ne.s32.totalorder %s17, %s20
    %p29 = scmp.eq.s32.totalorder %s12, 3
    %p30 = por %p28, %p29
    %p31 = scmp.ne.s32.totalorder %s20, %s21
    %p32 = scmp.eq.s32.totalorder %s12, 0
    %p33 = por %p31, %p32
    %p34 = scmp.ne.s32.totalorder %s20, %s21
    %p35 = scmp.eq.s32.totalorder %s13, 3
    %p36 = por %p34, %p35
    %p38 = scmp.ne.s32.totalorder %s21, %s37
    %p39 = scmp.eq.s32.totalorder %s13, 0
    %p40 = por %p38, %p39
    %s41 = ssub.s32 %s7, %s14
    %p42 = scmp.eq.s32.totalorder %s41, 0
    %s44 = sadd.s32 %s43, 1
    %s45 = scalar_select %p42, %s43, %s44
    %p48 = pneg %p42
    %p49 = scmp.eq.s32.totalorder %s7, 3
    %p50 = por %p48, %p49
    %p51 = scmp.ne.s32.totalorder %s43, %s46
    %p52 = scmp.eq.s32.totalorder %s7, 0
    %p53 = por %p51, %p52
    %p54 = scmp.ne.s32.totalorder %s43, %s46
    %p55 = scmp.eq.s32.totalorder %s12, 3
    %p56 = por %p54, %p55
    %p57 = scmp.ne.s32.totalorder %s46, %s47
    %p58 = scmp.eq.s32.totalorder %s12, 0
    %p59 = por %p57, %p58
    %p60 = scmp.ne.s32.totalorder %s46, %s47
    %p61 = scmp.eq.s32.totalorder %s13, 3
    %p62 = por %p60, %p61
    %p64 = scmp.ne.s32.totalorder %s47, %s63
    %p65 = scmp.eq.s32.totalorder %s13, 0
    %p66 = por %p64, %p65
    %p67 = scmp.le.s32.totalorder 1, %s7
    %p68 = scmp.lt.s32.totalorder %s7, 5
    %p69 = pnand %p67, %p68
    %p70 = pneg %p69
    // Predicated region
    $region9: #{lsh_attention_forward.2} parent=5 // pred_check
      _
    $region10: #{lsh_attention_forward.2} parent=5 // pred_check_branch
      %72 = sbr.rel (%p69) target = $region12
    $region11: #{lsh_attention_forward.2} parent=5 // pred_region
      %s73 = ssub.s32 %s7, 1
    $region12: #{lsh_attention_forward.2} parent=5 // pred_fallthru
      _
    %p74 = scmp.lt.s32.totalorder %s7, 4
    // Predicated region
    $region13: #{lsh_attention_forward.2} parent=5 // pred_check
      %p75 = pneg %p74
    $region14: #{lsh_attention_forward.2} parent=5 // pred_check_branch
      %77 = sbr.rel (%p75) target = $region16
    $region15: #{lsh_attention_forward.2} parent=5 // pred_region
      // Predicated region
      $region17: #{lsh_attention_forward.2} parent=15 // pred_check
        %p78 = pneg %p27
      $region18: #{lsh_attention_forward.2} parent=15 // pred_check_branch
        %80 = sbr.rel (%p78) target = $region20
      $region19: #{lsh_attention_forward.2} parent=15 // pred_region
        %p81 = scmp.lt.s32.totalorder %s7, 3
        %s82 = scalar_select %p81, %s7, 3
        %s83 = smul.addr %s82, 4
        %s84 = smul.addr %s83, 8
        %s85 = scalar_lea.vmem %s0, %s84
      $region20: #{lsh_attention_forward.2} parent=15 // pred_fallthru
        _
    $region16: #{lsh_attention_forward.2} parent=5 // pred_fallthru
      _
    %p86 = scmp.le.s32.totalorder 1, %s7
    %p87 = scmp.lt.s32.totalorder %s7, 5
    %p88 = pnand %p86, %p87
    %p89 = pneg %p88
    // Predicated region
    $region21: #{lsh_attention_forward.2} parent=5 // pred_check
      _
    $region22: #{lsh_attention_forward.2} parent=5 // pred_check_branch
      %91 = sbr.rel (%p88) target = $region24
    $region23: #{lsh_attention_forward.2} parent=5 // pred_region
      %s92 = ssub.s32 %s7, 1
      %p93 = scmp.lt.s32.totalorder %s12, 3
      %s94 = scalar_select %p93, %s12, 3
      %s95 = smul.addr %s94, 4
      %s96 = smul.addr %s95, 8
      %s97 = scalar_lea.vmem %s0, %s96
      %p98 = pneg %p33
      %p99 = pneg %p30
      %p100 = pneg %p59
      %p101 = pneg %p56
      %p102 = scmp.lt.s32.totalorder %s12, 3
      %s103 = scalar_select %p102, %s12, 3
      %s104 = smul.addr %s103, 4
      %s105 = smul.addr %s104, 8
      %s106 = scalar_lea.vmem %s1, %s105
      %p107 = scmp.lt.s32.totalorder %s12, 3
      %s108 = scalar_select %p107, %s12, 3
      %s109 = smul.addr %s108, 4
      %s110 = smul.addr %s109, 8
      %s111 = scalar_lea.vmem %s0, %s110
      %p112 = scmp.lt.s32.totalorder %s12, 3
      %s113 = scalar_select %p112, %s12, 3
      %s114 = smul.addr %s113, 4
      %s115 = smul.addr %s114, 8
      %s116 = scalar_lea.vmem %s1, %s115
      %v117 = vld [vmem:[%s111] sm:$0xff]
      %v118 = vld [vmem:[%s111 + $0x8] sm:$0xff]
      %v119 = vld [vmem:[%s111 + $0x10] sm:$0xff]
      %v120 = vld [vmem:[%s111 + $0x18] sm:$0xff]
      %v121 = vlaneseq
      %v122 = vshrl.u32 %v121, 7
      %v123 = vsub.s32 0, %v122
      %v124 = vrot.slane %v117, %v123
      %126 = vbcast.lane.b32.xlu0 %v124, 256
      %v127 = vpop.permute.xlu0 %126
      %s129 = sor.u32 256, 8
      %130 = vbcast.lane.b32.xlu0 %v124, %s129
      %v131 = vpop.permute.xlu0 %130
      %s133 = sor.u32 256, 16
      %134 = vbcast.lane.b32.xlu0 %v124, %s133
      %v135 = vpop.permute.xlu0 %134
      %s137 = sor.u32 256, 24
      %138 = vbcast.lane.b32.xlu0 %v124, %s137
      %v139 = vpop.permute.xlu0 %138
      %v140 = vlaneseq
      %v141 = vshrl.u32 %v140, 7
      %v142 = vsub.s32 1, %v141
      %v143 = vrot.slane %v117, %v142
      %145 = vbcast.lane.b32.xlu0 %v143, 256
      %v146 = vpop.permute.xlu0 %145
      %s148 = sor.u32 256, 8
      %149 = vbcast.lane.b32.xlu0 %v143, %s148
      %v150 = vpop.permute.xlu0 %149
      %s152 = sor.u32 256, 16
      %153 = vbcast.lane.b32.xlu0 %v143, %s152
      %v154 = vpop.permute.xlu0 %153
      %s156 = sor.u32 256, 24
      %157 = vbcast.lane.b32.xlu0 %v143, %s156
      %v158 = vpop.permute.xlu0 %157
      %v159 = vlaneseq
      %v160 = vshrl.u32 %v159, 7
      %v161 = vsub.s32 2, %v160
      %v162 = vrot.slane %v117, %v161
      %164 = vbcast.lane.b32.xlu0 %v162, 256
      %v165 = vpop.permute.xlu0 %164
      %s167 = sor.u32 256, 8
      %168 = vbcast.lane.b32.xlu0 %v162, %s167
      %v169 = vpop.permute.xlu0 %168
      %s171 = sor.u32 256, 16
      %172 = vbcast.lane.b32.xlu0 %v162, %s171
      %v173 = vpop.permute.xlu0 %172
      %s175 = sor.u32 256, 24
      %176 = vbcast.lane.b32.xlu0 %v162, %s175
      %v177 = vpop.permute.xlu0 %176
      %v178 = vlaneseq
      %v179 = vshrl.u32 %v178, 7
      %v180 = vsub.s32 3, %v179
      %v181 = vrot.slane %v117, %v180
      %183 = vbcast.lane.b32.xlu0 %v181, 256
      %v184 = vpop.permute.xlu0 %183
      %s186 = sor.u32 256, 8
      %187 = vbcast.lane.b32.xlu0 %v181, %s186
      %v188 = vpop.permute.xlu0 %187
      %s190 = sor.u32 256, 16
      %191 = vbcast.lane.b32.xlu0 %v181, %s190
      %v192 = vpop.permute.xlu0 %191
      %s194 = sor.u32 256, 24
      %195 = vbcast.lane.b32.xlu0 %v181, %s194
      %v196 = vpop.permute.xlu0 %195
      %v197 = vlaneseq
      %v198 = vshrl.u32 %v197, 7
      %v199 = vsub.s32 4, %v198
      %v200 = vrot.slane %v117, %v199
      %202 = vbcast.lane.b32.xlu0 %v200, 256
      %v203 = vpop.permute.xlu0 %202
      %s205 = sor.u32 256, 8
      %206 = vbcast.lane.b32.xlu0 %v200, %s205
      %v207 = vpop.permute.xlu0 %206
      %s209 = sor.u32 256, 16
      %210 = vbcast.lane.b32.xlu0 %v200, %s209
      %v211 = vpop.permute.xlu0 %210
      %s213 = sor.u32 256, 24
      %214 = vbcast.lane.b32.xlu0 %v200, %s213
      %v215 = vpop.permute.xlu0 %214
      %v216 = vlaneseq
      %v217 = vshrl.u32 %v216, 7
      %v218 = vsub.s32 5, %v217
      %v219 = vrot.slane %v117, %v218
      %221 = vbcast.lane.b32.xlu0 %v219, 256
      %v222 = vpop.permute.xlu0 %221
      %s224 = sor.u32 256, 8
      %225 = vbcast.lane.b32.xlu0 %v219, %s224
      %v226 = vpop.permute.xlu0 %225
      %s228 = sor.u32 256, 16
      %229 = vbcast.lane.b32.xlu0 %v219, %s228
      %v230 = vpop.permute.xlu0 %229
      %s232 = sor.u32 256, 24
      %233 = vbcast.lane.b32.xlu0 %v219, %s232
      %v234 = vpop.permute.xlu0 %233
      %v235 = vlaneseq
      %v236 = vshrl.u32 %v235, 7
      %v237 = vsub.s32 6, %v236
      %v238 = vrot.slane %v117, %v237
      %240 = vbcast.lane.b32.xlu0 %v238, 256
      %v241 = vpop.permute.xlu0 %240
      %s243 = sor.u32 256, 8
      %244 = vbcast.lane.b32.xlu0 %v238, %s243
      %v245 = vpop.permute.xlu0 %244
      %s247 = sor.u32 256, 16
      %248 = vbcast.lane.b32.xlu0 %v238, %s247
      %v249 = vpop.permute.xlu0 %248
      %s251 = sor.u32 256, 24
      %252 = vbcast.lane.b32.xlu0 %v238, %s251
      %v253 = vpop.permute.xlu0 %252
      %v254 = vlaneseq
      %v255 = vshrl.u32 %v254, 7
      %v256 = vsub.s32 7, %v255
      %v257 = vrot.slane %v117, %v256
      %259 = vbcast.lane.b32.xlu0 %v257, 256
      %v260 = vpop.permute.xlu0 %259
      %s262 = sor.u32 256, 8
      %263 = vbcast.lane.b32.xlu0 %v257, %s262
      %v264 = vpop.permute.xlu0 %263
      %s266 = sor.u32 256, 16
      %267 = vbcast.lane.b32.xlu0 %v257, %s266
      %v268 = vpop.permute.xlu0 %267
      %s270 = sor.u32 256, 24
      %271 = vbcast.lane.b32.xlu0 %v257, %s270
      %v272 = vpop.permute.xlu0 %271
      %v273 = vlaneseq
      %v274 = vshrl.u32 %v273, 7
      %v275 = vsub.s32 0, %v274
      %v276 = vrot.slane %v118, %v275
      %278 = vbcast.lane.b32.xlu0 %v276, 256
      %v279 = vpop.permute.xlu0 %278
      %s281 = sor.u32 256, 8
      %282 = vbcast.lane.b32.xlu0 %v276, %s281
      %v283 = vpop.permute.xlu0 %282
      %s285 = sor.u32 256, 16
      %286 = vbcast.lane.b32.xlu0 %v276, %s285
      %v287 = vpop.permute.xlu0 %286
      %s289 = sor.u32 256, 24
      %290 = vbcast.lane.b32.xlu0 %v276, %s289
      %v291 = vpop.permute.xlu0 %290
      %v292 = vlaneseq
      %v293 = vshrl.u32 %v292, 7
      %v294 = vsub.s32 1, %v293
      %v295 = vrot.slane %v118, %v294
      %297 = vbcast.lane.b32.xlu0 %v295, 256
      %v298 = vpop.permute.xlu0 %297
      %s300 = sor.u32 256, 8
      %301 = vbcast.lane.b32.xlu0 %v295, %s300
      %v302 = vpop.permute.xlu0 %301
      %s304 = sor.u32 256, 16
      %305 = vbcast.lane.b32.xlu0 %v295, %s304
      %v306 = vpop.permute.xlu0 %305
      %s308 = sor.u32 256, 24
      %309 = vbcast.lane.b32.xlu0 %v295, %s308
      %v310 = vpop.permute.xlu0 %309
      %v311 = vlaneseq
      %v312 = vshrl.u32 %v311, 7
      %v313 = vsub.s32 2, %v312
      %v314 = vrot.slane %v118, %v313
      %316 = vbcast.lane.b32.xlu0 %v314, 256
      %v317 = vpop.permute.xlu0 %316
      %s319 = sor.u32 256, 8
      %320 = vbcast.lane.b32.xlu0 %v314, %s319
      %v321 = vpop.permute.xlu0 %320
      %s323 = sor.u32 256, 16
      %324 = vbcast.lane.b32.xlu0 %v314, %s323
      %v325 = vpop.permute.xlu0 %324
      %s327 = sor.u32 256, 24
      %328 = vbcast.lane.b32.xlu0 %v314, %s327
      %v329 = vpop.permute.xlu0 %328
      %v330 = vlaneseq
      %v331 = vshrl.u32 %v330, 7
      %v332 = vsub.s32 3, %v331
      %v333 = vrot.slane %v118, %v332
      %335 = vbcast.lane.b32.xlu0 %v333, 256
      %v336 = vpop.permute.xlu0 %335
      %s338 = sor.u32 256, 8
      %339 = vbcast.lane.b32.xlu0 %v333, %s338
      %v340 = vpop.permute.xlu0 %339
      %s342 = sor.u32 256, 16
      %343 = vbcast.lane.b32.xlu0 %v333, %s342
      %v344 = vpop.permute.xlu0 %343
      %s346 = sor.u32 256, 24
      %347 = vbcast.lane.b32.xlu0 %v333, %s346
      %v348 = vpop.permute.xlu0 %347
      %v349 = vlaneseq
      %v350 = vshrl.u32 %v349, 7
      %v351 = vsub.s32 4, %v350
      %v352 = vrot.slane %v118, %v351
      %354 = vbcast.lane.b32.xlu0 %v352, 256
      %v355 = vpop.permute.xlu0 %354
      %s357 = sor.u32 256, 8
      %358 = vbcast.lane.b32.xlu0 %v352, %s357
      %v359 = vpop.permute.xlu0 %358
      %s361 = sor.u32 256, 16
      %362 = vbcast.lane.b32.xlu0 %v352, %s361
      %v363 = vpop.permute.xlu0 %362
      %s365 = sor.u32 256, 24
      %366 = vbcast.lane.b32.xlu0 %v352, %s365
      %v367 = vpop.permute.xlu0 %366
      %v368 = vlaneseq
      %v369 = vshrl.u32 %v368, 7
      %v370 = vsub.s32 5, %v369
      %v371 = vrot.slane %v118, %v370
      %373 = vbcast.lane.b32.xlu0 %v371, 256
      %v374 = vpop.permute.xlu0 %373
      %s376 = sor.u32 256, 8
      %377 = vbcast.lane.b32.xlu0 %v371, %s376
      %v378 = vpop.permute.xlu0 %377
      %s380 = sor.u32 256, 16
      %381 = vbcast.lane.b32.xlu0 %v371, %s380
      %v382 = vpop.permute.xlu0 %381
      %s384 = sor.u32 256, 24
      %385 = vbcast.lane.b32.xlu0 %v371, %s384
      %v386 = vpop.permute.xlu0 %385
      %v387 = vlaneseq
      %v388 = vshrl.u32 %v387, 7
      %v389 = vsub.s32 6, %v388
      %v390 = vrot.slane %v118, %v389
      %392 = vbcast.lane.b32.xlu0 %v390, 256
      %v393 = vpop.permute.xlu0 %392
      %s395 = sor.u32 256, 8
      %396 = vbcast.lane.b32.xlu0 %v390, %s395
      %v397 = vpop.permute.xlu0 %396
      %s399 = sor.u32 256, 16
      %400 = vbcast.lane.b32.xlu0 %v390, %s399
      %v401 = vpop.permute.xlu0 %400
      %s403 = sor.u32 256, 24
      %404 = vbcast.lane.b32.xlu0 %v390, %s403
      %v405 = vpop.permute.xlu0 %404
      %v406 = vlaneseq
      %v407 = vshrl.u32 %v406, 7
      %v408 = vsub.s32 7, %v407
      %v409 = vrot.slane %v118, %v408
      %411 = vbcast.lane.b32.xlu0 %v409, 256
      %v412 = vpop.permute.xlu0 %411
      %s414 = sor.u32 256, 8
      %415 = vbcast.lane.b32.xlu0 %v409, %s414
      %v416 = vpop.permute.xlu0 %415
      %s418 = sor.u32 256, 16
      %419 = vbcast.lane.b32.xlu0 %v409, %s418
      %v420 = vpop.permute.xlu0 %419
      %s422 = sor.u32 256, 24
      %423 = vbcast.lane.b32.xlu0 %v409, %s422
      %v424 = vpop.permute.xlu0 %423
      %v425 = vlaneseq
      %v426 = vshrl.u32 %v425, 7
      %v427 = vsub.s32 0, %v426
      %v428 = vrot.slane %v119, %v427
      %430 = vbcast.lane.b32.xlu0 %v428, 256
      %v431 = vpop.permute.xlu0 %430
      %s433 = sor.u32 256, 8
      %434 = vbcast.lane.b32.xlu0 %v428, %s433
      %v435 = vpop.permute.xlu0 %434
      %s437 = sor.u32 256, 16
      %438 = vbcast.lane.b32.xlu0 %v428, %s437
      %v439 = vpop.permute.xlu0 %438
      %s441 = sor.u32 256, 24
      %442 = vbcast.lane.b32.xlu0 %v428, %s441
      %v443 = vpop.permute.xlu0 %442
      %v444 = vlaneseq
      %v445 = vshrl.u32 %v444, 7
      %v446 = vsub.s32 1, %v445
      %v447 = vrot.slane %v119, %v446
      %449 = vbcast.lane.b32.xlu0 %v447, 256
      %v450 = vpop.permute.xlu0 %449
      %s452 = sor.u32 256, 8
      %453 = vbcast.lane.b32.xlu0 %v447, %s452
      %v454 = vpop.permute.xlu0 %453
      %s456 = sor.u32 256, 16
      %457 = vbcast.lane.b32.xlu0 %v447, %s456
      %v458 = vpop.permute.xlu0 %457
      %s460 = sor.u32 256, 24
      %461 = vbcast.lane.b32.xlu0 %v447, %s460
      %v462 = vpop.permute.xlu0 %461
      %v463 = vlaneseq
      %v464 = vshrl.u32 %v463, 7
      %v465 = vsub.s32 2, %v464
      %v466 = vrot.slane %v119, %v465
      %468 = vbcast.lane.b32.xlu0 %v466, 256
      %v469 = vpop.permute.xlu0 %468
      %s471 = sor.u32 256, 8
      %472 = vbcast.lane.b32.xlu0 %v466, %s471
      %v473 = vpop.permute.xlu0 %472
      %s475 = sor.u32 256, 16
      %476 = vbcast.lane.b32.xlu0 %v466, %s475
      %v477 = vpop.permute.xlu0 %476
      %s479 = sor.u32 256, 24
      %480 = vbcast.lane.b32.xlu0 %v466, %s479
      %v481 = vpop.permute.xlu0 %480
      %v482 = vlaneseq
      %v483 = vshrl.u32 %v482, 7
      %v484 = vsub.s32 3, %v483
      %v485 = vrot.slane %v119, %v484
      %487 = vbcast.lane.b32.xlu0 %v485, 256
      %v488 = vpop.permute.xlu0 %487
      %s490 = sor.u32 256, 8
      %491 = vbcast.lane.b32.xlu0 %v485, %s490
      %v492 = vpop.permute.xlu0 %491
      %s494 = sor.u32 256, 16
      %495 = vbcast.lane.b32.xlu0 %v485, %s494
      %v496 = vpop.permute.xlu0 %495
      %s498 = sor.u32 256, 24
      %499 = vbcast.lane.b32.xlu0 %v485, %s498
      %v500 = vpop.permute.xlu0 %499
      %v501 = vlaneseq
      %v502 = vshrl.u32 %v501, 7
      %v503 = vsub.s32 4, %v502
      %v504 = vrot.slane %v119, %v503
      %506 = vbcast.lane.b32.xlu0 %v504, 256
      %v507 = vpop.permute.xlu0 %506
      %s509 = sor.u32 256, 8
      %510 = vbcast.lane.b32.xlu0 %v504, %s509
      %v511 = vpop.permute.xlu0 %510
      %s513 = sor.u32 256, 16
      %514 = vbcast.lane.b32.xlu0 %v504, %s513
      %v515 = vpop.permute.xlu0 %514
      %s517 = sor.u32 256, 24
      %518 = vbcast.lane.b32.xlu0 %v504, %s517
      %v519 = vpop.permute.xlu0 %518
      %v520 = vlaneseq
      %v521 = vshrl.u32 %v520, 7
      %v522 = vsub.s32 5, %v521
      %v523 = vrot.slane %v119, %v522
      %525 = vbcast.lane.b32.xlu0 %v523, 256
      %v526 = vpop.permute.xlu0 %525
      %s528 = sor.u32 256, 8
      %529 = vbcast.lane.b32.xlu0 %v523, %s528
      %v530 = vpop.permute.xlu0 %529
      %s532 = sor.u32 256, 16
      %533 = vbcast.lane.b32.xlu0 %v523, %s532
      %v534 = vpop.permute.xlu0 %533
      %s536 = sor.u32 256, 24
      %537 = vbcast.lane.b32.xlu0 %v523, %s536
      %v538 = vpop.permute.xlu0 %537
      %v539 = vlaneseq
      %v540 = vshrl.u32 %v539, 7
      %v541 = vsub.s32 6, %v540
      %v542 = vrot.slane %v119, %v541
      %544 = vbcast.lane.b32.xlu0 %v542, 256
      %v545 = vpop.permute.xlu0 %544
      %s547 = sor.u32 256, 8
      %548 = vbcast.lane.b32.xlu0 %v542, %s547
      %v549 = vpop.permute.xlu0 %548
      %s551 = sor.u32 256, 16
      %552 = vbcast.lane.b32.xlu0 %v542, %s551
      %v553 = vpop.permute.xlu0 %552
      %s555 = sor.u32 256, 24
      %556 = vbcast.lane.b32.xlu0 %v542, %s555
      %v557 = vpop.permute.xlu0 %556
      %v558 = vlaneseq
      %v559 = vshrl.u32 %v558, 7
      %v560 = vsub.s32 7, %v559
      %v561 = vrot.slane %v119, %v560
      %563 = vbcast.lane.b32.xlu0 %v561, 256
      %v564 = vpop.permute.xlu0 %563
      %s566 = sor.u32 256, 8
      %567 = vbcast.lane.b32.xlu0 %v561, %s566
      %v568 = vpop.permute.xlu0 %567
      %s570 = sor.u32 256, 16
      %571 = vbcast.lane.b32.xlu0 %v561, %s570
      %v572 = vpop.permute.xlu0 %571
      %s574 = sor.u32 256, 24
      %575 = vbcast.lane.b32.xlu0 %v561, %s574
      %v576 = vpop.permute.xlu0 %575
      %v577 = vlaneseq
      %v578 = vshrl.u32 %v577, 7
      %v579 = vsub.s32 0, %v578
      %v580 = vrot.slane %v120, %v579
      %582 = vbcast.lane.b32.xlu0 %v580, 256
      %v583 = vpop.permute.xlu0 %582
      %s585 = sor.u32 256, 8
      %586 = vbcast.lane.b32.xlu0 %v580, %s585
      %v587 = vpop.permute.xlu0 %586
      %s589 = sor.u32 256, 16
      %590 = vbcast.lane.b32.xlu0 %v580, %s589
      %v591 = vpop.permute.xlu0 %590
      %s593 = sor.u32 256, 24
      %594 = vbcast.lane.b32.xlu0 %v580, %s593
      %v595 = vpop.permute.xlu0 %594
      %v596 = vlaneseq
      %v597 = vshrl.u32 %v596, 7
      %v598 = vsub.s32 1, %v597
      %v599 = vrot.slane %v120, %v598
      %601 = vbcast.lane.b32.xlu0 %v599, 256
      %v602 = vpop.permute.xlu0 %601
      %s604 = sor.u32 256, 8
      %605 = vbcast.lane.b32.xlu0 %v599, %s604
      %v606 = vpop.permute.xlu0 %605
      %s608 = sor.u32 256, 16
      %609 = vbcast.lane.b32.xlu0 %v599, %s608
      %v610 = vpop.permute.xlu0 %609
      %s612 = sor.u32 256, 24
      %613 = vbcast.lane.b32.xlu0 %v599, %s612
      %v614 = vpop.permute.xlu0 %613
      %v615 = vlaneseq
      %v616 = vshrl.u32 %v615, 7
      %v617 = vsub.s32 2, %v616
      %v618 = vrot.slane %v120, %v617
      %620 = vbcast.lane.b32.xlu0 %v618, 256
      %v621 = vpop.permute.xlu0 %620
      %s623 = sor.u32 256, 8
      %624 = vbcast.lane.b32.xlu0 %v618, %s623
      %v625 = vpop.permute.xlu0 %624
      %s627 = sor.u32 256, 16
      %628 = vbcast.lane.b32.xlu0 %v618, %s627
      %v629 = vpop.permute.xlu0 %628
      %s631 = sor.u32 256, 24
      %632 = vbcast.lane.b32.xlu0 %v618, %s631
      %v633 = vpop.permute.xlu0 %632
      %v634 = vlaneseq
      %v635 = vshrl.u32 %v634, 7
      %v636 = vsub.s32 3, %v635
      %v637 = vrot.slane %v120, %v636
      %639 = vbcast.lane.b32.xlu0 %v637, 256
      %v640 = vpop.permute.xlu0 %639
      %s642 = sor.u32 256, 8
      %643 = vbcast.lane.b32.xlu0 %v637, %s642
      %v644 = vpop.permute.xlu0 %643
      %s646 = sor.u32 256, 16
      %647 = vbcast.lane.b32.xlu0 %v637, %s646
      %v648 = vpop.permute.xlu0 %647
      %s650 = sor.u32 256, 24
      %651 = vbcast.lane.b32.xlu0 %v637, %s650
      %v652 = vpop.permute.xlu0 %651
      %v653 = vlaneseq
      %v654 = vshrl.u32 %v653, 7
      %v655 = vsub.s32 4, %v654
      %v656 = vrot.slane %v120, %v655
      %658 = vbcast.lane.b32.xlu0 %v656, 256
      %v659 = vpop.permute.xlu0 %658
      %s661 = sor.u32 256, 8
      %662 = vbcast.lane.b32.xlu0 %v656, %s661
      %v663 = vpop.permute.xlu0 %662
      %s665 = sor.u32 256, 16
      %666 = vbcast.lane.b32.xlu0 %v656, %s665
      %v667 = vpop.permute.xlu0 %666
      %s669 = sor.u32 256, 24
      %670 = vbcast.lane.b32.xlu0 %v656, %s669
      %v671 = vpop.permute.xlu0 %670
      %v672 = vlaneseq
      %v673 = vshrl.u32 %v672, 7
      %v674 = vsub.s32 5, %v673
      %v675 = vrot.slane %v120, %v674
      %677 = vbcast.lane.b32.xlu0 %v675, 256
      %v678 = vpop.permute.xlu0 %677
      %s680 = sor.u32 256, 8
      %681 = vbcast.lane.b32.xlu0 %v675, %s680
      %v682 = vpop.permute.xlu0 %681
      %s684 = sor.u32 256, 16
      %685 = vbcast.lane.b32.xlu0 %v675, %s684
      %v686 = vpop.permute.xlu0 %685
      %s688 = sor.u32 256, 24
      %689 = vbcast.lane.b32.xlu0 %v675, %s688
      %v690 = vpop.permute.xlu0 %689
      %v691 = vlaneseq
      %v692 = vshrl.u32 %v691, 7
      %v693 = vsub.s32 6, %v692
      %v694 = vrot.slane %v120, %v693
      %696 = vbcast.lane.b32.xlu0 %v694, 256
      %v697 = vpop.permute.xlu0 %696
      %s699 = sor.u32 256, 8
      %700 = vbcast.lane.b32.xlu0 %v694, %s699
      %v701 = vpop.permute.xlu0 %700
      %s703 = sor.u32 256, 16
      %704 = vbcast.lane.b32.xlu0 %v694, %s703
      %v705 = vpop.permute.xlu0 %704
      %s707 = sor.u32 256, 24
      %708 = vbcast.lane.b32.xlu0 %v694, %s707
      %v709 = vpop.permute.xlu0 %708
      %v710 = vlaneseq
      %v711 = vshrl.u32 %v710, 7
      %v712 = vsub.s32 7, %v711
      %v713 = vrot.slane %v120, %v712
      %715 = vbcast.lane.b32.xlu0 %v713, 256
      %v716 = vpop.permute.xlu0 %715
      %s718 = sor.u32 256, 8
      %719 = vbcast.lane.b32.xlu0 %v713, %s718
      %v720 = vpop.permute.xlu0 %719
      %s722 = sor.u32 256, 16
      %723 = vbcast.lane.b32.xlu0 %v713, %s722
      %v724 = vpop.permute.xlu0 %723
      %s726 = sor.u32 256, 24
      %727 = vbcast.lane.b32.xlu0 %v713, %s726
      %v728 = vpop.permute.xlu0 %727
      %v729 = vcombine.high %v117, %v117
      %v731 = vunpack.c.l.s4 1966171168
      %v732 = vunpack.c.0.s8 %v731
      %v733 = vlaneseq
      %v734 = vshrl.u32 %v733, 7
      %v735 = vsub.s32 %v732, %v734
      %v736 = vrot.slane %v117, %v735
      %v738 = vunpack.c.l.s4 1966171168
      %v739 = vunpack.c.0.s8 %v738
      %v740 = vlaneseq
      %v741 = vshrl.u32 %v740, 7
      %v742 = vsub.s32 %v739, %v741
      %v743 = vrot.slane %v729, %v742
      %v744 = vcombine.high %v736, %v736
      %v745 = vcombine.high %v743, %v743
      %v747 = vunpack.c.l.s4 1966171168
      %v748 = vunpack.c.0.s8 %v747
      %v749 = vlaneseq
      %v750 = vshrl.u32 %v749, 7
      %v751 = vsub.s32 %v748, %v750
      %v752 = vrot.slane %v736, %v751
      %v754 = vunpack.c.l.s4 1966171168
      %v755 = vunpack.c.0.s8 %v754
      %v756 = vlaneseq
      %v757 = vshrl.u32 %v756, 7
      %v758 = vsub.s32 %v755, %v757
      %v759 = vrot.slane %v743, %v758
      %v761 = vunpack.c.l.s4 1966171168
      %v762 = vunpack.c.0.s8 %v761
      %v763 = vlaneseq
      %v764 = vshrl.u32 %v763, 7
      %v765 = vsub.s32 %v762, %v764
      %v766 = vrot.slane %v744, %v765
      %v768 = vunpack.c.l.s4 1966171168
      %v769 = vunpack.c.0.s8 %v768
      %v770 = vlaneseq
      %v771 = vshrl.u32 %v770, 7
      %v772 = vsub.s32 %v769, %v771
      %v773 = vrot.slane %v745, %v772
      %v774 = vcombine.high %v752, %v752
      %v775 = vcombine.high %v759, %v759
      %v776 = vcombine.high %v766, %v766
      %v777 = vcombine.high %v773, %v773
      %v778 = vcombine.high %v118, %v118
      %v780 = vunpack.c.l.s4 1966171168
      %v781 = vunpack.c.0.s8 %v780
      %v782 = vlaneseq
      %v783 = vshrl.u32 %v782, 7
      %v784 = vsub.s32 %v781, %v783
      %v785 = vrot.slane %v118, %v784
      %v787 = vunpack.c.l.s4 1966171168
      %v788 = vunpack.c.0.s8 %v787
      %v789 = vlaneseq
      %v790 = vshrl.u32 %v789, 7
      %v791 = vsub.s32 %v788, %v790
      %v792 = vrot.slane %v778, %v791
      %v793 = vcombine.high %v785, %v785
      %v794 = vcombine.high %v792, %v792
      %v796 = vunpack.c.l.s4 1966171168
      %v797 = vunpack.c.0.s8 %v796
      %v798 = vlaneseq
      %v799 = vshrl.u32 %v798, 7
      %v800 = vsub.s32 %v797, %v799
      %v801 = vrot.slane %v785, %v800
      %v803 = vunpack.c.l.s4 1966171168
      %v804 = vunpack.c.0.s8 %v803
      %v805 = vlaneseq
      %v806 = vshrl.u32 %v805, 7
      %v807 = vsub.s32 %v804, %v806
      %v808 = vrot.slane %v792, %v807
      %v810 = vunpack.c.l.s4 1966171168
      %v811 = vunpack.c.0.s8 %v810
      %v812 = vlaneseq
      %v813 = vshrl.u32 %v812, 7
      %v814 = vsub.s32 %v811, %v813
      %v815 = vrot.slane %v793, %v814
      %v817 = vunpack.c.l.s4 1966171168
      %v818 = vunpack.c.0.s8 %v817
      %v819 = vlaneseq
      %v820 = vshrl.u32 %v819, 7
      %v821 = vsub.s32 %v818, %v820
      %v822 = vrot.slane %v794, %v821
      %v823 = vcombine.high %v801, %v801
      %v824 = vcombine.high %v808, %v808
      %v825 = vcombine.high %v815, %v815
      %v826 = vcombine.high %v822, %v822
      %v827 = vcombine.high %v119, %v119
      %v829 = vunpack.c.l.s4 1966171168
      %v830 = vunpack.c.0.s8 %v829
      %v831 = vlaneseq
      %v832 = vshrl.u32 %v831, 7
      %v833 = vsub.s32 %v830, %v832
      %v834 = vrot.slane %v119, %v833
      %v836 = vunpack.c.l.s4 1966171168
      %v837 = vunpack.c.0.s8 %v836
      %v838 = vlaneseq
      %v839 = vshrl.u32 %v838, 7
      %v840 = vsub.s32 %v837, %v839
      %v841 = vrot.slane %v827, %v840
      %v842 = vcombine.high %v834, %v834
      %v843 = vcombine.high %v841, %v841
      %v845 = vunpack.c.l.s4 1966171168
      %v846 = vunpack.c.0.s8 %v845
      %v847 = vlaneseq
      %v848 = vshrl.u32 %v847, 7
      %v849 = vsub.s32 %v846, %v848
      %v850 = vrot.slane %v834, %v849
      %v852 = vunpack.c.l.s4 1966171168
      %v853 = vunpack.c.0.s8 %v852
      %v854 = vlaneseq
      %v855 = vshrl.u32 %v854, 7
      %v856 = vsub.s32 %v853, %v855
      %v857 = vrot.slane %v841, %v856
      %v859 = vunpack.c.l.s4 1966171168
      %v860 = vunpack.c.0.s8 %v859
      %v861 = vlaneseq
      %v862 = vshrl.u32 %v861, 7
      %v863 = vsub.s32 %v860, %v862
      %v864 = vrot.slane %v842, %v863
      %v866 = vunpack.c.l.s4 1966171168
      %v867 = vunpack.c.0.s8 %v866
      %v868 = vlaneseq
      %v869 = vshrl.u32 %v868, 7
      %v870 = vsub.s32 %v867, %v869
      %v871 = vrot.slane %v843, %v870
      %v872 = vcombine.high %v850, %v850
      %v873 = vcombine.high %v857, %v857
      %v874 = vcombine.high %v864, %v864
      %v875 = vcombine.high %v871, %v871
      %v876 = vcombine.high %v120, %v120
      %v878 = vunpack.c.l.s4 1966171168
      %v879 = vunpack.c.0.s8 %v878
      %v880 = vlaneseq
      %v881 = vshrl.u32 %v880, 7
      %v882 = vsub.s32 %v879, %v881
      %v883 = vrot.slane %v120, %v882
      %v885 = vunpack.c.l.s4 1966171168
      %v886 = vunpack.c.0.s8 %v885
      %v887 = vlaneseq
      %v888 = vshrl.u32 %v887, 7
      %v889 = vsub.s32 %v886, %v888
      %v890 = vrot.slane %v876, %v889
      %v891 = vcombine.high %v883, %v883
      %v892 = vcombine.high %v890, %v890
      %v894 = vunpack.c.l.s4 1966171168
      %v895 = vunpack.c.0.s8 %v894
      %v896 = vlaneseq
      %v897 = vshrl.u32 %v896, 7
      %v898 = vsub.s32 %v895, %v897
      %v899 = vrot.slane %v883, %v898
      %v901 = vunpack.c.l.s4 1966171168
      %v902 = vunpack.c.0.s8 %v901
      %v903 = vlaneseq
      %v904 = vshrl.u32 %v903, 7
      %v905 = vsub.s32 %v902, %v904
      %v906 = vrot.slane %v890, %v905
      %v908 = vunpack.c.l.s4 1966171168
      %v909 = vunpack.c.0.s8 %v908
      %v910 = vlaneseq
      %v911 = vshrl.u32 %v910, 7
      %v912 = vsub.s32 %v909, %v911
      %v913 = vrot.slane %v891, %v912
      %v915 = vunpack.c.l.s4 1966171168
      %v916 = vunpack.c.0.s8 %v915
      %v917 = vlaneseq
      %v918 = vshrl.u32 %v917, 7
      %v919 = vsub.s32 %v916, %v918
      %v920 = vrot.slane %v892, %v919
      %v921 = vcombine.high %v899, %v899
      %v922 = vcombine.high %v906, %v906
      %v923 = vcombine.high %v913, %v913
      %v924 = vcombine.high %v920, %v920
      %v925 = vlaneseq
      %v926 = vshrl.u32 %v925, 7
      %v927 = vsub.s32 0, %v926
      %v928 = vrot.slane %v752, %v927
      %v929 = vlaneseq
      %v930 = vshrl.u32 %v929, 7
      %v931 = vsub.s32 0, %v930
      %v932 = vrot.slane %v766, %v931
      %v933 = vlaneseq
      %v934 = vshrl.u32 %v933, 7
      %v935 = vsub.s32 0, %v934
      %v936 = vrot.slane %v774, %v935
      %v937 = vlaneseq
      %v938 = vshrl.u32 %v937, 7
      %v939 = vsub.s32 0, %v938
      %v940 = vrot.slane %v776, %v939
      %v941 = vlaneseq
      %v942 = vshrl.u32 %v941, 7
      %v943 = vsub.s32 0, %v942
      %v944 = vrot.slane %v759, %v943
      %v945 = vlaneseq
      %v946 = vshrl.u32 %v945, 7
      %v947 = vsub.s32 0, %v946
      %v948 = vrot.slane %v773, %v947
      %v949 = vlaneseq
      %v950 = vshrl.u32 %v949, 7
      %v951 = vsub.s32 0, %v950
      %v952 = vrot.slane %v775, %v951
      %v953 = vlaneseq
      %v954 = vshrl.u32 %v953, 7
      %v955 = vsub.s32 0, %v954
      %v956 = vrot.slane %v777, %v955
      %v957 = vlaneseq
      %v958 = vshrl.u32 %v957, 7
      %v959 = vsub.s32 0, %v958
      %v960 = vrot.slane %v801, %v959
      %v961 = vlaneseq
      %v962 = vshrl.u32 %v961, 7
      %v963 = vsub.s32 0, %v962
      %v964 = vrot.slane %v815, %v963
      %v965 = vlaneseq
      %v966 = vshrl.u32 %v965, 7
      %v967 = vsub.s32 0, %v966
      %v968 = vrot.slane %v823, %v967
      %v969 = vlaneseq
      %v970 = vshrl.u32 %v969, 7
      %v971 = vsub.s32 0, %v970
      %v972 = vrot.slane %v825, %v971
      %v973 = vlaneseq
      %v974 = vshrl.u32 %v973, 7
      %v975 = vsub.s32 0, %v974
      %v976 = vrot.slane %v808, %v975
      %v977 = vlaneseq
      %v978 = vshrl.u32 %v977, 7
      %v979 = vsub.s32 0, %v978
      %v980 = vrot.slane %v822, %v979
      %v981 = vlaneseq
      %v982 = vshrl.u32 %v981, 7
      %v983 = vsub.s32 0, %v982
      %v984 = vrot.slane %v824, %v983
      %v985 = vlaneseq
      %v986 = vshrl.u32 %v985, 7
      %v987 = vsub.s32 0, %v986
      %v988 = vrot.slane %v826, %v987
      %v989 = vlaneseq
      %v990 = vshrl.u32 %v989, 7
      %v991 = vsub.s32 0, %v990
      %v992 = vrot.slane %v850, %v991
      %v993 = vlaneseq
      %v994 = vshrl.u32 %v993, 7
      %v995 = vsub.s32 0, %v994
      %v996 = vrot.slane %v864, %v995
      %v997 = vlaneseq
      %v998 = vshrl.u32 %v997, 7
      %v999 = vsub.s32 0, %v998
      %v1000 = vrot.slane %v872, %v999
      %v1001 = vlaneseq
      %v1002 = vshrl.u32 %v1001, 7
      %v1003 = vsub.s32 0, %v1002
      %v1004 = vrot.slane %v874, %v1003
      %v1005 = vlaneseq
      %v1006 = vshrl.u32 %v1005, 7
      %v1007 = vsub.s32 0, %v1006
      %v1008 = vrot.slane %v857, %v1007
      %v1009 = vlaneseq
      %v1010 = vshrl.u32 %v1009, 7
      %v1011 = vsub.s32 0, %v1010
      %v1012 = vrot.slane %v871, %v1011
      %v1013 = vlaneseq
      %v1014 = vshrl.u32 %v1013, 7
      %v1015 = vsub.s32 0, %v1014
      %v1016 = vrot.slane %v873, %v1015
      %v1017 = vlaneseq
      %v1018 = vshrl.u32 %v1017, 7
      %v1019 = vsub.s32 0, %v1018
      %v1020 = vrot.slane %v875, %v1019
      %v1021 = vlaneseq
      %v1022 = vshrl.u32 %v1021, 7
      %v1023 = vsub.s32 0, %v1022
      %v1024 = vrot.slane %v899, %v1023
      %v1025 = vlaneseq
      %v1026 = vshrl.u32 %v1025, 7
      %v1027 = vsub.s32 0, %v1026
      %v1028 = vrot.slane %v913, %v1027
      %v1029 = vlaneseq
      %v1030 = vshrl.u32 %v1029, 7
      %v1031 = vsub.s32 0, %v1030
      %v1032 = vrot.slane %v921, %v1031
      %v1033 = vlaneseq
      %v1034 = vshrl.u32 %v1033, 7
      %v1035 = vsub.s32 0, %v1034
      %v1036 = vrot.slane %v923, %v1035
      %v1037 = vlaneseq
      %v1038 = vshrl.u32 %v1037, 7
      %v1039 = vsub.s32 0, %v1038
      %v1040 = vrot.slane %v906, %v1039
      %v1041 = vlaneseq
      %v1042 = vshrl.u32 %v1041, 7
      %v1043 = vsub.s32 0, %v1042
      %v1044 = vrot.slane %v920, %v1043
      %v1045 = vlaneseq
      %v1046 = vshrl.u32 %v1045, 7
      %v1047 = vsub.s32 0, %v1046
      %v1048 = vrot.slane %v922, %v1047
      %v1049 = vlaneseq
      %v1050 = vshrl.u32 %v1049, 7
      %v1051 = vsub.s32 0, %v1050
      %v1052 = vrot.slane %v924, %v1051
      %vm1053 = vcmp.eq.s32.totalorder %v127, %v928
      %vm1054 = vcmp.eq.s32.totalorder %v131, %v928
      %vm1055 = vcmp.eq.s32.totalorder %v135, %v928
      %vm1056 = vcmp.eq.s32.totalorder %v139, %v928
      %vm1057 = vcmp.eq.s32.totalorder %v146, %v932
      %vm1058 = vcmp.eq.s32.totalorder %v150, %v932
      %vm1059 = vcmp.eq.s32.totalorder %v154, %v932
      %vm1060 = vcmp.eq.s32.totalorder %v158, %v932
      %vm1061 = vcmp.eq.s32.totalorder %v165, %v936
      %vm1062 = vcmp.eq.s32.totalorder %v169, %v936
      %vm1063 = vcmp.eq.s32.totalorder %v173, %v936
      %vm1064 = vcmp.eq.s32.totalorder %v177, %v936
      %vm1065 = vcmp.eq.s32.totalorder %v184, %v940
      %vm1066 = vcmp.eq.s32.totalorder %v188, %v940
      %vm1067 = vcmp.eq.s32.totalorder %v192, %v940
      %vm1068 = vcmp.eq.s32.totalorder %v196, %v940
      %vm1069 = vcmp.eq.s32.totalorder %v203, %v944
      %vm1070 = vcmp.eq.s32.totalorder %v207, %v944
      %vm1071 = vcmp.eq.s32.totalorder %v211, %v944
      %vm1072 = vcmp.eq.s32.totalorder %v215, %v944
      %vm1073 = vcmp.eq.s32.totalorder %v222, %v948
      %vm1074 = vcmp.eq.s32.totalorder %v226, %v948
      %vm1075 = vcmp.eq.s32.totalorder %v230, %v948
      %vm1076 = vcmp.eq.s32.totalorder %v234, %v948
      %vm1077 = vcmp.eq.s32.totalorder %v241, %v952
      %vm1078 = vcmp.eq.s32.totalorder %v245, %v952
      %vm1079 = vcmp.eq.s32.totalorder %v249, %v952
      %vm1080 = vcmp.eq.s32.totalorder %v253, %v952
      %vm1081 = vcmp.eq.s32.totalorder %v260, %v956
      %vm1082 = vcmp.eq.s32.totalorder %v264, %v956
      %vm1083 = vcmp.eq.s32.totalorder %v268, %v956
      %vm1084 = vcmp.eq.s32.totalorder %v272, %v956
      %vm1085 = vcmp.eq.s32.totalorder %v279, %v960
      %vm1086 = vcmp.eq.s32.totalorder %v283, %v960
      %vm1087 = vcmp.eq.s32.totalorder %v287, %v960
      %vm1088 = vcmp.eq.s32.totalorder %v291, %v960
      %vm1089 = vcmp.eq.s32.totalorder %v298, %v964
      %vm1090 = vcmp.eq.s32.totalorder %v302, %v964
      %vm1091 = vcmp.eq.s32.totalorder %v306, %v964
      %vm1092 = vcmp.eq.s32.totalorder %v310, %v964
      %vm1093 = vcmp.eq.s32.totalorder %v317, %v968
      %vm1094 = vcmp.eq.s32.totalorder %v321, %v968
      %vm1095 = vcmp.eq.s32.totalorder %v325, %v968
      %vm1096 = vcmp.eq.s32.totalorder %v329, %v968
      %vm1097 = vcmp.eq.s32.totalorder %v336, %v972
      %vm1098 = vcmp.eq.s32.totalorder %v340, %v972
      %vm1099 = vcmp.eq.s32.totalorder %v344, %v972
      %vm1100 = vcmp.eq.s32.totalorder %v348, %v972
      %vm1101 = vcmp.eq.s32.totalorder %v355, %v976
      %vm1102 = vcmp.eq.s32.totalorder %v359, %v976
      %vm1103 = vcmp.eq.s32.totalorder %v363, %v976
      %vm1104 = vcmp.eq.s32.totalorder %v367, %v976
      %vm1105 = vcmp.eq.s32.totalorder %v374, %v980
      %vm1106 = vcmp.eq.s32.totalorder %v378, %v980
      %vm1107 = vcmp.eq.s32.totalorder %v382, %v980
      %vm1108 = vcmp.eq.s32.totalorder %v386, %v980
      %vm1109 = vcmp.eq.s32.totalorder %v393, %v984
      %vm1110 = vcmp.eq.s32.totalorder %v397, %v984
      %vm1111 = vcmp.eq.s32.totalorder %v401, %v984
      %vm1112 = vcmp.eq.s32.totalorder %v405, %v984
      %vm1113 = vcmp.eq.s32.totalorder %v412, %v988
      %vm1114 = vcmp.eq.s32.totalorder %v416, %v988
      %vm1115 = vcmp.eq.s32.totalorder %v420, %v988
      %vm1116 = vcmp.eq.s32.totalorder %v424, %v988
      %vm1117 = vcmp.eq.s32.totalorder %v431, %v992
      %vm1118 = vcmp.eq.s32.totalorder %v435, %v992
      %vm1119 = vcmp.eq.s32.totalorder %v439, %v992
      %vm1120 = vcmp.eq.s32.totalorder %v443, %v992
      %vm1121 = vcmp.eq.s32.totalorder %v450, %v996
      %vm1122 = vcmp.eq.s32.totalorder %v454, %v996
      %vm1123 = vcmp.eq.s32.totalorder %v458, %v996
      %vm1124 = vcmp.eq.s32.totalorder %v462, %v996
      %vm1125 = vcmp.eq.s32.totalorder %v469, %v1000
      %vm1126 = vcmp.eq.s32.totalorder %v473, %v1000
      %vm1127 = vcmp.eq.s32.totalorder %v477, %v1000
      %vm1128 = vcmp.eq.s32.totalorder %v481, %v1000
      %vm1129 = vcmp.eq.s32.totalorder %v488, %v1004
      %vm1130 = vcmp.eq.s32.totalorder %v492, %v1004
      %vm1131 = vcmp.eq.s32.totalorder %v496, %v1004
      %vm1132 = vcmp.eq.s32.totalorder %v500, %v1004
      %vm1133 = vcmp.eq.s32.totalorder %v507, %v1008
      %vm1134 = vcmp.eq.s32.totalorder %v511, %v1008
      %vm1135 = vcmp.eq.s32.totalorder %v515, %v1008
      %vm1136 = vcmp.eq.s32.totalorder %v519, %v1008
      %vm1137 = vcmp.eq.s32.totalorder %v526, %v1012
      %vm1138 = vcmp.eq.s32.totalorder %v530, %v1012
      %vm1139 = vcmp.eq.s32.totalorder %v534, %v1012
      %vm1140 = vcmp.eq.s32.totalorder %v538, %v1012
      %vm1141 = vcmp.eq.s32.totalorder %v545, %v1016
      %vm1142 = vcmp.eq.s32.totalorder %v549, %v1016
      %vm1143 = vcmp.eq.s32.totalorder %v553, %v1016
      %vm1144 = vcmp.eq.s32.totalorder %v557, %v1016
      %vm1145 = vcmp.eq.s32.totalorder %v564, %v1020
      %vm1146 = vcmp.eq.s32.totalorder %v568, %v1020
      %vm1147 = vcmp.eq.s32.totalorder %v572, %v1020
      %vm1148 = vcmp.eq.s32.totalorder %v576, %v1020
      %vm1149 = vcmp.eq.s32.totalorder %v583, %v1024
      %vm1150 = vcmp.eq.s32.totalorder %v587, %v1024
      %vm1151 = vcmp.eq.s32.totalorder %v591, %v1024
      %vm1152 = vcmp.eq.s32.totalorder %v595, %v1024
      %vm1153 = vcmp.eq.s32.totalorder %v602, %v1028
      %vm1154 = vcmp.eq.s32.totalorder %v606, %v1028
      %vm1155 = vcmp.eq.s32.totalorder %v610, %v1028
      %vm1156 = vcmp.eq.s32.totalorder %v614, %v1028
      %vm1157 = vcmp.eq.s32.totalorder %v621, %v1032
      %vm1158 = vcmp.eq.s32.totalorder %v625, %v1032
      %vm1159 = vcmp.eq.s32.totalorder %v629, %v1032
      %vm1160 = vcmp.eq.s32.totalorder %v633, %v1032
      %vm1161 = vcmp.eq.s32.totalorder %v640, %v1036
      %vm1162 = vcmp.eq.s32.totalorder %v644, %v1036
      %vm1163 = vcmp.eq.s32.totalorder %v648, %v1036
      %vm1164 = vcmp.eq.s32.totalorder %v652, %v1036
      %vm1165 = vcmp.eq.s32.totalorder %v659, %v1040
      %vm1166 = vcmp.eq.s32.totalorder %v663, %v1040
      %vm1167 = vcmp.eq.s32.totalorder %v667, %v1040
      %vm1168 = vcmp.eq.s32.totalorder %v671, %v1040
      %vm1169 = vcmp.eq.s32.totalorder %v678, %v1044
      %vm1170 = vcmp.eq.s32.totalorder %v682, %v1044
      %vm1171 = vcmp.eq.s32.totalorder %v686, %v1044
      %vm1172 = vcmp.eq.s32.totalorder %v690, %v1044
      %vm1173 = vcmp.eq.s32.totalorder %v697, %v1048
      %vm1174 = vcmp.eq.s32.totalorder %v701, %v1048
      %vm1175 = vcmp.eq.s32.totalorder %v705, %v1048
      %vm1176 = vcmp.eq.s32.totalorder %v709, %v1048
      %vm1177 = vcmp.eq.s32.totalorder %v716, %v1052
      %vm1178 = vcmp.eq.s32.totalorder %v720, %v1052
      %vm1179 = vcmp.eq.s32.totalorder %v724, %v1052
      %vm1180 = vcmp.eq.s32.totalorder %v728, %v1052
      %v1181 = vsel %vm1053, 1, 0
      %v1182 = vsel %vm1054, 1, 0
      %v1183 = vsel %vm1055, 1, 0
      %v1184 = vsel %vm1056, 1, 0
      %v1185 = vsel %vm1057, 1, 0
      %v1186 = vsel %vm1058, 1, 0
      %v1187 = vsel %vm1059, 1, 0
      %v1188 = vsel %vm1060, 1, 0
      %v1189 = vsel %vm1061, 1, 0
      %v1190 = vsel %vm1062, 1, 0
      %v1191 = vsel %vm1063, 1, 0
      %v1192 = vsel %vm1064, 1, 0
      %v1193 = vsel %vm1065, 1, 0
      %v1194 = vsel %vm1066, 1, 0
      %v1195 = vsel %vm1067, 1, 0
      %v1196 = vsel %vm1068, 1, 0
      %v1197 = vsel %vm1069, 1, 0
      %v1198 = vsel %vm1070, 1, 0
      %v1199 = vsel %vm1071, 1, 0
      %v1200 = vsel %vm1072, 1, 0
      %v1201 = vsel %vm1073, 1, 0
      %v1202 = vsel %vm1074, 1, 0
      %v1203 = vsel %vm1075, 1, 0
      %v1204 = vsel %vm1076, 1, 0
      %v1205 = vsel %vm1077, 1, 0
      %v1206 = vsel %vm1078, 1, 0
      %v1207 = vsel %vm1079, 1, 0
      %v1208 = vsel %vm1080, 1, 0
      %v1209 = vsel %vm1081, 1, 0
      %v1210 = vsel %vm1082, 1, 0
      %v1211 = vsel %vm1083, 1, 0
      %v1212 = vsel %vm1084, 1, 0
      %v1213 = vsel %vm1085, 1, 0
      %v1214 = vsel %vm1086, 1, 0
      %v1215 = vsel %vm1087, 1, 0
      %v1216 = vsel %vm1088, 1, 0
      %v1217 = vsel %vm1089, 1, 0
      %v1218 = vsel %vm1090, 1, 0
      %v1219 = vsel %vm1091, 1, 0
      %v1220 = vsel %vm1092, 1, 0
      %v1221 = vsel %vm1093, 1, 0
      %v1222 = vsel %vm1094, 1, 0
      %v1223 = vsel %vm1095, 1, 0
      %v1224 = vsel %vm1096, 1, 0
      %v1225 = vsel %vm1097, 1, 0
      %v1226 = vsel %vm1098, 1, 0
      %v1227 = vsel %vm1099, 1, 0
      %v1228 = vsel %vm1100, 1, 0
      %v1229 = vsel %vm1101, 1, 0
      %v1230 = vsel %vm1102, 1, 0
      %v1231 = vsel %vm1103, 1, 0
      %v1232 = vsel %vm1104, 1, 0
      %v1233 = vsel %vm1105, 1, 0
      %v1234 = vsel %vm1106, 1, 0
      %v1235 = vsel %vm1107, 1, 0
      %v1236 = vsel %vm1108, 1, 0
      %v1237 = vsel %vm1109, 1, 0
      %v1238 = vsel %vm1110, 1, 0
      %v1239 = vsel %vm1111, 1, 0
      %v1240 = vsel %vm1112, 1, 0
      %v1241 = vsel %vm1113, 1, 0
      %v1242 = vsel %vm1114, 1, 0
      %v1243 = vsel %vm1115, 1, 0
      %v1244 = vsel %vm1116, 1, 0
      %v1245 = vsel %vm1117, 1, 0
      %v1246 = vsel %vm1118, 1, 0
      %v1247 = vsel %vm1119, 1, 0
      %v1248 = vsel %vm1120, 1, 0
      %v1249 = vsel %vm1121, 1, 0
      %v1250 = vsel %vm1122, 1, 0
      %v1251 = vsel %vm1123, 1, 0
      %v1252 = vsel %vm1124, 1, 0
      %v1253 = vsel %vm1125, 1, 0
      %v1254 = vsel %vm1126, 1, 0
      %v1255 = vsel %vm1127, 1, 0
      %v1256 = vsel %vm1128, 1, 0
      %v1257 = vsel %vm1129, 1, 0
      %v1258 = vsel %vm1130, 1, 0
      %v1259 = vsel %vm1131, 1, 0
      %v1260 = vsel %vm1132, 1, 0
      %v1261 = vsel %vm1133, 1, 0
      %v1262 = vsel %vm1134, 1, 0
      %v1263 = vsel %vm1135, 1, 0
      %v1264 = vsel %vm1136, 1, 0
      %v1265 = vsel %vm1137, 1, 0
      %v1266 = vsel %vm1138, 1, 0
      %v1267 = vsel %vm1139, 1, 0
      %v1268 = vsel %vm1140, 1, 0
      %v1269 = vsel %vm1141, 1, 0
      %v1270 = vsel %vm1142, 1, 0
      %v1271 = vsel %vm1143, 1, 0
      %v1272 = vsel %vm1144, 1, 0
      %v1273 = vsel %vm1145, 1, 0
      %v1274 = vsel %vm1146, 1, 0
      %v1275 = vsel %vm1147, 1, 0
      %v1276 = vsel %vm1148, 1, 0
      %v1277 = vsel %vm1149, 1, 0
      %v1278 = vsel %vm1150, 1, 0
      %v1279 = vsel %vm1151, 1, 0
      %v1280 = vsel %vm1152, 1, 0
      %v1281 = vsel %vm1153, 1, 0
      %v1282 = vsel %vm1154, 1, 0
      %v1283 = vsel %vm1155, 1, 0
      %v1284 = vsel %vm1156, 1, 0
      %v1285 = vsel %vm1157, 1, 0
      %v1286 = vsel %vm1158, 1, 0
      %v1287 = vsel %vm1159, 1, 0
      %v1288 = vsel %vm1160, 1, 0
      %v1289 = vsel %vm1161, 1, 0
      %v1290 = vsel %vm1162, 1, 0
      %v1291 = vsel %vm1163, 1, 0
      %v1292 = vsel %vm1164, 1, 0
      %v1293 = vsel %vm1165, 1, 0
      %v1294 = vsel %vm1166, 1, 0
      %v1295 = vsel %vm1167, 1, 0
      %v1296 = vsel %vm1168, 1, 0
      %v1297 = vsel %vm1169, 1, 0
      %v1298 = vsel %vm1170, 1, 0
      %v1299 = vsel %vm1171, 1, 0
      %v1300 = vsel %vm1172, 1, 0
      %v1301 = vsel %vm1173, 1, 0
      %v1302 = vsel %vm1174, 1, 0
      %v1303 = vsel %vm1175, 1, 0
      %v1304 = vsel %vm1176, 1, 0
      %v1305 = vsel %vm1177, 1, 0
      %v1306 = vsel %vm1178, 1, 0
      %v1307 = vsel %vm1179, 1, 0
      %v1308 = vsel %vm1180, 1, 0
      %vm1309 = vcmask 261120
      %v1310 = vsel %vm1309, %v1181, 0
      %v1311 = vand.u32 %v1310, 65535
      %v1312 = vshrl.u32 %v1310, 16
      %v1313 = vcvt.s32.f32 %v1311
      %v1314 = vcvt.s32.f32 %v1312
      %1315 = vadd.xlane.f32.xlu0 %v1313
      %v1316 = vpop.xlane.xlu0 %1315
      %1317 = vadd.xlane.f32.xlu0 %v1314
      %v1318 = vpop.xlane.xlu0 %1317
      %v1319 = vcvt.f32.s32 %v1316
      %v1320 = vcvt.f32.s32 %v1318
      %v1321 = vshll.u32 %v1320, 16
      %v1322 = vadd.s32 %v1321, %v1319
      %v1323 = vsel %vm1309, %v1182, 0
      %v1324 = vand.u32 %v1323, 65535
      %v1325 = vshrl.u32 %v1323, 16
      %v1326 = vcvt.s32.f32 %v1324
      %v1327 = vcvt.s32.f32 %v1325
      %1328 = vadd.xlane.f32.xlu0 %v1326
      %v1329 = vpop.xlane.xlu0 %1328
      %1330 = vadd.xlane.f32.xlu0 %v1327
      %v1331 = vpop.xlane.xlu0 %1330
      %v1332 = vcvt.f32.s32 %v1329
      %v1333 = vcvt.f32.s32 %v1331
      %v1334 = vshll.u32 %v1333, 16
      %v1335 = vadd.s32 %v1334, %v1332
      %v1336 = vsel %vm1309, %v1183, 0
      %v1337 = vand.u32 %v1336, 65535
      %v1338 = vshrl.u32 %v1336, 16
      %v1339 = vcvt.s32.f32 %v1337
      %v1340 = vcvt.s32.f32 %v1338
      %1341 = vadd.xlane.f32.xlu0 %v1339
      %v1342 = vpop.xlane.xlu0 %1341
      %1343 = vadd.xlane.f32.xlu0 %v1340
      %v1344 = vpop.xlane.xlu0 %1343
      %v1345 = vcvt.f32.s32 %v1342
      %v1346 = vcvt.f32.s32 %v1344
      %v1347 = vshll.u32 %v1346, 16
      %v1348 = vadd.s32 %v1347, %v1345
      %v1349 = vsel %vm1309, %v1184, 0
      %v1350 = vand.u32 %v1349, 65535
      %v1351 = vshrl.u32 %v1349, 16
      %v1352 = vcvt.s32.f32 %v1350
      %v1353 = vcvt.s32.f32 %v1351
      %1354 = vadd.xlane.f32.xlu0 %v1352
      %v1355 = vpop.xlane.xlu0 %1354
      %1356 = vadd.xlane.f32.xlu0 %v1353
      %v1357 = vpop.xlane.xlu0 %1356
      %v1358 = vcvt.f32.s32 %v1355
      %v1359 = vcvt.f32.s32 %v1357
      %v1360 = vshll.u32 %v1359, 16
      %v1361 = vadd.s32 %v1360, %v1358
      %v1362 = vsel %vm1309, %v1185, 0
      %v1363 = vand.u32 %v1362, 65535
      %v1364 = vshrl.u32 %v1362, 16
      %v1365 = vcvt.s32.f32 %v1363
      %v1366 = vcvt.s32.f32 %v1364
      %1367 = vadd.xlane.f32.xlu0 %v1365
      %v1368 = vpop.xlane.xlu0 %1367
      %1369 = vadd.xlane.f32.xlu0 %v1366
      %v1370 = vpop.xlane.xlu0 %1369
      %v1371 = vcvt.f32.s32 %v1368
      %v1372 = vcvt.f32.s32 %v1370
      %v1373 = vshll.u32 %v1372, 16
      %v1374 = vadd.s32 %v1373, %v1371
      %v1375 = vsel %vm1309, %v1186, 0
      %v1376 = vand.u32 %v1375, 65535
      %v1377 = vshrl.u32 %v1375, 16
      %v1378 = vcvt.s32.f32 %v1376
      %v1379 = vcvt.s32.f32 %v1377
      %1380 = vadd.xlane.f32.xlu0 %v1378
      %v1381 = vpop.xlane.xlu0 %1380
      %1382 = vadd.xlane.f32.xlu0 %v1379
      %v1383 = vpop.xlane.xlu0 %1382
      %v1384 = vcvt.f32.s32 %v1381
      %v1385 = vcvt.f32.s32 %v1383
      %v1386 = vshll.u32 %v1385, 16
      %v1387 = vadd.s32 %v1386, %v1384
      %v1388 = vsel %vm1309, %v1187, 0
      %v1389 = vand.u32 %v1388, 65535
      %v1390 = vshrl.u32 %v1388, 16
      %v1391 = vcvt.s32.f32 %v1389
      %v1392 = vcvt.s32.f32 %v1390
      %1393 = vadd.xlane.f32.xlu0 %v1391
      %v1394 = vpop.xlane.xlu0 %1393
      %1395 = vadd.xlane.f32.xlu0 %v1392
      %v1396 = vpop.xlane.xlu0 %1395
      %v1397 = vcvt.f32.s32 %v1394
      %v1398 = vcvt.f32.s32 %v1396
      %v1399 = vshll.u32 %v1398, 16
      %v1400 = vadd.s32 %v1399, %v1397
      %v1401 = vsel %vm1309, %v1188, 0
      %v1402 = vand.u32 %v1401, 65535
      %v1403 = vshrl.u32 %v1401, 16
      %v1404 = vcvt.s32.f32 %v1402
      %v1405 = vcvt.s32.f32 %v1403
      %1406 = vadd.xlane.f32.xlu0 %v1404
      %v1407 = vpop.xlane.xlu0 %1406
      %1408 = vadd.xlane.f32.xlu0 %v1405
      %v1409 = vpop.xlane.xlu0 %1408
      %v1410 = vcvt.f32.s32 %v1407
      %v1411 = vcvt.f32.s32 %v1409
      %v1412 = vshll.u32 %v1411, 16
      %v1413 = vadd.s32 %v1412, %v1410
      %v1414 = vsel %vm1309, %v1189, 0
      %v1415 = vand.u32 %v1414, 65535
      %v1416 = vshrl.u32 %v1414, 16
      %v1417 = vcvt.s32.f32 %v1415
      %v1418 = vcvt.s32.f32 %v1416
      %1419 = vadd.xlane.f32.xlu0 %v1417
      %v1420 = vpop.xlane.xlu0 %1419
      %1421 = vadd.xlane.f32.xlu0 %v1418
      %v1422 = vpop.xlane.xlu0 %1421
      %v1423 = vcvt.f32.s32 %v1420
      %v1424 = vcvt.f32.s32 %v1422
      %v1425 = vshll.u32 %v1424, 16
      %v1426 = vadd.s32 %v1425, %v1423
      %v1427 = vsel %vm1309, %v1190, 0
      %v1428 = vand.u32 %v1427, 65535
      %v1429 = vshrl.u32 %v1427, 16
      %v1430 = vcvt.s32.f32 %v1428
      %v1431 = vcvt.s32.f32 %v1429
      %1432 = vadd.xlane.f32.xlu0 %v1430
      %v1433 = vpop.xlane.xlu0 %1432
      %1434 = vadd.xlane.f32.xlu0 %v1431
      %v1435 = vpop.xlane.xlu0 %1434
      %v1436 = vcvt.f32.s32 %v1433
      %v1437 = vcvt.f32.s32 %v1435
      %v1438 = vshll.u32 %v1437, 16
      %v1439 = vadd.s32 %v1438, %v1436
      %v1440 = vsel %vm1309, %v1191, 0
      %v1441 = vand.u32 %v1440, 65535
      %v1442 = vshrl.u32 %v1440, 16
      %v1443 = vcvt.s32.f32 %v1441
      %v1444 = vcvt.s32.f32 %v1442
      %1445 = vadd.xlane.f32.xlu0 %v1443
      %v1446 = vpop.xlane.xlu0 %1445
      %1447 = vadd.xlane.f32.xlu0 %v1444
      %v1448 = vpop.xlane.xlu0 %1447
      %v1449 = vcvt.f32.s32 %v1446
      %v1450 = vcvt.f32.s32 %v1448
      %v1451 = vshll.u32 %v1450, 16
      %v1452 = vadd.s32 %v1451, %v1449
      %v1453 = vsel %vm1309, %v1192, 0
      %v1454 = vand.u32 %v1453, 65535
      %v1455 = vshrl.u32 %v1453, 16
      %v1456 = vcvt.s32.f32 %v1454
      %v1457 = vcvt.s32.f32 %v1455
      %1458 = vadd.xlane.f32.xlu0 %v1456
      %v1459 = vpop.xlane.xlu0 %1458
      %1460 = vadd.xlane.f32.xlu0 %v1457
      %v1461 = vpop.xlane.xlu0 %1460
      %v1462 = vcvt.f32.s32 %v1459
      %v1463 = vcvt.f32.s32 %v1461
      %v1464 = vshll.u32 %v1463, 16
      %v1465 = vadd.s32 %v1464, %v1462
      %v1466 = vsel %vm1309, %v1193, 0
      %v1467 = vand.u32 %v1466, 65535
      %v1468 = vshrl.u32 %v1466, 16
      %v1469 = vcvt.s32.f32 %v1467
      %v1470 = vcvt.s32.f32 %v1468
      %1471 = vadd.xlane.f32.xlu0 %v1469
      %v1472 = vpop.xlane.xlu0 %1471
      %1473 = vadd.xlane.f32.xlu0 %v1470
      %v1474 = vpop.xlane.xlu0 %1473
      %v1475 = vcvt.f32.s32 %v1472
      %v1476 = vcvt.f32.s32 %v1474
      %v1477 = vshll.u32 %v1476, 16
      %v1478 = vadd.s32 %v1477, %v1475
      %v1479 = vsel %vm1309, %v1194, 0
      %v1480 = vand.u32 %v1479, 65535
      %v1481 = vshrl.u32 %v1479, 16
      %v1482 = vcvt.s32.f32 %v1480
      %v1483 = vcvt.s32.f32 %v1481
      %1484 = vadd.xlane.f32.xlu0 %v1482
      %v1485 = vpop.xlane.xlu0 %1484
      %1486 = vadd.xlane.f32.xlu0 %v1483
      %v1487 = vpop.xlane.xlu0 %1486
      %v1488 = vcvt.f32.s32 %v1485
      %v1489 = vcvt.f32.s32 %v1487
      %v1490 = vshll.u32 %v1489, 16
      %v1491 = vadd.s32 %v1490, %v1488
      %v1492 = vsel %vm1309, %v1195, 0
      %v1493 = vand.u32 %v1492, 65535
      %v1494 = vshrl.u32 %v1492, 16
      %v1495 = vcvt.s32.f32 %v1493
      %v1496 = vcvt.s32.f32 %v1494
      %1497 = vadd.xlane.f32.xlu0 %v1495
      %v1498 = vpop.xlane.xlu0 %1497
      %1499 = vadd.xlane.f32.xlu0 %v1496
      %v1500 = vpop.xlane.xlu0 %1499
      %v1501 = vcvt.f32.s32 %v1498
      %v1502 = vcvt.f32.s32 %v1500
      %v1503 = vshll.u32 %v1502, 16
      %v1504 = vadd.s32 %v1503, %v1501
      %v1505 = vsel %vm1309, %v1196, 0
      %v1506 = vand.u32 %v1505, 65535
      %v1507 = vshrl.u32 %v1505, 16
      %v1508 = vcvt.s32.f32 %v1506
      %v1509 = vcvt.s32.f32 %v1507
      %1510 = vadd.xlane.f32.xlu0 %v1508
      %v1511 = vpop.xlane.xlu0 %1510
      %1512 = vadd.xlane.f32.xlu0 %v1509
      %v1513 = vpop.xlane.xlu0 %1512
      %v1514 = vcvt.f32.s32 %v1511
      %v1515 = vcvt.f32.s32 %v1513
      %v1516 = vshll.u32 %v1515, 16
      %v1517 = vadd.s32 %v1516, %v1514
      %v1518 = vsel %vm1309, %v1197, 0
      %v1519 = vand.u32 %v1518, 65535
      %v1520 = vshrl.u32 %v1518, 16
      %v1521 = vcvt.s32.f32 %v1519
      %v1522 = vcvt.s32.f32 %v1520
      %1523 = vadd.xlane.f32.xlu0 %v1521
      %v1524 = vpop.xlane.xlu0 %1523
      %1525 = vadd.xlane.f32.xlu0 %v1522
      %v1526 = vpop.xlane.xlu0 %1525
      %v1527 = vcvt.f32.s32 %v1524
      %v1528 = vcvt.f32.s32 %v1526
      %v1529 = vshll.u32 %v1528, 16
      %v1530 = vadd.s32 %v1529, %v1527
      %v1531 = vsel %vm1309, %v1198, 0
      %v1532 = vand.u32 %v1531, 65535
      %v1533 = vshrl.u32 %v1531, 16
      %v1534 = vcvt.s32.f32 %v1532
      %v1535 = vcvt.s32.f32 %v1533
      %1536 = vadd.xlane.f32.xlu0 %v1534
      %v1537 = vpop.xlane.xlu0 %1536
      %1538 = vadd.xlane.f32.xlu0 %v1535
      %v1539 = vpop.xlane.xlu0 %1538
      %v1540 = vcvt.f32.s32 %v1537
      %v1541 = vcvt.f32.s32 %v1539
      %v1542 = vshll.u32 %v1541, 16
      %v1543 = vadd.s32 %v1542, %v1540
      %v1544 = vsel %vm1309, %v1199, 0
      %v1545 = vand.u32 %v1544, 65535
      %v1546 = vshrl.u32 %v1544, 16
      %v1547 = vcvt.s32.f32 %v1545
      %v1548 = vcvt.s32.f32 %v1546
      %1549 = vadd.xlane.f32.xlu0 %v1547
      %v1550 = vpop.xlane.xlu0 %1549
      %1551 = vadd.xlane.f32.xlu0 %v1548
      %v1552 = vpop.xlane.xlu0 %1551
      %v1553 = vcvt.f32.s32 %v1550
      %v1554 = vcvt.f32.s32 %v1552
      %v1555 = vshll.u32 %v1554, 16
      %v1556 = vadd.s32 %v1555, %v1553
      %v1557 = vsel %vm1309, %v1200, 0
      %v1558 = vand.u32 %v1557, 65535
      %v1559 = vshrl.u32 %v1557, 16
      %v1560 = vcvt.s32.f32 %v1558
      %v1561 = vcvt.s32.f32 %v1559
      %1562 = vadd.xlane.f32.xlu0 %v1560
      %v1563 = vpop.xlane.xlu0 %1562
      %1564 = vadd.xlane.f32.xlu0 %v1561
      %v1565 = vpop.xlane.xlu0 %1564
      %v1566 = vcvt.f32.s32 %v1563
      %v1567 = vcvt.f32.s32 %v1565
      %v1568 = vshll.u32 %v1567, 16
      %v1569 = vadd.s32 %v1568, %v1566
      %v1570 = vsel %vm1309, %v1201, 0
      %v1571 = vand.u32 %v1570, 65535
      %v1572 = vshrl.u32 %v1570, 16
      %v1573 = vcvt.s32.f32 %v1571
      %v1574 = vcvt.s32.f32 %v1572
      %1575 = vadd.xlane.f32.xlu0 %v1573
      %v1576 = vpop.xlane.xlu0 %1575
      %1577 = vadd.xlane.f32.xlu0 %v1574
      %v1578 = vpop.xlane.xlu0 %1577
      %v1579 = vcvt.f32.s32 %v1576
      %v1580 = vcvt.f32.s32 %v1578
      %v1581 = vshll.u32 %v1580, 16
      %v1582 = vadd.s32 %v1581, %v1579
      %v1583 = vsel %vm1309, %v1202, 0
      %v1584 = vand.u32 %v1583, 65535
      %v1585 = vshrl.u32 %v1583, 16
      %v1586 = vcvt.s32.f32 %v1584
      %v1587 = vcvt.s32.f32 %v1585
      %1588 = vadd.xlane.f32.xlu0 %v1586
      %v1589 = vpop.xlane.xlu0 %1588
      %1590 = vadd.xlane.f32.xlu0 %v1587
      %v1591 = vpop.xlane.xlu0 %1590
      %v1592 = vcvt.f32.s32 %v1589
      %v1593 = vcvt.f32.s32 %v1591
      %v1594 = vshll.u32 %v1593, 16
      %v1595 = vadd.s32 %v1594, %v1592
      %v1596 = vsel %vm1309, %v1203, 0
      %v1597 = vand.u32 %v1596, 65535
      %v1598 = vshrl.u32 %v1596, 16
      %v1599 = vcvt.s32.f32 %v1597
      %v1600 = vcvt.s32.f32 %v1598
      %1601 = vadd.xlane.f32.xlu0 %v1599
      %v1602 = vpop.xlane.xlu0 %1601
      %1603 = vadd.xlane.f32.xlu0 %v1600
      %v1604 = vpop.xlane.xlu0 %1603
      %v1605 = vcvt.f32.s32 %v1602
      %v1606 = vcvt.f32.s32 %v1604
      %v1607 = vshll.u32 %v1606, 16
      %v1608 = vadd.s32 %v1607, %v1605
      %v1609 = vsel %vm1309, %v1204, 0
      %v1610 = vand.u32 %v1609, 65535
      %v1611 = vshrl.u32 %v1609, 16
      %v1612 = vcvt.s32.f32 %v1610
      %v1613 = vcvt.s32.f32 %v1611
      %1614 = vadd.xlane.f32.xlu0 %v1612
      %v1615 = vpop.xlane.xlu0 %1614
      %1616 = vadd.xlane.f32.xlu0 %v1613
      %v1617 = vpop.xlane.xlu0 %1616
      %v1618 = vcvt.f32.s32 %v1615
      %v1619 = vcvt.f32.s32 %v1617
      %v1620 = vshll.u32 %v1619, 16
      %v1621 = vadd.s32 %v1620, %v1618
      %v1622 = vsel %vm1309, %v1205, 0
      %v1623 = vand.u32 %v1622, 65535
      %v1624 = vshrl.u32 %v1622, 16
      %v1625 = vcvt.s32.f32 %v1623
      %v1626 = vcvt.s32.f32 %v1624
      %1627 = vadd.xlane.f32.xlu0 %v1625
      %v1628 = vpop.xlane.xlu0 %1627
      %1629 = vadd.xlane.f32.xlu0 %v1626
      %v1630 = vpop.xlane.xlu0 %1629
      %v1631 = vcvt.f32.s32 %v1628
      %v1632 = vcvt.f32.s32 %v1630
      %v1633 = vshll.u32 %v1632, 16
      %v1634 = vadd.s32 %v1633, %v1631
      %v1635 = vsel %vm1309, %v1206, 0
      %v1636 = vand.u32 %v1635, 65535
      %v1637 = vshrl.u32 %v1635, 16
      %v1638 = vcvt.s32.f32 %v1636
      %v1639 = vcvt.s32.f32 %v1637
      %1640 = vadd.xlane.f32.xlu0 %v1638
      %v1641 = vpop.xlane.xlu0 %1640
      %1642 = vadd.xlane.f32.xlu0 %v1639
      %v1643 = vpop.xlane.xlu0 %1642
      %v1644 = vcvt.f32.s32 %v1641
      %v1645 = vcvt.f32.s32 %v1643
      %v1646 = vshll.u32 %v1645, 16
      %v1647 = vadd.s32 %v1646, %v1644
      %v1648 = vsel %vm1309, %v1207, 0
      %v1649 = vand.u32 %v1648, 65535
      %v1650 = vshrl.u32 %v1648, 16
      %v1651 = vcvt.s32.f32 %v1649
      %v1652 = vcvt.s32.f32 %v1650
      %1653 = vadd.xlane.f32.xlu0 %v1651
      %v1654 = vpop.xlane.xlu0 %1653
      %1655 = vadd.xlane.f32.xlu0 %v1652
      %v1656 = vpop.xlane.xlu0 %1655
      %v1657 = vcvt.f32.s32 %v1654
      %v1658 = vcvt.f32.s32 %v1656
      %v1659 = vshll.u32 %v1658, 16
      %v1660 = vadd.s32 %v1659, %v1657
      %v1661 = vsel %vm1309, %v1208, 0
      %v1662 = vand.u32 %v1661, 65535
      %v1663 = vshrl.u32 %v1661, 16
      %v1664 = vcvt.s32.f32 %v1662
      %v1665 = vcvt.s32.f32 %v1663
      %1666 = vadd.xlane.f32.xlu0 %v1664
      %v1667 = vpop.xlane.xlu0 %1666
      %1668 = vadd.xlane.f32.xlu0 %v1665
      %v1669 = vpop.xlane.xlu0 %1668
      %v1670 = vcvt.f32.s32 %v1667
      %v1671 = vcvt.f32.s32 %v1669
      %v1672 = vshll.u32 %v1671, 16
      %v1673 = vadd.s32 %v1672, %v1670
      %v1674 = vsel %vm1309, %v1209, 0
      %v1675 = vand.u32 %v1674, 65535
      %v1676 = vshrl.u32 %v1674, 16
      %v1677 = vcvt.s32.f32 %v1675
      %v1678 = vcvt.s32.f32 %v1676
      %1679 = vadd.xlane.f32.xlu0 %v1677
      %v1680 = vpop.xlane.xlu0 %1679
      %1681 = vadd.xlane.f32.xlu0 %v1678
      %v1682 = vpop.xlane.xlu0 %1681
      %v1683 = vcvt.f32.s32 %v1680
      %v1684 = vcvt.f32.s32 %v1682
      %v1685 = vshll.u32 %v1684, 16
      %v1686 = vadd.s32 %v1685, %v1683
      %v1687 = vsel %vm1309, %v1210, 0
      %v1688 = vand.u32 %v1687, 65535
      %v1689 = vshrl.u32 %v1687, 16
      %v1690 = vcvt.s32.f32 %v1688
      %v1691 = vcvt.s32.f32 %v1689
      %1692 = vadd.xlane.f32.xlu0 %v1690
      %v1693 = vpop.xlane.xlu0 %1692
      %1694 = vadd.xlane.f32.xlu0 %v1691
      %v1695 = vpop.xlane.xlu0 %1694
      %v1696 = vcvt.f32.s32 %v1693
      %v1697 = vcvt.f32.s32 %v1695
      %v1698 = vshll.u32 %v1697, 16
      %v1699 = vadd.s32 %v1698, %v1696
      %v1700 = vsel %vm1309, %v1211, 0
      %v1701 = vand.u32 %v1700, 65535
      %v1702 = vshrl.u32 %v1700, 16
      %v1703 = vcvt.s32.f32 %v1701
      %v1704 = vcvt.s32.f32 %v1702
      %1705 = vadd.xlane.f32.xlu0 %v1703
      %v1706 = vpop.xlane.xlu0 %1705
      %1707 = vadd.xlane.f32.xlu0 %v1704
      %v1708 = vpop.xlane.xlu0 %1707
      %v1709 = vcvt.f32.s32 %v1706
      %v1710 = vcvt.f32.s32 %v1708
      %v1711 = vshll.u32 %v1710, 16
      %v1712 = vadd.s32 %v1711, %v1709
      %v1713 = vsel %vm1309, %v1212, 0
      %v1714 = vand.u32 %v1713, 65535
      %v1715 = vshrl.u32 %v1713, 16
      %v1716 = vcvt.s32.f32 %v1714
      %v1717 = vcvt.s32.f32 %v1715
      %1718 = vadd.xlane.f32.xlu0 %v1716
      %v1719 = vpop.xlane.xlu0 %1718
      %1720 = vadd.xlane.f32.xlu0 %v1717
      %v1721 = vpop.xlane.xlu0 %1720
      %v1722 = vcvt.f32.s32 %v1719
      %v1723 = vcvt.f32.s32 %v1721
      %v1724 = vshll.u32 %v1723, 16
      %v1725 = vadd.s32 %v1724, %v1722
      %v1726 = vsel %vm1309, %v1213, 0
      %v1727 = vand.u32 %v1726, 65535
      %v1728 = vshrl.u32 %v1726, 16
      %v1729 = vcvt.s32.f32 %v1727
      %v1730 = vcvt.s32.f32 %v1728
      %1731 = vadd.xlane.f32.xlu0 %v1729
      %v1732 = vpop.xlane.xlu0 %1731
      %1733 = vadd.xlane.f32.xlu0 %v1730
      %v1734 = vpop.xlane.xlu0 %1733
      %v1735 = vcvt.f32.s32 %v1732
      %v1736 = vcvt.f32.s32 %v1734
      %v1737 = vshll.u32 %v1736, 16
      %v1738 = vadd.s32 %v1737, %v1735
      %v1739 = vsel %vm1309, %v1214, 0
      %v1740 = vand.u32 %v1739, 65535
      %v1741 = vshrl.u32 %v1739, 16
      %v1742 = vcvt.s32.f32 %v1740
      %v1743 = vcvt.s32.f32 %v1741
      %1744 = vadd.xlane.f32.xlu0 %v1742
      %v1745 = vpop.xlane.xlu0 %1744
      %1746 = vadd.xlane.f32.xlu0 %v1743
      %v1747 = vpop.xlane.xlu0 %1746
      %v1748 = vcvt.f32.s32 %v1745
      %v1749 = vcvt.f32.s32 %v1747
      %v1750 = vshll.u32 %v1749, 16
      %v1751 = vadd.s32 %v1750, %v1748
      %v1752 = vsel %vm1309, %v1215, 0
      %v1753 = vand.u32 %v1752, 65535
      %v1754 = vshrl.u32 %v1752, 16
      %v1755 = vcvt.s32.f32 %v1753
      %v1756 = vcvt.s32.f32 %v1754
      %1757 = vadd.xlane.f32.xlu0 %v1755
      %v1758 = vpop.xlane.xlu0 %1757
      %1759 = vadd.xlane.f32.xlu0 %v1756
      %v1760 = vpop.xlane.xlu0 %1759
      %v1761 = vcvt.f32.s32 %v1758
      %v1762 = vcvt.f32.s32 %v1760
      %v1763 = vshll.u32 %v1762, 16
      %v1764 = vadd.s32 %v1763, %v1761
      %v1765 = vsel %vm1309, %v1216, 0
      %v1766 = vand.u32 %v1765, 65535
      %v1767 = vshrl.u32 %v1765, 16
      %v1768 = vcvt.s32.f32 %v1766
      %v1769 = vcvt.s32.f32 %v1767
      %1770 = vadd.xlane.f32.xlu0 %v1768
      %v1771 = vpop.xlane.xlu0 %1770
      %1772 = vadd.xlane.f32.xlu0 %v1769
      %v1773 = vpop.xlane.xlu0 %1772
      %v1774 = vcvt.f32.s32 %v1771
      %v1775 = vcvt.f32.s32 %v1773
      %v1776 = vshll.u32 %v1775, 16
      %v1777 = vadd.s32 %v1776, %v1774
      %v1778 = vsel %vm1309, %v1217, 0
      %v1779 = vand.u32 %v1778, 65535
      %v1780 = vshrl.u32 %v1778, 16
      %v1781 = vcvt.s32.f32 %v1779
      %v1782 = vcvt.s32.f32 %v1780
      %1783 = vadd.xlane.f32.xlu0 %v1781
      %v1784 = vpop.xlane.xlu0 %1783
      %1785 = vadd.xlane.f32.xlu0 %v1782
      %v1786 = vpop.xlane.xlu0 %1785
      %v1787 = vcvt.f32.s32 %v1784
      %v1788 = vcvt.f32.s32 %v1786
      %v1789 = vshll.u32 %v1788, 16
      %v1790 = vadd.s32 %v1789, %v1787
      %v1791 = vsel %vm1309, %v1218, 0
      %v1792 = vand.u32 %v1791, 65535
      %v1793 = vshrl.u32 %v1791, 16
      %v1794 = vcvt.s32.f32 %v1792
      %v1795 = vcvt.s32.f32 %v1793
      %1796 = vadd.xlane.f32.xlu0 %v1794
      %v1797 = vpop.xlane.xlu0 %1796
      %1798 = vadd.xlane.f32.xlu0 %v1795
      %v1799 = vpop.xlane.xlu0 %1798
      %v1800 = vcvt.f32.s32 %v1797
      %v1801 = vcvt.f32.s32 %v1799
      %v1802 = vshll.u32 %v1801, 16
      %v1803 = vadd.s32 %v1802, %v1800
      %v1804 = vsel %vm1309, %v1219, 0
      %v1805 = vand.u32 %v1804, 65535
      %v1806 = vshrl.u32 %v1804, 16
      %v1807 = vcvt.s32.f32 %v1805
      %v1808 = vcvt.s32.f32 %v1806
      %1809 = vadd.xlane.f32.xlu0 %v1807
      %v1810 = vpop.xlane.xlu0 %1809
      %1811 = vadd.xlane.f32.xlu0 %v1808
      %v1812 = vpop.xlane.xlu0 %1811
      %v1813 = vcvt.f32.s32 %v1810
      %v1814 = vcvt.f32.s32 %v1812
      %v1815 = vshll.u32 %v1814, 16
      %v1816 = vadd.s32 %v1815, %v1813
      %v1817 = vsel %vm1309, %v1220, 0
      %v1818 = vand.u32 %v1817, 65535
      %v1819 = vshrl.u32 %v1817, 16
      %v1820 = vcvt.s32.f32 %v1818
      %v1821 = vcvt.s32.f32 %v1819
      %1822 = vadd.xlane.f32.xlu0 %v1820
      %v1823 = vpop.xlane.xlu0 %1822
      %1824 = vadd.xlane.f32.xlu0 %v1821
      %v1825 = vpop.xlane.xlu0 %1824
      %v1826 = vcvt.f32.s32 %v1823
      %v1827 = vcvt.f32.s32 %v1825
      %v1828 = vshll.u32 %v1827, 16
      %v1829 = vadd.s32 %v1828, %v1826
      %v1830 = vsel %vm1309, %v1221, 0
      %v1831 = vand.u32 %v1830, 65535
      %v1832 = vshrl.u32 %v1830, 16
      %v1833 = vcvt.s32.f32 %v1831
      %v1834 = vcvt.s32.f32 %v1832
      %1835 = vadd.xlane.f32.xlu0 %v1833
      %v1836 = vpop.xlane.xlu0 %1835
      %1837 = vadd.xlane.f32.xlu0 %v1834
      %v1838 = vpop.xlane.xlu0 %1837
      %v1839 = vcvt.f32.s32 %v1836
      %v1840 = vcvt.f32.s32 %v1838
      %v1841 = vshll.u32 %v1840, 16
      %v1842 = vadd.s32 %v1841, %v1839
      %v1843 = vsel %vm1309, %v1222, 0
      %v1844 = vand.u32 %v1843, 65535
      %v1845 = vshrl.u32 %v1843, 16
      %v1846 = vcvt.s32.f32 %v1844
      %v1847 = vcvt.s32.f32 %v1845
      %1848 = vadd.xlane.f32.xlu0 %v1846
      %v1849 = vpop.xlane.xlu0 %1848
      %1850 = vadd.xlane.f32.xlu0 %v1847
      %v1851 = vpop.xlane.xlu0 %1850
      %v1852 = vcvt.f32.s32 %v1849
      %v1853 = vcvt.f32.s32 %v1851
      %v1854 = vshll.u32 %v1853, 16
      %v1855 = vadd.s32 %v1854, %v1852
      %v1856 = vsel %vm1309, %v1223, 0
      %v1857 = vand.u32 %v1856, 65535
      %v1858 = vshrl.u32 %v1856, 16
      %v1859 = vcvt.s32.f32 %v1857
      %v1860 = vcvt.s32.f32 %v1858
      %1861 = vadd.xlane.f32.xlu0 %v1859
      %v1862 = vpop.xlane.xlu0 %1861
      %1863 = vadd.xlane.f32.xlu0 %v1860
      %v1864 = vpop.xlane.xlu0 %1863
      %v1865 = vcvt.f32.s32 %v1862
      %v1866 = vcvt.f32.s32 %v1864
      %v1867 = vshll.u32 %v1866, 16
      %v1868 = vadd.s32 %v1867, %v1865
      %v1869 = vsel %vm1309, %v1224, 0
      %v1870 = vand.u32 %v1869, 65535
      %v1871 = vshrl.u32 %v1869, 16
      %v1872 = vcvt.s32.f32 %v1870
      %v1873 = vcvt.s32.f32 %v1871
      %1874 = vadd.xlane.f32.xlu0 %v1872
      %v1875 = vpop.xlane.xlu0 %1874
      %1876 = vadd.xlane.f32.xlu0 %v1873
      %v1877 = vpop.xlane.xlu0 %1876
      %v1878 = vcvt.f32.s32 %v1875
      %v1879 = vcvt.f32.s32 %v1877
      %v1880 = vshll.u32 %v1879, 16
      %v1881 = vadd.s32 %v1880, %v1878
      %v1882 = vsel %vm1309, %v1225, 0
      %v1883 = vand.u32 %v1882, 65535
      %v1884 = vshrl.u32 %v1882, 16
      %v1885 = vcvt.s32.f32 %v1883
      %v1886 = vcvt.s32.f32 %v1884
      %1887 = vadd.xlane.f32.xlu0 %v1885
      %v1888 = vpop.xlane.xlu0 %1887
      %1889 = vadd.xlane.f32.xlu0 %v1886
      %v1890 = vpop.xlane.xlu0 %1889
      %v1891 = vcvt.f32.s32 %v1888
      %v1892 = vcvt.f32.s32 %v1890
      %v1893 = vshll.u32 %v1892, 16
      %v1894 = vadd.s32 %v1893, %v1891
      %v1895 = vsel %vm1309, %v1226, 0
      %v1896 = vand.u32 %v1895, 65535
      %v1897 = vshrl.u32 %v1895, 16
      %v1898 = vcvt.s32.f32 %v1896
      %v1899 = vcvt.s32.f32 %v1897
      %1900 = vadd.xlane.f32.xlu0 %v1898
      %v1901 = vpop.xlane.xlu0 %1900
      %1902 = vadd.xlane.f32.xlu0 %v1899
      %v1903 = vpop.xlane.xlu0 %1902
      %v1904 = vcvt.f32.s32 %v1901
      %v1905 = vcvt.f32.s32 %v1903
      %v1906 = vshll.u32 %v1905, 16
      %v1907 = vadd.s32 %v1906, %v1904
      %v1908 = vsel %vm1309, %v1227, 0
      %v1909 = vand.u32 %v1908, 65535
      %v1910 = vshrl.u32 %v1908, 16
      %v1911 = vcvt.s32.f32 %v1909
      %v1912 = vcvt.s32.f32 %v1910
      %1913 = vadd.xlane.f32.xlu0 %v1911
      %v1914 = vpop.xlane.xlu0 %1913
      %1915 = vadd.xlane.f32.xlu0 %v1912
      %v1916 = vpop.xlane.xlu0 %1915
      %v1917 = vcvt.f32.s32 %v1914
      %v1918 = vcvt.f32.s32 %v1916
      %v1919 = vshll.u32 %v1918, 16
      %v1920 = vadd.s32 %v1919, %v1917
      %v1921 = vsel %vm1309, %v1228, 0
      %v1922 = vand.u32 %v1921, 65535
      %v1923 = vshrl.u32 %v1921, 16
      %v1924 = vcvt.s32.f32 %v1922
      %v1925 = vcvt.s32.f32 %v1923
      %1926 = vadd.xlane.f32.xlu0 %v1924
      %v1927 = vpop.xlane.xlu0 %1926
      %1928 = vadd.xlane.f32.xlu0 %v1925
      %v1929 = vpop.xlane.xlu0 %1928
      %v1930 = vcvt.f32.s32 %v1927
      %v1931 = vcvt.f32.s32 %v1929
      %v1932 = vshll.u32 %v1931, 16
      %v1933 = vadd.s32 %v1932, %v1930
      %v1934 = vsel %vm1309, %v1229, 0
      %v1935 = vand.u32 %v1934, 65535
      %v1936 = vshrl.u32 %v1934, 16
      %v1937 = vcvt.s32.f32 %v1935
      %v1938 = vcvt.s32.f32 %v1936
      %1939 = vadd.xlane.f32.xlu0 %v1937
      %v1940 = vpop.xlane.xlu0 %1939
      %1941 = vadd.xlane.f32.xlu0 %v1938
      %v1942 = vpop.xlane.xlu0 %1941
      %v1943 = vcvt.f32.s32 %v1940
      %v1944 = vcvt.f32.s32 %v1942
      %v1945 = vshll.u32 %v1944, 16
      %v1946 = vadd.s32 %v1945, %v1943
      %v1947 = vsel %vm1309, %v1230, 0
      %v1948 = vand.u32 %v1947, 65535
      %v1949 = vshrl.u32 %v1947, 16
      %v1950 = vcvt.s32.f32 %v1948
      %v1951 = vcvt.s32.f32 %v1949
      %1952 = vadd.xlane.f32.xlu0 %v1950
      %v1953 = vpop.xlane.xlu0 %1952
      %1954 = vadd.xlane.f32.xlu0 %v1951
      %v1955 = vpop.xlane.xlu0 %1954
      %v1956 = vcvt.f32.s32 %v1953
      %v1957 = vcvt.f32.s32 %v1955
      %v1958 = vshll.u32 %v1957, 16
      %v1959 = vadd.s32 %v1958, %v1956
      %v1960 = vsel %vm1309, %v1231, 0
      %v1961 = vand.u32 %v1960, 65535
      %v1962 = vshrl.u32 %v1960, 16
      %v1963 = vcvt.s32.f32 %v1961
      %v1964 = vcvt.s32.f32 %v1962
      %1965 = vadd.xlane.f32.xlu0 %v1963
      %v1966 = vpop.xlane.xlu0 %1965
      %1967 = vadd.xlane.f32.xlu0 %v1964
      %v1968 = vpop.xlane.xlu0 %1967
      %v1969 = vcvt.f32.s32 %v1966
      %v1970 = vcvt.f32.s32 %v1968
      %v1971 = vshll.u32 %v1970, 16
      %v1972 = vadd.s32 %v1971, %v1969
      %v1973 = vsel %vm1309, %v1232, 0
      %v1974 = vand.u32 %v1973, 65535
      %v1975 = vshrl.u32 %v1973, 16
      %v1976 = vcvt.s32.f32 %v1974
      %v1977 = vcvt.s32.f32 %v1975
      %1978 = vadd.xlane.f32.xlu0 %v1976
      %v1979 = vpop.xlane.xlu0 %1978
      %1980 = vadd.xlane.f32.xlu0 %v1977
      %v1981 = vpop.xlane.xlu0 %1980
      %v1982 = vcvt.f32.s32 %v1979
      %v1983 = vcvt.f32.s32 %v1981
      %v1984 = vshll.u32 %v1983, 16
      %v1985 = vadd.s32 %v1984, %v1982
      %v1986 = vsel %vm1309, %v1233, 0
      %v1987 = vand.u32 %v1986, 65535
      %v1988 = vshrl.u32 %v1986, 16
      %v1989 = vcvt.s32.f32 %v1987
      %v1990 = vcvt.s32.f32 %v1988
      %1991 = vadd.xlane.f32.xlu0 %v1989
      %v1992 = vpop.xlane.xlu0 %1991
      %1993 = vadd.xlane.f32.xlu0 %v1990
      %v1994 = vpop.xlane.xlu0 %1993
      %v1995 = vcvt.f32.s32 %v1992
      %v1996 = vcvt.f32.s32 %v1994
      %v1997 = vshll.u32 %v1996, 16
      %v1998 = vadd.s32 %v1997, %v1995
      %v1999 = vsel %vm1309, %v1234, 0
      %v2000 = vand.u32 %v1999, 65535
      %v2001 = vshrl.u32 %v1999, 16
      %v2002 = vcvt.s32.f32 %v2000
      %v2003 = vcvt.s32.f32 %v2001
      %2004 = vadd.xlane.f32.xlu0 %v2002
      %v2005 = vpop.xlane.xlu0 %2004
      %2006 = vadd.xlane.f32.xlu0 %v2003
      %v2007 = vpop.xlane.xlu0 %2006
      %v2008 = vcvt.f32.s32 %v2005
      %v2009 = vcvt.f32.s32 %v2007
      %v2010 = vshll.u32 %v2009, 16
      %v2011 = vadd.s32 %v2010, %v2008
      %v2012 = vsel %vm1309, %v1235, 0
      %v2013 = vand.u32 %v2012, 65535
      %v2014 = vshrl.u32 %v2012, 16
      %v2015 = vcvt.s32.f32 %v2013
      %v2016 = vcvt.s32.f32 %v2014
      %2017 = vadd.xlane.f32.xlu0 %v2015
      %v2018 = vpop.xlane.xlu0 %2017
      %2019 = vadd.xlane.f32.xlu0 %v2016
      %v2020 = vpop.xlane.xlu0 %2019
      %v2021 = vcvt.f32.s32 %v2018
      %v2022 = vcvt.f32.s32 %v2020
      %v2023 = vshll.u32 %v2022, 16
      %v2024 = vadd.s32 %v2023, %v2021
      %v2025 = vsel %vm1309, %v1236, 0
      %v2026 = vand.u32 %v2025, 65535
      %v2027 = vshrl.u32 %v2025, 16
      %v2028 = vcvt.s32.f32 %v2026
      %v2029 = vcvt.s32.f32 %v2027
      %2030 = vadd.xlane.f32.xlu0 %v2028
      %v2031 = vpop.xlane.xlu0 %2030
      %2032 = vadd.xlane.f32.xlu0 %v2029
      %v2033 = vpop.xlane.xlu0 %2032
      %v2034 = vcvt.f32.s32 %v2031
      %v2035 = vcvt.f32.s32 %v2033
      %v2036 = vshll.u32 %v2035, 16
      %v2037 = vadd.s32 %v2036, %v2034
      %v2038 = vsel %vm1309, %v1237, 0
      %v2039 = vand.u32 %v2038, 65535
      %v2040 = vshrl.u32 %v2038, 16
      %v2041 = vcvt.s32.f32 %v2039
      %v2042 = vcvt.s32.f32 %v2040
      %2043 = vadd.xlane.f32.xlu0 %v2041
      %v2044 = vpop.xlane.xlu0 %2043
      %2045 = vadd.xlane.f32.xlu0 %v2042
      %v2046 = vpop.xlane.xlu0 %2045
      %v2047 = vcvt.f32.s32 %v2044
      %v2048 = vcvt.f32.s32 %v2046
      %v2049 = vshll.u32 %v2048, 16
      %v2050 = vadd.s32 %v2049, %v2047
      %v2051 = vsel %vm1309, %v1238, 0
      %v2052 = vand.u32 %v2051, 65535
      %v2053 = vshrl.u32 %v2051, 16
      %v2054 = vcvt.s32.f32 %v2052
      %v2055 = vcvt.s32.f32 %v2053
      %2056 = vadd.xlane.f32.xlu0 %v2054
      %v2057 = vpop.xlane.xlu0 %2056
      %2058 = vadd.xlane.f32.xlu0 %v2055
      %v2059 = vpop.xlane.xlu0 %2058
      %v2060 = vcvt.f32.s32 %v2057
      %v2061 = vcvt.f32.s32 %v2059
      %v2062 = vshll.u32 %v2061, 16
      %v2063 = vadd.s32 %v2062, %v2060
      %v2064 = vsel %vm1309, %v1239, 0
      %v2065 = vand.u32 %v2064, 65535
      %v2066 = vshrl.u32 %v2064, 16
      %v2067 = vcvt.s32.f32 %v2065
      %v2068 = vcvt.s32.f32 %v2066
      %2069 = vadd.xlane.f32.xlu0 %v2067
      %v2070 = vpop.xlane.xlu0 %2069
      %2071 = vadd.xlane.f32.xlu0 %v2068
      %v2072 = vpop.xlane.xlu0 %2071
      %v2073 = vcvt.f32.s32 %v2070
      %v2074 = vcvt.f32.s32 %v2072
      %v2075 = vshll.u32 %v2074, 16
      %v2076 = vadd.s32 %v2075, %v2073
      %v2077 = vsel %vm1309, %v1240, 0
      %v2078 = vand.u32 %v2077, 65535
      %v2079 = vshrl.u32 %v2077, 16
      %v2080 = vcvt.s32.f32 %v2078
      %v2081 = vcvt.s32.f32 %v2079
      %2082 = vadd.xlane.f32.xlu0 %v2080
      %v2083 = vpop.xlane.xlu0 %2082
      %2084 = vadd.xlane.f32.xlu0 %v2081
      %v2085 = vpop.xlane.xlu0 %2084
      %v2086 = vcvt.f32.s32 %v2083
      %v2087 = vcvt.f32.s32 %v2085
      %v2088 = vshll.u32 %v2087, 16
      %v2089 = vadd.s32 %v2088, %v2086
      %v2090 = vsel %vm1309, %v1241, 0
      %v2091 = vand.u32 %v2090, 65535
      %v2092 = vshrl.u32 %v2090, 16
      %v2093 = vcvt.s32.f32 %v2091
      %v2094 = vcvt.s32.f32 %v2092
      %2095 = vadd.xlane.f32.xlu0 %v2093
      %v2096 = vpop.xlane.xlu0 %2095
      %2097 = vadd.xlane.f32.xlu0 %v2094
      %v2098 = vpop.xlane.xlu0 %2097
      %v2099 = vcvt.f32.s32 %v2096
      %v2100 = vcvt.f32.s32 %v2098
      %v2101 = vshll.u32 %v2100, 16
      %v2102 = vadd.s32 %v2101, %v2099
      %v2103 = vsel %vm1309, %v1242, 0
      %v2104 = vand.u32 %v2103, 65535
      %v2105 = vshrl.u32 %v2103, 16
      %v2106 = vcvt.s32.f32 %v2104
      %v2107 = vcvt.s32.f32 %v2105
      %2108 = vadd.xlane.f32.xlu0 %v2106
      %v2109 = vpop.xlane.xlu0 %2108
      %2110 = vadd.xlane.f32.xlu0 %v2107
      %v2111 = vpop.xlane.xlu0 %2110
      %v2112 = vcvt.f32.s32 %v2109
      %v2113 = vcvt.f32.s32 %v2111
      %v2114 = vshll.u32 %v2113, 16
      %v2115 = vadd.s32 %v2114, %v2112
      %v2116 = vsel %vm1309, %v1243, 0
      %v2117 = vand.u32 %v2116, 65535
      %v2118 = vshrl.u32 %v2116, 16
      %v2119 = vcvt.s32.f32 %v2117
      %v2120 = vcvt.s32.f32 %v2118
      %2121 = vadd.xlane.f32.xlu0 %v2119
      %v2122 = vpop.xlane.xlu0 %2121
      %2123 = vadd.xlane.f32.xlu0 %v2120
      %v2124 = vpop.xlane.xlu0 %2123
      %v2125 = vcvt.f32.s32 %v2122
      %v2126 = vcvt.f32.s32 %v2124
      %v2127 = vshll.u32 %v2126, 16
      %v2128 = vadd.s32 %v2127, %v2125
      %v2129 = vsel %vm1309, %v1244, 0
      %v2130 = vand.u32 %v2129, 65535
      %v2131 = vshrl.u32 %v2129, 16
      %v2132 = vcvt.s32.f32 %v2130
      %v2133 = vcvt.s32.f32 %v2131
      %2134 = vadd.xlane.f32.xlu0 %v2132
      %v2135 = vpop.xlane.xlu0 %2134
      %2136 = vadd.xlane.f32.xlu0 %v2133
      %v2137 = vpop.xlane.xlu0 %2136
      %v2138 = vcvt.f32.s32 %v2135
      %v2139 = vcvt.f32.s32 %v2137
      %v2140 = vshll.u32 %v2139, 16
      %v2141 = vadd.s32 %v2140, %v2138
      %v2142 = vsel %vm1309, %v1245, 0
      %v2143 = vand.u32 %v2142, 65535
      %v2144 = vshrl.u32 %v2142, 16
      %v2145 = vcvt.s32.f32 %v2143
      %v2146 = vcvt.s32.f32 %v2144
      %2147 = vadd.xlane.f32.xlu0 %v2145
      %v2148 = vpop.xlane.xlu0 %2147
      %2149 = vadd.xlane.f32.xlu0 %v2146
      %v2150 = vpop.xlane.xlu0 %2149
      %v2151 = vcvt.f32.s32 %v2148
      %v2152 = vcvt.f32.s32 %v2150
      %v2153 = vshll.u32 %v2152, 16
      %v2154 = vadd.s32 %v2153, %v2151
      %v2155 = vsel %vm1309, %v1246, 0
      %v2156 = vand.u32 %v2155, 65535
      %v2157 = vshrl.u32 %v2155, 16
      %v2158 = vcvt.s32.f32 %v2156
      %v2159 = vcvt.s32.f32 %v2157
      %2160 = vadd.xlane.f32.xlu0 %v2158
      %v2161 = vpop.xlane.xlu0 %2160
      %2162 = vadd.xlane.f32.xlu0 %v2159
      %v2163 = vpop.xlane.xlu0 %2162
      %v2164 = vcvt.f32.s32 %v2161
      %v2165 = vcvt.f32.s32 %v2163
      %v2166 = vshll.u32 %v2165, 16
      %v2167 = vadd.s32 %v2166, %v2164
      %v2168 = vsel %vm1309, %v1247, 0
      %v2169 = vand.u32 %v2168, 65535
      %v2170 = vshrl.u32 %v2168, 16
      %v2171 = vcvt.s32.f32 %v2169
      %v2172 = vcvt.s32.f32 %v2170
      %2173 = vadd.xlane.f32.xlu0 %v2171
      %v2174 = vpop.xlane.xlu0 %2173
      %2175 = vadd.xlane.f32.xlu0 %v2172
      %v2176 = vpop.xlane.xlu0 %2175
      %v2177 = vcvt.f32.s32 %v2174
      %v2178 = vcvt.f32.s32 %v2176
      %v2179 = vshll.u32 %v2178, 16
      %v2180 = vadd.s32 %v2179, %v2177
      %v2181 = vsel %vm1309, %v1248, 0
      %v2182 = vand.u32 %v2181, 65535
      %v2183 = vshrl.u32 %v2181, 16
      %v2184 = vcvt.s32.f32 %v2182
      %v2185 = vcvt.s32.f32 %v2183
      %2186 = vadd.xlane.f32.xlu0 %v2184
      %v2187 = vpop.xlane.xlu0 %2186
      %2188 = vadd.xlane.f32.xlu0 %v2185
      %v2189 = vpop.xlane.xlu0 %2188
      %v2190 = vcvt.f32.s32 %v2187
      %v2191 = vcvt.f32.s32 %v2189
      %v2192 = vshll.u32 %v2191, 16
      %v2193 = vadd.s32 %v2192, %v2190
      %v2194 = vsel %vm1309, %v1249, 0
      %v2195 = vand.u32 %v2194, 65535
      %v2196 = vshrl.u32 %v2194, 16
      %v2197 = vcvt.s32.f32 %v2195
      %v2198 = vcvt.s32.f32 %v2196
      %2199 = vadd.xlane.f32.xlu0 %v2197
      %v2200 = vpop.xlane.xlu0 %2199
      %2201 = vadd.xlane.f32.xlu0 %v2198
      %v2202 = vpop.xlane.xlu0 %2201
      %v2203 = vcvt.f32.s32 %v2200
      %v2204 = vcvt.f32.s32 %v2202
      %v2205 = vshll.u32 %v2204, 16
      %v2206 = vadd.s32 %v2205, %v2203
      %v2207 = vsel %vm1309, %v1250, 0
      %v2208 = vand.u32 %v2207, 65535
      %v2209 = vshrl.u32 %v2207, 16
      %v2210 = vcvt.s32.f32 %v2208
      %v2211 = vcvt.s32.f32 %v2209
      %2212 = vadd.xlane.f32.xlu0 %v2210
      %v2213 = vpop.xlane.xlu0 %2212
      %2214 = vadd.xlane.f32.xlu0 %v2211
      %v2215 = vpop.xlane.xlu0 %2214
      %v2216 = vcvt.f32.s32 %v2213
      %v2217 = vcvt.f32.s32 %v2215
      %v2218 = vshll.u32 %v2217, 16
      %v2219 = vadd.s32 %v2218, %v2216
      %v2220 = vsel %vm1309, %v1251, 0
      %v2221 = vand.u32 %v2220, 65535
      %v2222 = vshrl.u32 %v2220, 16
      %v2223 = vcvt.s32.f32 %v2221
      %v2224 = vcvt.s32.f32 %v2222
      %2225 = vadd.xlane.f32.xlu0 %v2223
      %v2226 = vpop.xlane.xlu0 %2225
      %2227 = vadd.xlane.f32.xlu0 %v2224
      %v2228 = vpop.xlane.xlu0 %2227
      %v2229 = vcvt.f32.s32 %v2226
      %v2230 = vcvt.f32.s32 %v2228
      %v2231 = vshll.u32 %v2230, 16
      %v2232 = vadd.s32 %v2231, %v2229
      %v2233 = vsel %vm1309, %v1252, 0
      %v2234 = vand.u32 %v2233, 65535
      %v2235 = vshrl.u32 %v2233, 16
      %v2236 = vcvt.s32.f32 %v2234
      %v2237 = vcvt.s32.f32 %v2235
      %2238 = vadd.xlane.f32.xlu0 %v2236
      %v2239 = vpop.xlane.xlu0 %2238
      %2240 = vadd.xlane.f32.xlu0 %v2237
      %v2241 = vpop.xlane.xlu0 %2240
      %v2242 = vcvt.f32.s32 %v2239
      %v2243 = vcvt.f32.s32 %v2241
      %v2244 = vshll.u32 %v2243, 16
      %v2245 = vadd.s32 %v2244, %v2242
      %v2246 = vsel %vm1309, %v1253, 0
      %v2247 = vand.u32 %v2246, 65535
      %v2248 = vshrl.u32 %v2246, 16
      %v2249 = vcvt.s32.f32 %v2247
      %v2250 = vcvt.s32.f32 %v2248
      %2251 = vadd.xlane.f32.xlu0 %v2249
      %v2252 = vpop.xlane.xlu0 %2251
      %2253 = vadd.xlane.f32.xlu0 %v2250
      %v2254 = vpop.xlane.xlu0 %2253
      %v2255 = vcvt.f32.s32 %v2252
      %v2256 = vcvt.f32.s32 %v2254
      %v2257 = vshll.u32 %v2256, 16
      %v2258 = vadd.s32 %v2257, %v2255
      %v2259 = vsel %vm1309, %v1254, 0
      %v2260 = vand.u32 %v2259, 65535
      %v2261 = vshrl.u32 %v2259, 16
      %v2262 = vcvt.s32.f32 %v2260
      %v2263 = vcvt.s32.f32 %v2261
      %2264 = vadd.xlane.f32.xlu0 %v2262
      %v2265 = vpop.xlane.xlu0 %2264
      %2266 = vadd.xlane.f32.xlu0 %v2263
      %v2267 = vpop.xlane.xlu0 %2266
      %v2268 = vcvt.f32.s32 %v2265
      %v2269 = vcvt.f32.s32 %v2267
      %v2270 = vshll.u32 %v2269, 16
      %v2271 = vadd.s32 %v2270, %v2268
      %v2272 = vsel %vm1309, %v1255, 0
      %v2273 = vand.u32 %v2272, 65535
      %v2274 = vshrl.u32 %v2272, 16
      %v2275 = vcvt.s32.f32 %v2273
      %v2276 = vcvt.s32.f32 %v2274
      %2277 = vadd.xlane.f32.xlu0 %v2275
      %v2278 = vpop.xlane.xlu0 %2277
      %2279 = vadd.xlane.f32.xlu0 %v2276
      %v2280 = vpop.xlane.xlu0 %2279
      %v2281 = vcvt.f32.s32 %v2278
      %v2282 = vcvt.f32.s32 %v2280
      %v2283 = vshll.u32 %v2282, 16
      %v2284 = vadd.s32 %v2283, %v2281
      %v2285 = vsel %vm1309, %v1256, 0
      %v2286 = vand.u32 %v2285, 65535
      %v2287 = vshrl.u32 %v2285, 16
      %v2288 = vcvt.s32.f32 %v2286
      %v2289 = vcvt.s32.f32 %v2287
      %2290 = vadd.xlane.f32.xlu0 %v2288
      %v2291 = vpop.xlane.xlu0 %2290
      %2292 = vadd.xlane.f32.xlu0 %v2289
      %v2293 = vpop.xlane.xlu0 %2292
      %v2294 = vcvt.f32.s32 %v2291
      %v2295 = vcvt.f32.s32 %v2293
      %v2296 = vshll.u32 %v2295, 16
      %v2297 = vadd.s32 %v2296, %v2294
      %v2298 = vsel %vm1309, %v1257, 0
      %v2299 = vand.u32 %v2298, 65535
      %v2300 = vshrl.u32 %v2298, 16
      %v2301 = vcvt.s32.f32 %v2299
      %v2302 = vcvt.s32.f32 %v2300
      %2303 = vadd.xlane.f32.xlu0 %v2301
      %v2304 = vpop.xlane.xlu0 %2303
      %2305 = vadd.xlane.f32.xlu0 %v2302
      %v2306 = vpop.xlane.xlu0 %2305
      %v2307 = vcvt.f32.s32 %v2304
      %v2308 = vcvt.f32.s32 %v2306
      %v2309 = vshll.u32 %v2308, 16
      %v2310 = vadd.s32 %v2309, %v2307
      %v2311 = vsel %vm1309, %v1258, 0
      %v2312 = vand.u32 %v2311, 65535
      %v2313 = vshrl.u32 %v2311, 16
      %v2314 = vcvt.s32.f32 %v2312
      %v2315 = vcvt.s32.f32 %v2313
      %2316 = vadd.xlane.f32.xlu0 %v2314
      %v2317 = vpop.xlane.xlu0 %2316
      %2318 = vadd.xlane.f32.xlu0 %v2315
      %v2319 = vpop.xlane.xlu0 %2318
      %v2320 = vcvt.f32.s32 %v2317
      %v2321 = vcvt.f32.s32 %v2319
      %v2322 = vshll.u32 %v2321, 16
      %v2323 = vadd.s32 %v2322, %v2320
      %v2324 = vsel %vm1309, %v1259, 0
      %v2325 = vand.u32 %v2324, 65535
      %v2326 = vshrl.u32 %v2324, 16
      %v2327 = vcvt.s32.f32 %v2325
      %v2328 = vcvt.s32.f32 %v2326
      %2329 = vadd.xlane.f32.xlu0 %v2327
      %v2330 = vpop.xlane.xlu0 %2329
      %2331 = vadd.xlane.f32.xlu0 %v2328
      %v2332 = vpop.xlane.xlu0 %2331
      %v2333 = vcvt.f32.s32 %v2330
      %v2334 = vcvt.f32.s32 %v2332
      %v2335 = vshll.u32 %v2334, 16
      %v2336 = vadd.s32 %v2335, %v2333
      %v2337 = vsel %vm1309, %v1260, 0
      %v2338 = vand.u32 %v2337, 65535
      %v2339 = vshrl.u32 %v2337, 16
      %v2340 = vcvt.s32.f32 %v2338
      %v2341 = vcvt.s32.f32 %v2339
      %2342 = vadd.xlane.f32.xlu0 %v2340
      %v2343 = vpop.xlane.xlu0 %2342
      %2344 = vadd.xlane.f32.xlu0 %v2341
      %v2345 = vpop.xlane.xlu0 %2344
      %v2346 = vcvt.f32.s32 %v2343
      %v2347 = vcvt.f32.s32 %v2345
      %v2348 = vshll.u32 %v2347, 16
      %v2349 = vadd.s32 %v2348, %v2346
      %v2350 = vsel %vm1309, %v1261, 0
      %v2351 = vand.u32 %v2350, 65535
      %v2352 = vshrl.u32 %v2350, 16
      %v2353 = vcvt.s32.f32 %v2351
      %v2354 = vcvt.s32.f32 %v2352
      %2355 = vadd.xlane.f32.xlu0 %v2353
      %v2356 = vpop.xlane.xlu0 %2355
      %2357 = vadd.xlane.f32.xlu0 %v2354
      %v2358 = vpop.xlane.xlu0 %2357
      %v2359 = vcvt.f32.s32 %v2356
      %v2360 = vcvt.f32.s32 %v2358
      %v2361 = vshll.u32 %v2360, 16
      %v2362 = vadd.s32 %v2361, %v2359
      %v2363 = vsel %vm1309, %v1262, 0
      %v2364 = vand.u32 %v2363, 65535
      %v2365 = vshrl.u32 %v2363, 16
      %v2366 = vcvt.s32.f32 %v2364
      %v2367 = vcvt.s32.f32 %v2365
      %2368 = vadd.xlane.f32.xlu0 %v2366
      %v2369 = vpop.xlane.xlu0 %2368
      %2370 = vadd.xlane.f32.xlu0 %v2367
      %v2371 = vpop.xlane.xlu0 %2370
      %v2372 = vcvt.f32.s32 %v2369
      %v2373 = vcvt.f32.s32 %v2371
      %v2374 = vshll.u32 %v2373, 16
      %v2375 = vadd.s32 %v2374, %v2372
      %v2376 = vsel %vm1309, %v1263, 0
      %v2377 = vand.u32 %v2376, 65535
      %v2378 = vshrl.u32 %v2376, 16
      %v2379 = vcvt.s32.f32 %v2377
      %v2380 = vcvt.s32.f32 %v2378
      %2381 = vadd.xlane.f32.xlu0 %v2379
      %v2382 = vpop.xlane.xlu0 %2381
      %2383 = vadd.xlane.f32.xlu0 %v2380
      %v2384 = vpop.xlane.xlu0 %2383
      %v2385 = vcvt.f32.s32 %v2382
      %v2386 = vcvt.f32.s32 %v2384
      %v2387 = vshll.u32 %v2386, 16
      %v2388 = vadd.s32 %v2387, %v2385
      %v2389 = vsel %vm1309, %v1264, 0
      %v2390 = vand.u32 %v2389, 65535
      %v2391 = vshrl.u32 %v2389, 16
      %v2392 = vcvt.s32.f32 %v2390
      %v2393 = vcvt.s32.f32 %v2391
      %2394 = vadd.xlane.f32.xlu0 %v2392
      %v2395 = vpop.xlane.xlu0 %2394
      %2396 = vadd.xlane.f32.xlu0 %v2393
      %v2397 = vpop.xlane.xlu0 %2396
      %v2398 = vcvt.f32.s32 %v2395
      %v2399 = vcvt.f32.s32 %v2397
      %v2400 = vshll.u32 %v2399, 16
      %v2401 = vadd.s32 %v2400, %v2398
      %v2402 = vsel %vm1309, %v1265, 0
      %v2403 = vand.u32 %v2402, 65535
      %v2404 = vshrl.u32 %v2402, 16
      %v2405 = vcvt.s32.f32 %v2403
      %v2406 = vcvt.s32.f32 %v2404
      %2407 = vadd.xlane.f32.xlu0 %v2405
      %v2408 = vpop.xlane.xlu0 %2407
      %2409 = vadd.xlane.f32.xlu0 %v2406
      %v2410 = vpop.xlane.xlu0 %2409
      %v2411 = vcvt.f32.s32 %v2408
      %v2412 = vcvt.f32.s32 %v2410
      %v2413 = vshll.u32 %v2412, 16
      %v2414 = vadd.s32 %v2413, %v2411
      %v2415 = vsel %vm1309, %v1266, 0
      %v2416 = vand.u32 %v2415, 65535
      %v2417 = vshrl.u32 %v2415, 16
      %v2418 = vcvt.s32.f32 %v2416
      %v2419 = vcvt.s32.f32 %v2417
      %2420 = vadd.xlane.f32.xlu0 %v2418
      %v2421 = vpop.xlane.xlu0 %2420
      %2422 = vadd.xlane.f32.xlu0 %v2419
      %v2423 = vpop.xlane.xlu0 %2422
      %v2424 = vcvt.f32.s32 %v2421
      %v2425 = vcvt.f32.s32 %v2423
      %v2426 = vshll.u32 %v2425, 16
      %v2427 = vadd.s32 %v2426, %v2424
      %v2428 = vsel %vm1309, %v1267, 0
      %v2429 = vand.u32 %v2428, 65535
      %v2430 = vshrl.u32 %v2428, 16
      %v2431 = vcvt.s32.f32 %v2429
      %v2432 = vcvt.s32.f32 %v2430
      %2433 = vadd.xlane.f32.xlu0 %v2431
      %v2434 = vpop.xlane.xlu0 %2433
      %2435 = vadd.xlane.f32.xlu0 %v2432
      %v2436 = vpop.xlane.xlu0 %2435
      %v2437 = vcvt.f32.s32 %v2434
      %v2438 = vcvt.f32.s32 %v2436
      %v2439 = vshll.u32 %v2438, 16
      %v2440 = vadd.s32 %v2439, %v2437
      %v2441 = vsel %vm1309, %v1268, 0
      %v2442 = vand.u32 %v2441, 65535
      %v2443 = vshrl.u32 %v2441, 16
      %v2444 = vcvt.s32.f32 %v2442
      %v2445 = vcvt.s32.f32 %v2443
      %2446 = vadd.xlane.f32.xlu0 %v2444
      %v2447 = vpop.xlane.xlu0 %2446
      %2448 = vadd.xlane.f32.xlu0 %v2445
      %v2449 = vpop.xlane.xlu0 %2448
      %v2450 = vcvt.f32.s32 %v2447
      %v2451 = vcvt.f32.s32 %v2449
      %v2452 = vshll.u32 %v2451, 16
      %v2453 = vadd.s32 %v2452, %v2450
      %v2454 = vsel %vm1309, %v1269, 0
      %v2455 = vand.u32 %v2454, 65535
      %v2456 = vshrl.u32 %v2454, 16
      %v2457 = vcvt.s32.f32 %v2455
      %v2458 = vcvt.s32.f32 %v2456
      %2459 = vadd.xlane.f32.xlu0 %v2457
      %v2460 = vpop.xlane.xlu0 %2459
      %2461 = vadd.xlane.f32.xlu0 %v2458
      %v2462 = vpop.xlane.xlu0 %2461
      %v2463 = vcvt.f32.s32 %v2460
      %v2464 = vcvt.f32.s32 %v2462
      %v2465 = vshll.u32 %v2464, 16
      %v2466 = vadd.s32 %v2465, %v2463
      %v2467 = vsel %vm1309, %v1270, 0
      %v2468 = vand.u32 %v2467, 65535
      %v2469 = vshrl.u32 %v2467, 16
      %v2470 = vcvt.s32.f32 %v2468
      %v2471 = vcvt.s32.f32 %v2469
      %2472 = vadd.xlane.f32.xlu0 %v2470
      %v2473 = vpop.xlane.xlu0 %2472
      %2474 = vadd.xlane.f32.xlu0 %v2471
      %v2475 = vpop.xlane.xlu0 %2474
      %v2476 = vcvt.f32.s32 %v2473
      %v2477 = vcvt.f32.s32 %v2475
      %v2478 = vshll.u32 %v2477, 16
      %v2479 = vadd.s32 %v2478, %v2476
      %v2480 = vsel %vm1309, %v1271, 0
      %v2481 = vand.u32 %v2480, 65535
      %v2482 = vshrl.u32 %v2480, 16
      %v2483 = vcvt.s32.f32 %v2481
      %v2484 = vcvt.s32.f32 %v2482
      %2485 = vadd.xlane.f32.xlu0 %v2483
      %v2486 = vpop.xlane.xlu0 %2485
      %2487 = vadd.xlane.f32.xlu0 %v2484
      %v2488 = vpop.xlane.xlu0 %2487
      %v2489 = vcvt.f32.s32 %v2486
      %v2490 = vcvt.f32.s32 %v2488
      %v2491 = vshll.u32 %v2490, 16
      %v2492 = vadd.s32 %v2491, %v2489
      %v2493 = vsel %vm1309, %v1272, 0
      %v2494 = vand.u32 %v2493, 65535
      %v2495 = vshrl.u32 %v2493, 16
      %v2496 = vcvt.s32.f32 %v2494
      %v2497 = vcvt.s32.f32 %v2495
      %2498 = vadd.xlane.f32.xlu0 %v2496
      %v2499 = vpop.xlane.xlu0 %2498
      %2500 = vadd.xlane.f32.xlu0 %v2497
      %v2501 = vpop.xlane.xlu0 %2500
      %v2502 = vcvt.f32.s32 %v2499
      %v2503 = vcvt.f32.s32 %v2501
      %v2504 = vshll.u32 %v2503, 16
      %v2505 = vadd.s32 %v2504, %v2502
      %v2506 = vsel %vm1309, %v1273, 0
      %v2507 = vand.u32 %v2506, 65535
      %v2508 = vshrl.u32 %v2506, 16
      %v2509 = vcvt.s32.f32 %v2507
      %v2510 = vcvt.s32.f32 %v2508
      %2511 = vadd.xlane.f32.xlu0 %v2509
      %v2512 = vpop.xlane.xlu0 %2511
      %2513 = vadd.xlane.f32.xlu0 %v2510
      %v2514 = vpop.xlane.xlu0 %2513
      %v2515 = vcvt.f32.s32 %v2512
      %v2516 = vcvt.f32.s32 %v2514
      %v2517 = vshll.u32 %v2516, 16
      %v2518 = vadd.s32 %v2517, %v2515
      %v2519 = vsel %vm1309, %v1274, 0
      %v2520 = vand.u32 %v2519, 65535
      %v2521 = vshrl.u32 %v2519, 16
      %v2522 = vcvt.s32.f32 %v2520
      %v2523 = vcvt.s32.f32 %v2521
      %2524 = vadd.xlane.f32.xlu0 %v2522
      %v2525 = vpop.xlane.xlu0 %2524
      %2526 = vadd.xlane.f32.xlu0 %v2523
      %v2527 = vpop.xlane.xlu0 %2526
      %v2528 = vcvt.f32.s32 %v2525
      %v2529 = vcvt.f32.s32 %v2527
      %v2530 = vshll.u32 %v2529, 16
      %v2531 = vadd.s32 %v2530, %v2528
      %v2532 = vsel %vm1309, %v1275, 0
      %v2533 = vand.u32 %v2532, 65535
      %v2534 = vshrl.u32 %v2532, 16
      %v2535 = vcvt.s32.f32 %v2533
      %v2536 = vcvt.s32.f32 %v2534
      %2537 = vadd.xlane.f32.xlu0 %v2535
      %v2538 = vpop.xlane.xlu0 %2537
      %2539 = vadd.xlane.f32.xlu0 %v2536
      %v2540 = vpop.xlane.xlu0 %2539
      %v2541 = vcvt.f32.s32 %v2538
      %v2542 = vcvt.f32.s32 %v2540
      %v2543 = vshll.u32 %v2542, 16
      %v2544 = vadd.s32 %v2543, %v2541
      %v2545 = vsel %vm1309, %v1276, 0
      %v2546 = vand.u32 %v2545, 65535
      %v2547 = vshrl.u32 %v2545, 16
      %v2548 = vcvt.s32.f32 %v2546
      %v2549 = vcvt.s32.f32 %v2547
      %2550 = vadd.xlane.f32.xlu0 %v2548
      %v2551 = vpop.xlane.xlu0 %2550
      %2552 = vadd.xlane.f32.xlu0 %v2549
      %v2553 = vpop.xlane.xlu0 %2552
      %v2554 = vcvt.f32.s32 %v2551
      %v2555 = vcvt.f32.s32 %v2553
      %v2556 = vshll.u32 %v2555, 16
      %v2557 = vadd.s32 %v2556, %v2554
      %v2558 = vsel %vm1309, %v1277, 0
      %v2559 = vand.u32 %v2558, 65535
      %v2560 = vshrl.u32 %v2558, 16
      %v2561 = vcvt.s32.f32 %v2559
      %v2562 = vcvt.s32.f32 %v2560
      %2563 = vadd.xlane.f32.xlu0 %v2561
      %v2564 = vpop.xlane.xlu0 %2563
      %2565 = vadd.xlane.f32.xlu0 %v2562
      %v2566 = vpop.xlane.xlu0 %2565
      %v2567 = vcvt.f32.s32 %v2564
      %v2568 = vcvt.f32.s32 %v2566
      %v2569 = vshll.u32 %v2568, 16
      %v2570 = vadd.s32 %v2569, %v2567
      %v2571 = vsel %vm1309, %v1278, 0
      %v2572 = vand.u32 %v2571, 65535
      %v2573 = vshrl.u32 %v2571, 16
      %v2574 = vcvt.s32.f32 %v2572
      %v2575 = vcvt.s32.f32 %v2573
      %2576 = vadd.xlane.f32.xlu0 %v2574
      %v2577 = vpop.xlane.xlu0 %2576
      %2578 = vadd.xlane.f32.xlu0 %v2575
      %v2579 = vpop.xlane.xlu0 %2578
      %v2580 = vcvt.f32.s32 %v2577
      %v2581 = vcvt.f32.s32 %v2579
      %v2582 = vshll.u32 %v2581, 16
      %v2583 = vadd.s32 %v2582, %v2580
      %v2584 = vsel %vm1309, %v1279, 0
      %v2585 = vand.u32 %v2584, 65535
      %v2586 = vshrl.u32 %v2584, 16
      %v2587 = vcvt.s32.f32 %v2585
      %v2588 = vcvt.s32.f32 %v2586
      %2589 = vadd.xlane.f32.xlu0 %v2587
      %v2590 = vpop.xlane.xlu0 %2589
      %2591 = vadd.xlane.f32.xlu0 %v2588
      %v2592 = vpop.xlane.xlu0 %2591
      %v2593 = vcvt.f32.s32 %v2590
      %v2594 = vcvt.f32.s32 %v2592
      %v2595 = vshll.u32 %v2594, 16
      %v2596 = vadd.s32 %v2595, %v2593
      %v2597 = vsel %vm1309, %v1280, 0
      %v2598 = vand.u32 %v2597, 65535
      %v2599 = vshrl.u32 %v2597, 16
      %v2600 = vcvt.s32.f32 %v2598
      %v2601 = vcvt.s32.f32 %v2599
      %2602 = vadd.xlane.f32.xlu0 %v2600
      %v2603 = vpop.xlane.xlu0 %2602
      %2604 = vadd.xlane.f32.xlu0 %v2601
      %v2605 = vpop.xlane.xlu0 %2604
      %v2606 = vcvt.f32.s32 %v2603
      %v2607 = vcvt.f32.s32 %v2605
      %v2608 = vshll.u32 %v2607, 16
      %v2609 = vadd.s32 %v2608, %v2606
      %v2610 = vsel %vm1309, %v1281, 0
      %v2611 = vand.u32 %v2610, 65535
      %v2612 = vshrl.u32 %v2610, 16
      %v2613 = vcvt.s32.f32 %v2611
      %v2614 = vcvt.s32.f32 %v2612
      %2615 = vadd.xlane.f32.xlu0 %v2613
      %v2616 = vpop.xlane.xlu0 %2615
      %2617 = vadd.xlane.f32.xlu0 %v2614
      %v2618 = vpop.xlane.xlu0 %2617
      %v2619 = vcvt.f32.s32 %v2616
      %v2620 = vcvt.f32.s32 %v2618
      %v2621 = vshll.u32 %v2620, 16
      %v2622 = vadd.s32 %v2621, %v2619
      %v2623 = vsel %vm1309, %v1282, 0
      %v2624 = vand.u32 %v2623, 65535
      %v2625 = vshrl.u32 %v2623, 16
      %v2626 = vcvt.s32.f32 %v2624
      %v2627 = vcvt.s32.f32 %v2625
      %2628 = vadd.xlane.f32.xlu0 %v2626
      %v2629 = vpop.xlane.xlu0 %2628
      %2630 = vadd.xlane.f32.xlu0 %v2627
      %v2631 = vpop.xlane.xlu0 %2630
      %v2632 = vcvt.f32.s32 %v2629
      %v2633 = vcvt.f32.s32 %v2631
      %v2634 = vshll.u32 %v2633, 16
      %v2635 = vadd.s32 %v2634, %v2632
      %v2636 = vsel %vm1309, %v1283, 0
      %v2637 = vand.u32 %v2636, 65535
      %v2638 = vshrl.u32 %v2636, 16
      %v2639 = vcvt.s32.f32 %v2637
      %v2640 = vcvt.s32.f32 %v2638
      %2641 = vadd.xlane.f32.xlu0 %v2639
      %v2642 = vpop.xlane.xlu0 %2641
      %2643 = vadd.xlane.f32.xlu0 %v2640
      %v2644 = vpop.xlane.xlu0 %2643
      %v2645 = vcvt.f32.s32 %v2642
      %v2646 = vcvt.f32.s32 %v2644
      %v2647 = vshll.u32 %v2646, 16
      %v2648 = vadd.s32 %v2647, %v2645
      %v2649 = vsel %vm1309, %v1284, 0
      %v2650 = vand.u32 %v2649, 65535
      %v2651 = vshrl.u32 %v2649, 16
      %v2652 = vcvt.s32.f32 %v2650
      %v2653 = vcvt.s32.f32 %v2651
      %2654 = vadd.xlane.f32.xlu0 %v2652
      %v2655 = vpop.xlane.xlu0 %2654
      %2656 = vadd.xlane.f32.xlu0 %v2653
      %v2657 = vpop.xlane.xlu0 %2656
      %v2658 = vcvt.f32.s32 %v2655
      %v2659 = vcvt.f32.s32 %v2657
      %v2660 = vshll.u32 %v2659, 16
      %v2661 = vadd.s32 %v2660, %v2658
      %v2662 = vsel %vm1309, %v1285, 0
      %v2663 = vand.u32 %v2662, 65535
      %v2664 = vshrl.u32 %v2662, 16
      %v2665 = vcvt.s32.f32 %v2663
      %v2666 = vcvt.s32.f32 %v2664
      %2667 = vadd.xlane.f32.xlu0 %v2665
      %v2668 = vpop.xlane.xlu0 %2667
      %2669 = vadd.xlane.f32.xlu0 %v2666
      %v2670 = vpop.xlane.xlu0 %2669
      %v2671 = vcvt.f32.s32 %v2668
      %v2672 = vcvt.f32.s32 %v2670
      %v2673 = vshll.u32 %v2672, 16
      %v2674 = vadd.s32 %v2673, %v2671
      %v2675 = vsel %vm1309, %v1286, 0
      %v2676 = vand.u32 %v2675, 65535
      %v2677 = vshrl.u32 %v2675, 16
      %v2678 = vcvt.s32.f32 %v2676
      %v2679 = vcvt.s32.f32 %v2677
      %2680 = vadd.xlane.f32.xlu0 %v2678
      %v2681 = vpop.xlane.xlu0 %2680
      %2682 = vadd.xlane.f32.xlu0 %v2679
      %v2683 = vpop.xlane.xlu0 %2682
      %v2684 = vcvt.f32.s32 %v2681
      %v2685 = vcvt.f32.s32 %v2683
      %v2686 = vshll.u32 %v2685, 16
      %v2687 = vadd.s32 %v2686, %v2684
      %v2688 = vsel %vm1309, %v1287, 0
      %v2689 = vand.u32 %v2688, 65535
      %v2690 = vshrl.u32 %v2688, 16
      %v2691 = vcvt.s32.f32 %v2689
      %v2692 = vcvt.s32.f32 %v2690
      %2693 = vadd.xlane.f32.xlu0 %v2691
      %v2694 = vpop.xlane.xlu0 %2693
      %2695 = vadd.xlane.f32.xlu0 %v2692
      %v2696 = vpop.xlane.xlu0 %2695
      %v2697 = vcvt.f32.s32 %v2694
      %v2698 = vcvt.f32.s32 %v2696
      %v2699 = vshll.u32 %v2698, 16
      %v2700 = vadd.s32 %v2699, %v2697
      %v2701 = vsel %vm1309, %v1288, 0
      %v2702 = vand.u32 %v2701, 65535
      %v2703 = vshrl.u32 %v2701, 16
      %v2704 = vcvt.s32.f32 %v2702
      %v2705 = vcvt.s32.f32 %v2703
      %2706 = vadd.xlane.f32.xlu0 %v2704
      %v2707 = vpop.xlane.xlu0 %2706
      %2708 = vadd.xlane.f32.xlu0 %v2705
      %v2709 = vpop.xlane.xlu0 %2708
      %v2710 = vcvt.f32.s32 %v2707
      %v2711 = vcvt.f32.s32 %v2709
      %v2712 = vshll.u32 %v2711, 16
      %v2713 = vadd.s32 %v2712, %v2710
      %v2714 = vsel %vm1309, %v1289, 0
      %v2715 = vand.u32 %v2714, 65535
      %v2716 = vshrl.u32 %v2714, 16
      %v2717 = vcvt.s32.f32 %v2715
      %v2718 = vcvt.s32.f32 %v2716
      %2719 = vadd.xlane.f32.xlu0 %v2717
      %v2720 = vpop.xlane.xlu0 %2719
      %2721 = vadd.xlane.f32.xlu0 %v2718
      %v2722 = vpop.xlane.xlu0 %2721
      %v2723 = vcvt.f32.s32 %v2720
      %v2724 = vcvt.f32.s32 %v2722
      %v2725 = vshll.u32 %v2724, 16
      %v2726 = vadd.s32 %v2725, %v2723
      %v2727 = vsel %vm1309, %v1290, 0
      %v2728 = vand.u32 %v2727, 65535
      %v2729 = vshrl.u32 %v2727, 16
      %v2730 = vcvt.s32.f32 %v2728
      %v2731 = vcvt.s32.f32 %v2729
      %2732 = vadd.xlane.f32.xlu0 %v2730
      %v2733 = vpop.xlane.xlu0 %2732
      %2734 = vadd.xlane.f32.xlu0 %v2731
      %v2735 = vpop.xlane.xlu0 %2734
      %v2736 = vcvt.f32.s32 %v2733
      %v2737 = vcvt.f32.s32 %v2735
      %v2738 = vshll.u32 %v2737, 16
      %v2739 = vadd.s32 %v2738, %v2736
      %v2740 = vsel %vm1309, %v1291, 0
      %v2741 = vand.u32 %v2740, 65535
      %v2742 = vshrl.u32 %v2740, 16
      %v2743 = vcvt.s32.f32 %v2741
      %v2744 = vcvt.s32.f32 %v2742
      %2745 = vadd.xlane.f32.xlu0 %v2743
      %v2746 = vpop.xlane.xlu0 %2745
      %2747 = vadd.xlane.f32.xlu0 %v2744
      %v2748 = vpop.xlane.xlu0 %2747
      %v2749 = vcvt.f32.s32 %v2746
      %v2750 = vcvt.f32.s32 %v2748
      %v2751 = vshll.u32 %v2750, 16
      %v2752 = vadd.s32 %v2751, %v2749
      %v2753 = vsel %vm1309, %v1292, 0
      %v2754 = vand.u32 %v2753, 65535
      %v2755 = vshrl.u32 %v2753, 16
      %v2756 = vcvt.s32.f32 %v2754
      %v2757 = vcvt.s32.f32 %v2755
      %2758 = vadd.xlane.f32.xlu0 %v2756
      %v2759 = vpop.xlane.xlu0 %2758
      %2760 = vadd.xlane.f32.xlu0 %v2757
      %v2761 = vpop.xlane.xlu0 %2760
      %v2762 = vcvt.f32.s32 %v2759
      %v2763 = vcvt.f32.s32 %v2761
      %v2764 = vshll.u32 %v2763, 16
      %v2765 = vadd.s32 %v2764, %v2762
      %v2766 = vsel %vm1309, %v1293, 0
      %v2767 = vand.u32 %v2766, 65535
      %v2768 = vshrl.u32 %v2766, 16
      %v2769 = vcvt.s32.f32 %v2767
      %v2770 = vcvt.s32.f32 %v2768
      %2771 = vadd.xlane.f32.xlu0 %v2769
      %v2772 = vpop.xlane.xlu0 %2771
      %2773 = vadd.xlane.f32.xlu0 %v2770
      %v2774 = vpop.xlane.xlu0 %2773
      %v2775 = vcvt.f32.s32 %v2772
      %v2776 = vcvt.f32.s32 %v2774
      %v2777 = vshll.u32 %v2776, 16
      %v2778 = vadd.s32 %v2777, %v2775
      %v2779 = vsel %vm1309, %v1294, 0
      %v2780 = vand.u32 %v2779, 65535
      %v2781 = vshrl.u32 %v2779, 16
      %v2782 = vcvt.s32.f32 %v2780
      %v2783 = vcvt.s32.f32 %v2781
      %2784 = vadd.xlane.f32.xlu0 %v2782
      %v2785 = vpop.xlane.xlu0 %2784
      %2786 = vadd.xlane.f32.xlu0 %v2783
      %v2787 = vpop.xlane.xlu0 %2786
      %v2788 = vcvt.f32.s32 %v2785
      %v2789 = vcvt.f32.s32 %v2787
      %v2790 = vshll.u32 %v2789, 16
      %v2791 = vadd.s32 %v2790, %v2788
      %v2792 = vsel %vm1309, %v1295, 0
      %v2793 = vand.u32 %v2792, 65535
      %v2794 = vshrl.u32 %v2792, 16
      %v2795 = vcvt.s32.f32 %v2793
      %v2796 = vcvt.s32.f32 %v2794
      %2797 = vadd.xlane.f32.xlu0 %v2795
      %v2798 = vpop.xlane.xlu0 %2797
      %2799 = vadd.xlane.f32.xlu0 %v2796
      %v2800 = vpop.xlane.xlu0 %2799
      %v2801 = vcvt.f32.s32 %v2798
      %v2802 = vcvt.f32.s32 %v2800
      %v2803 = vshll.u32 %v2802, 16
      %v2804 = vadd.s32 %v2803, %v2801
      %v2805 = vsel %vm1309, %v1296, 0
      %v2806 = vand.u32 %v2805, 65535
      %v2807 = vshrl.u32 %v2805, 16
      %v2808 = vcvt.s32.f32 %v2806
      %v2809 = vcvt.s32.f32 %v2807
      %2810 = vadd.xlane.f32.xlu0 %v2808
      %v2811 = vpop.xlane.xlu0 %2810
      %2812 = vadd.xlane.f32.xlu0 %v2809
      %v2813 = vpop.xlane.xlu0 %2812
      %v2814 = vcvt.f32.s32 %v2811
      %v2815 = vcvt.f32.s32 %v2813
      %v2816 = vshll.u32 %v2815, 16
      %v2817 = vadd.s32 %v2816, %v2814
      %v2818 = vsel %vm1309, %v1297, 0
      %v2819 = vand.u32 %v2818, 65535
      %v2820 = vshrl.u32 %v2818, 16
      %v2821 = vcvt.s32.f32 %v2819
      %v2822 = vcvt.s32.f32 %v2820
      %2823 = vadd.xlane.f32.xlu0 %v2821
      %v2824 = vpop.xlane.xlu0 %2823
      %2825 = vadd.xlane.f32.xlu0 %v2822
      %v2826 = vpop.xlane.xlu0 %2825
      %v2827 = vcvt.f32.s32 %v2824
      %v2828 = vcvt.f32.s32 %v2826
      %v2829 = vshll.u32 %v2828, 16
      %v2830 = vadd.s32 %v2829, %v2827
      %v2831 = vsel %vm1309, %v1298, 0
      %v2832 = vand.u32 %v2831, 65535
      %v2833 = vshrl.u32 %v2831, 16
      %v2834 = vcvt.s32.f32 %v2832
      %v2835 = vcvt.s32.f32 %v2833
      %2836 = vadd.xlane.f32.xlu0 %v2834
      %v2837 = vpop.xlane.xlu0 %2836
      %2838 = vadd.xlane.f32.xlu0 %v2835
      %v2839 = vpop.xlane.xlu0 %2838
      %v2840 = vcvt.f32.s32 %v2837
      %v2841 = vcvt.f32.s32 %v2839
      %v2842 = vshll.u32 %v2841, 16
      %v2843 = vadd.s32 %v2842, %v2840
      %v2844 = vsel %vm1309, %v1299, 0
      %v2845 = vand.u32 %v2844, 65535
      %v2846 = vshrl.u32 %v2844, 16
      %v2847 = vcvt.s32.f32 %v2845
      %v2848 = vcvt.s32.f32 %v2846
      %2849 = vadd.xlane.f32.xlu0 %v2847
      %v2850 = vpop.xlane.xlu0 %2849
      %2851 = vadd.xlane.f32.xlu0 %v2848
      %v2852 = vpop.xlane.xlu0 %2851
      %v2853 = vcvt.f32.s32 %v2850
      %v2854 = vcvt.f32.s32 %v2852
      %v2855 = vshll.u32 %v2854, 16
      %v2856 = vadd.s32 %v2855, %v2853
      %v2857 = vsel %vm1309, %v1300, 0
      %v2858 = vand.u32 %v2857, 65535
      %v2859 = vshrl.u32 %v2857, 16
      %v2860 = vcvt.s32.f32 %v2858
      %v2861 = vcvt.s32.f32 %v2859
      %2862 = vadd.xlane.f32.xlu0 %v2860
      %v2863 = vpop.xlane.xlu0 %2862
      %2864 = vadd.xlane.f32.xlu0 %v2861
      %v2865 = vpop.xlane.xlu0 %2864
      %v2866 = vcvt.f32.s32 %v2863
      %v2867 = vcvt.f32.s32 %v2865
      %v2868 = vshll.u32 %v2867, 16
      %v2869 = vadd.s32 %v2868, %v2866
      %v2870 = vsel %vm1309, %v1301, 0
      %v2871 = vand.u32 %v2870, 65535
      %v2872 = vshrl.u32 %v2870, 16
      %v2873 = vcvt.s32.f32 %v2871
      %v2874 = vcvt.s32.f32 %v2872
      %2875 = vadd.xlane.f32.xlu0 %v2873
      %v2876 = vpop.xlane.xlu0 %2875
      %2877 = vadd.xlane.f32.xlu0 %v2874
      %v2878 = vpop.xlane.xlu0 %2877
      %v2879 = vcvt.f32.s32 %v2876
      %v2880 = vcvt.f32.s32 %v2878
      %v2881 = vshll.u32 %v2880, 16
      %v2882 = vadd.s32 %v2881, %v2879
      %v2883 = vsel %vm1309, %v1302, 0
      %v2884 = vand.u32 %v2883, 65535
      %v2885 = vshrl.u32 %v2883, 16
      %v2886 = vcvt.s32.f32 %v2884
      %v2887 = vcvt.s32.f32 %v2885
      %2888 = vadd.xlane.f32.xlu0 %v2886
      %v2889 = vpop.xlane.xlu0 %2888
      %2890 = vadd.xlane.f32.xlu0 %v2887
      %v2891 = vpop.xlane.xlu0 %2890
      %v2892 = vcvt.f32.s32 %v2889
      %v2893 = vcvt.f32.s32 %v2891
      %v2894 = vshll.u32 %v2893, 16
      %v2895 = vadd.s32 %v2894, %v2892
      %v2896 = vsel %vm1309, %v1303, 0
      %v2897 = vand.u32 %v2896, 65535
      %v2898 = vshrl.u32 %v2896, 16
      %v2899 = vcvt.s32.f32 %v2897
      %v2900 = vcvt.s32.f32 %v2898
      %2901 = vadd.xlane.f32.xlu0 %v2899
      %v2902 = vpop.xlane.xlu0 %2901
      %2903 = vadd.xlane.f32.xlu0 %v2900
      %v2904 = vpop.xlane.xlu0 %2903
      %v2905 = vcvt.f32.s32 %v2902
      %v2906 = vcvt.f32.s32 %v2904
      %v2907 = vshll.u32 %v2906, 16
      %v2908 = vadd.s32 %v2907, %v2905
      %v2909 = vsel %vm1309, %v1304, 0
      %v2910 = vand.u32 %v2909, 65535
      %v2911 = vshrl.u32 %v2909, 16
      %v2912 = vcvt.s32.f32 %v2910
      %v2913 = vcvt.s32.f32 %v2911
      %2914 = vadd.xlane.f32.xlu0 %v2912
      %v2915 = vpop.xlane.xlu0 %2914
      %2916 = vadd.xlane.f32.xlu0 %v2913
      %v2917 = vpop.xlane.xlu0 %2916
      %v2918 = vcvt.f32.s32 %v2915
      %v2919 = vcvt.f32.s32 %v2917
      %v2920 = vshll.u32 %v2919, 16
      %v2921 = vadd.s32 %v2920, %v2918
      %v2922 = vsel %vm1309, %v1305, 0
      %v2923 = vand.u32 %v2922, 65535
      %v2924 = vshrl.u32 %v2922, 16
      %v2925 = vcvt.s32.f32 %v2923
      %v2926 = vcvt.s32.f32 %v2924
      %2927 = vadd.xlane.f32.xlu0 %v2925
      %v2928 = vpop.xlane.xlu0 %2927
      %2929 = vadd.xlane.f32.xlu0 %v2926
      %v2930 = vpop.xlane.xlu0 %2929
      %v2931 = vcvt.f32.s32 %v2928
      %v2932 = vcvt.f32.s32 %v2930
      %v2933 = vshll.u32 %v2932, 16
      %v2934 = vadd.s32 %v2933, %v2931
      %v2935 = vsel %vm1309, %v1306, 0
      %v2936 = vand.u32 %v2935, 65535
      %v2937 = vshrl.u32 %v2935, 16
      %v2938 = vcvt.s32.f32 %v2936
      %v2939 = vcvt.s32.f32 %v2937
      %2940 = vadd.xlane.f32.xlu0 %v2938
      %v2941 = vpop.xlane.xlu0 %2940
      %2942 = vadd.xlane.f32.xlu0 %v2939
      %v2943 = vpop.xlane.xlu0 %2942
      %v2944 = vcvt.f32.s32 %v2941
      %v2945 = vcvt.f32.s32 %v2943
      %v2946 = vshll.u32 %v2945, 16
      %v2947 = vadd.s32 %v2946, %v2944
      %v2948 = vsel %vm1309, %v1307, 0
      %v2949 = vand.u32 %v2948, 65535
      %v2950 = vshrl.u32 %v2948, 16
      %v2951 = vcvt.s32.f32 %v2949
      %v2952 = vcvt.s32.f32 %v2950
      %2953 = vadd.xlane.f32.xlu0 %v2951
      %v2954 = vpop.xlane.xlu0 %2953
      %2955 = vadd.xlane.f32.xlu0 %v2952
      %v2956 = vpop.xlane.xlu0 %2955
      %v2957 = vcvt.f32.s32 %v2954
      %v2958 = vcvt.f32.s32 %v2956
      %v2959 = vshll.u32 %v2958, 16
      %v2960 = vadd.s32 %v2959, %v2957
      %v2961 = vsel %vm1309, %v1308, 0
      %v2962 = vand.u32 %v2961, 65535
      %v2963 = vshrl.u32 %v2961, 16
      %v2964 = vcvt.s32.f32 %v2962
      %v2965 = vcvt.s32.f32 %v2963
      %2966 = vadd.xlane.f32.xlu0 %v2964
      %v2967 = vpop.xlane.xlu0 %2966
      %2968 = vadd.xlane.f32.xlu0 %v2965
      %v2969 = vpop.xlane.xlu0 %2968
      %v2970 = vcvt.f32.s32 %v2967
      %v2971 = vcvt.f32.s32 %v2969
      %v2972 = vshll.u32 %v2971, 16
      %v2973 = vadd.s32 %v2972, %v2970
      %v2974 = vlaneseq
      %v2975 = vand.u32 %v2974, 127
      %v2976 = vlaneseq
      %v2977 = vshrl.u32 %v2976, 7
      %v2978 = vsub.s32 %v2975, %v2977
      %v2979 = vrot.slane %v1322, %v2978
      %v2980 = vadd.s32 %v2975, 4294967288
      %v2981 = vlaneseq
      %v2982 = vshrl.u32 %v2981, 7
      %v2983 = vsub.s32 %v2980, %v2982
      %v2984 = vrot.slane %v1335, %v2983
      %vm2985 = vcmask 130112
      %v2986 = vsel %vm2985, %v2984, %v2979
      %v2987 = vadd.s32 %v2975, 4294967280
      %v2988 = vlaneseq
      %v2989 = vshrl.u32 %v2988, 7
      %v2990 = vsub.s32 %v2987, %v2989
      %v2991 = vrot.slane %v1348, %v2990
      %vm2992 = vcmask 195712
      %v2993 = vsel %vm2992, %v2991, %v2986
      %v2994 = vadd.s32 %v2975, 4294967272
      %v2995 = vlaneseq
      %v2996 = vshrl.u32 %v2995, 7
      %v2997 = vsub.s32 %v2994, %v2996
      %v2998 = vrot.slane %v1361, %v2997
      %vm2999 = vcmask 261312
      %v3000 = vsel %vm2999, %v2998, %v2993
      %v3001 = vlaneseq
      %v3002 = vshrl.u32 %v3001, 7
      %v3003 = vsub.s32 %v2975, %v3002
      %v3004 = vrot.slane %v1374, %v3003
      %v3005 = vlaneseq
      %v3006 = vshrl.u32 %v3005, 7
      %v3007 = vsub.s32 %v2980, %v3006
      %v3008 = vrot.slane %v1387, %v3007
      %v3009 = vsel %vm2985, %v3008, %v3004
      %v3010 = vlaneseq
      %v3011 = vshrl.u32 %v3010, 7
      %v3012 = vsub.s32 %v2987, %v3011
      %v3013 = vrot.slane %v1400, %v3012
      %v3014 = vsel %vm2992, %v3013, %v3009
      %v3015 = vlaneseq
      %v3016 = vshrl.u32 %v3015, 7
      %v3017 = vsub.s32 %v2994, %v3016
      %v3018 = vrot.slane %v1413, %v3017
      %v3019 = vsel %vm2999, %v3018, %v3014
      %v3020 = vlaneseq
      %v3021 = vshrl.u32 %v3020, 7
      %v3022 = vsub.s32 %v2975, %v3021
      %v3023 = vrot.slane %v1426, %v3022
      %v3024 = vlaneseq
      %v3025 = vshrl.u32 %v3024, 7
      %v3026 = vsub.s32 %v2980, %v3025
      %v3027 = vrot.slane %v1439, %v3026
      %v3028 = vsel %vm2985, %v3027, %v3023
      %v3029 = vlaneseq
      %v3030 = vshrl.u32 %v3029, 7
      %v3031 = vsub.s32 %v2987, %v3030
      %v3032 = vrot.slane %v1452, %v3031
      %v3033 = vsel %vm2992, %v3032, %v3028
      %v3034 = vlaneseq
      %v3035 = vshrl.u32 %v3034, 7
      %v3036 = vsub.s32 %v2994, %v3035
      %v3037 = vrot.slane %v1465, %v3036
      %v3038 = vsel %vm2999, %v3037, %v3033
      %v3039 = vlaneseq
      %v3040 = vshrl.u32 %v3039, 7
      %v3041 = vsub.s32 %v2975, %v3040
      %v3042 = vrot.slane %v1478, %v3041
      %v3043 = vlaneseq
      %v3044 = vshrl.u32 %v3043, 7
      %v3045 = vsub.s32 %v2980, %v3044
      %v3046 = vrot.slane %v1491, %v3045
      %v3047 = vsel %vm2985, %v3046, %v3042
      %v3048 = vlaneseq
      %v3049 = vshrl.u32 %v3048, 7
      %v3050 = vsub.s32 %v2987, %v3049
      %v3051 = vrot.slane %v1504, %v3050
      %v3052 = vsel %vm2992, %v3051, %v3047
      %v3053 = vlaneseq
      %v3054 = vshrl.u32 %v3053, 7
      %v3055 = vsub.s32 %v2994, %v3054
      %v3056 = vrot.slane %v1517, %v3055
      %v3057 = vsel %vm2999, %v3056, %v3052
      %v3058 = vlaneseq
      %v3059 = vshrl.u32 %v3058, 7
      %v3060 = vsub.s32 %v2975, %v3059
      %v3061 = vrot.slane %v1530, %v3060
      %v3062 = vlaneseq
      %v3063 = vshrl.u32 %v3062, 7
      %v3064 = vsub.s32 %v2980, %v3063
      %v3065 = vrot.slane %v1543, %v3064
      %v3066 = vsel %vm2985, %v3065, %v3061
      %v3067 = vlaneseq
      %v3068 = vshrl.u32 %v3067, 7
      %v3069 = vsub.s32 %v2987, %v3068
      %v3070 = vrot.slane %v1556, %v3069
      %v3071 = vsel %vm2992, %v3070, %v3066
      %v3072 = vlaneseq
      %v3073 = vshrl.u32 %v3072, 7
      %v3074 = vsub.s32 %v2994, %v3073
      %v3075 = vrot.slane %v1569, %v3074
      %v3076 = vsel %vm2999, %v3075, %v3071
      %v3077 = vlaneseq
      %v3078 = vshrl.u32 %v3077, 7
      %v3079 = vsub.s32 %v2975, %v3078
      %v3080 = vrot.slane %v1582, %v3079
      %v3081 = vlaneseq
      %v3082 = vshrl.u32 %v3081, 7
      %v3083 = vsub.s32 %v2980, %v3082
      %v3084 = vrot.slane %v1595, %v3083
      %v3085 = vsel %vm2985, %v3084, %v3080
      %v3086 = vlaneseq
      %v3087 = vshrl.u32 %v3086, 7
      %v3088 = vsub.s32 %v2987, %v3087
      %v3089 = vrot.slane %v1608, %v3088
      %v3090 = vsel %vm2992, %v3089, %v3085
      %v3091 = vlaneseq
      %v3092 = vshrl.u32 %v3091, 7
      %v3093 = vsub.s32 %v2994, %v3092
      %v3094 = vrot.slane %v1621, %v3093
      %v3095 = vsel %vm2999, %v3094, %v3090
      %v3096 = vlaneseq
      %v3097 = vshrl.u32 %v3096, 7
      %v3098 = vsub.s32 %v2975, %v3097
      %v3099 = vrot.slane %v1634, %v3098
      %v3100 = vlaneseq
      %v3101 = vshrl.u32 %v3100, 7
      %v3102 = vsub.s32 %v2980, %v3101
      %v3103 = vrot.slane %v1647, %v3102
      %v3104 = vsel %vm2985, %v3103, %v3099
      %v3105 = vlaneseq
      %v3106 = vshrl.u32 %v3105, 7
      %v3107 = vsub.s32 %v2987, %v3106
      %v3108 = vrot.slane %v1660, %v3107
      %v3109 = vsel %vm2992, %v3108, %v3104
      %v3110 = vlaneseq
      %v3111 = vshrl.u32 %v3110, 7
      %v3112 = vsub.s32 %v2994, %v3111
      %v3113 = vrot.slane %v1673, %v3112
      %v3114 = vsel %vm2999, %v3113, %v3109
      %v3115 = vlaneseq
      %v3116 = vshrl.u32 %v3115, 7
      %v3117 = vsub.s32 %v2975, %v3116
      %v3118 = vrot.slane %v1686, %v3117
      %v3119 = vlaneseq
      %v3120 = vshrl.u32 %v3119, 7
      %v3121 = vsub.s32 %v2980, %v3120
      %v3122 = vrot.slane %v1699, %v3121
      %v3123 = vsel %vm2985, %v3122, %v3118
      %v3124 = vlaneseq
      %v3125 = vshrl.u32 %v3124, 7
      %v3126 = vsub.s32 %v2987, %v3125
      %v3127 = vrot.slane %v1712, %v3126
      %v3128 = vsel %vm2992, %v3127, %v3123
      %v3129 = vlaneseq
      %v3130 = vshrl.u32 %v3129, 7
      %v3131 = vsub.s32 %v2994, %v3130
      %v3132 = vrot.slane %v1725, %v3131
      %v3133 = vsel %vm2999, %v3132, %v3128
      %v3134 = vlaneseq
      %v3135 = vshrl.u32 %v3134, 7
      %v3136 = vsub.s32 %v2975, %v3135
      %v3137 = vrot.slane %v1738, %v3136
      %v3138 = vlaneseq
      %v3139 = vshrl.u32 %v3138, 7
      %v3140 = vsub.s32 %v2980, %v3139
      %v3141 = vrot.slane %v1751, %v3140
      %v3142 = vsel %vm2985, %v3141, %v3137
      %v3143 = vlaneseq
      %v3144 = vshrl.u32 %v3143, 7
      %v3145 = vsub.s32 %v2987, %v3144
      %v3146 = vrot.slane %v1764, %v3145
      %v3147 = vsel %vm2992, %v3146, %v3142
      %v3148 = vlaneseq
      %v3149 = vshrl.u32 %v3148, 7
      %v3150 = vsub.s32 %v2994, %v3149
      %v3151 = vrot.slane %v1777, %v3150
      %v3152 = vsel %vm2999, %v3151, %v3147
      %v3153 = vlaneseq
      %v3154 = vshrl.u32 %v3153, 7
      %v3155 = vsub.s32 %v2975, %v3154
      %v3156 = vrot.slane %v1790, %v3155
      %v3157 = vlaneseq
      %v3158 = vshrl.u32 %v3157, 7
      %v3159 = vsub.s32 %v2980, %v3158
      %v3160 = vrot.slane %v1803, %v3159
      %v3161 = vsel %vm2985, %v3160, %v3156
      %v3162 = vlaneseq
      %v3163 = vshrl.u32 %v3162, 7
      %v3164 = vsub.s32 %v2987, %v3163
      %v3165 = vrot.slane %v1816, %v3164
      %v3166 = vsel %vm2992, %v3165, %v3161
      %v3167 = vlaneseq
      %v3168 = vshrl.u32 %v3167, 7
      %v3169 = vsub.s32 %v2994, %v3168
      %v3170 = vrot.slane %v1829, %v3169
      %v3171 = vsel %vm2999, %v3170, %v3166
      %v3172 = vlaneseq
      %v3173 = vshrl.u32 %v3172, 7
      %v3174 = vsub.s32 %v2975, %v3173
      %v3175 = vrot.slane %v1842, %v3174
      %v3176 = vlaneseq
      %v3177 = vshrl.u32 %v3176, 7
      %v3178 = vsub.s32 %v2980, %v3177
      %v3179 = vrot.slane %v1855, %v3178
      %v3180 = vsel %vm2985, %v3179, %v3175
      %v3181 = vlaneseq
      %v3182 = vshrl.u32 %v3181, 7
      %v3183 = vsub.s32 %v2987, %v3182
      %v3184 = vrot.slane %v1868, %v3183
      %v3185 = vsel %vm2992, %v3184, %v3180
      %v3186 = vlaneseq
      %v3187 = vshrl.u32 %v3186, 7
      %v3188 = vsub.s32 %v2994, %v3187
      %v3189 = vrot.slane %v1881, %v3188
      %v3190 = vsel %vm2999, %v3189, %v3185
      %v3191 = vlaneseq
      %v3192 = vshrl.u32 %v3191, 7
      %v3193 = vsub.s32 %v2975, %v3192
      %v3194 = vrot.slane %v1894, %v3193
      %v3195 = vlaneseq
      %v3196 = vshrl.u32 %v3195, 7
      %v3197 = vsub.s32 %v2980, %v3196
      %v3198 = vrot.slane %v1907, %v3197
      %v3199 = vsel %vm2985, %v3198, %v3194
      %v3200 = vlaneseq
      %v3201 = vshrl.u32 %v3200, 7
      %v3202 = vsub.s32 %v2987, %v3201
      %v3203 = vrot.slane %v1920, %v3202
      %v3204 = vsel %vm2992, %v3203, %v3199
      %v3205 = vlaneseq
      %v3206 = vshrl.u32 %v3205, 7
      %v3207 = vsub.s32 %v2994, %v3206
      %v3208 = vrot.slane %v1933, %v3207
      %v3209 = vsel %vm2999, %v3208, %v3204
      %v3210 = vlaneseq
      %v3211 = vshrl.u32 %v3210, 7
      %v3212 = vsub.s32 %v2975, %v3211
      %v3213 = vrot.slane %v1946, %v3212
      %v3214 = vlaneseq
      %v3215 = vshrl.u32 %v3214, 7
      %v3216 = vsub.s32 %v2980, %v3215
      %v3217 = vrot.slane %v1959, %v3216
      %v3218 = vsel %vm2985, %v3217, %v3213
      %v3219 = vlaneseq
      %v3220 = vshrl.u32 %v3219, 7
      %v3221 = vsub.s32 %v2987, %v3220
      %v3222 = vrot.slane %v1972, %v3221
      %v3223 = vsel %vm2992, %v3222, %v3218
      %v3224 = vlaneseq
      %v3225 = vshrl.u32 %v3224, 7
      %v3226 = vsub.s32 %v2994, %v3225
      %v3227 = vrot.slane %v1985, %v3226
      %v3228 = vsel %vm2999, %v3227, %v3223
      %v3229 = vlaneseq
      %v3230 = vshrl.u32 %v3229, 7
      %v3231 = vsub.s32 %v2975, %v3230
      %v3232 = vrot.slane %v1998, %v3231
      %v3233 = vlaneseq
      %v3234 = vshrl.u32 %v3233, 7
      %v3235 = vsub.s32 %v2980, %v3234
      %v3236 = vrot.slane %v2011, %v3235
      %v3237 = vsel %vm2985, %v3236, %v3232
      %v3238 = vlaneseq
      %v3239 = vshrl.u32 %v3238, 7
      %v3240 = vsub.s32 %v2987, %v3239
      %v3241 = vrot.slane %v2024, %v3240
      %v3242 = vsel %vm2992, %v3241, %v3237
      %v3243 = vlaneseq
      %v3244 = vshrl.u32 %v3243, 7
      %v3245 = vsub.s32 %v2994, %v3244
      %v3246 = vrot.slane %v2037, %v3245
      %v3247 = vsel %vm2999, %v3246, %v3242
      %v3248 = vlaneseq
      %v3249 = vshrl.u32 %v3248, 7
      %v3250 = vsub.s32 %v2975, %v3249
      %v3251 = vrot.slane %v2050, %v3250
      %v3252 = vlaneseq
      %v3253 = vshrl.u32 %v3252, 7
      %v3254 = vsub.s32 %v2980, %v3253
      %v3255 = vrot.slane %v2063, %v3254
      %v3256 = vsel %vm2985, %v3255, %v3251
      %v3257 = vlaneseq
      %v3258 = vshrl.u32 %v3257, 7
      %v3259 = vsub.s32 %v2987, %v3258
      %v3260 = vrot.slane %v2076, %v3259
      %v3261 = vsel %vm2992, %v3260, %v3256
      %v3262 = vlaneseq
      %v3263 = vshrl.u32 %v3262, 7
      %v3264 = vsub.s32 %v2994, %v3263
      %v3265 = vrot.slane %v2089, %v3264
      %v3266 = vsel %vm2999, %v3265, %v3261
      %v3267 = vlaneseq
      %v3268 = vshrl.u32 %v3267, 7
      %v3269 = vsub.s32 %v2975, %v3268
      %v3270 = vrot.slane %v2102, %v3269
      %v3271 = vlaneseq
      %v3272 = vshrl.u32 %v3271, 7
      %v3273 = vsub.s32 %v2980, %v3272
      %v3274 = vrot.slane %v2115, %v3273
      %v3275 = vsel %vm2985, %v3274, %v3270
      %v3276 = vlaneseq
      %v3277 = vshrl.u32 %v3276, 7
      %v3278 = vsub.s32 %v2987, %v3277
      %v3279 = vrot.slane %v2128, %v3278
      %v3280 = vsel %vm2992, %v3279, %v3275
      %v3281 = vlaneseq
      %v3282 = vshrl.u32 %v3281, 7
      %v3283 = vsub.s32 %v2994, %v3282
      %v3284 = vrot.slane %v2141, %v3283
      %v3285 = vsel %vm2999, %v3284, %v3280
      %v3286 = vlaneseq
      %v3287 = vshrl.u32 %v3286, 7
      %v3288 = vsub.s32 %v2975, %v3287
      %v3289 = vrot.slane %v2154, %v3288
      %v3290 = vlaneseq
      %v3291 = vshrl.u32 %v3290, 7
      %v3292 = vsub.s32 %v2980, %v3291
      %v3293 = vrot.slane %v2167, %v3292
      %v3294 = vsel %vm2985, %v3293, %v3289
      %v3295 = vlaneseq
      %v3296 = vshrl.u32 %v3295, 7
      %v3297 = vsub.s32 %v2987, %v3296
      %v3298 = vrot.slane %v2180, %v3297
      %v3299 = vsel %vm2992, %v3298, %v3294
      %v3300 = vlaneseq
      %v3301 = vshrl.u32 %v3300, 7
      %v3302 = vsub.s32 %v2994, %v3301
      %v3303 = vrot.slane %v2193, %v3302
      %v3304 = vsel %vm2999, %v3303, %v3299
      %v3305 = vlaneseq
      %v3306 = vshrl.u32 %v3305, 7
      %v3307 = vsub.s32 %v2975, %v3306
      %v3308 = vrot.slane %v2206, %v3307
      %v3309 = vlaneseq
      %v3310 = vshrl.u32 %v3309, 7
      %v3311 = vsub.s32 %v2980, %v3310
      %v3312 = vrot.slane %v2219, %v3311
      %v3313 = vsel %vm2985, %v3312, %v3308
      %v3314 = vlaneseq
      %v3315 = vshrl.u32 %v3314, 7
      %v3316 = vsub.s32 %v2987, %v3315
      %v3317 = vrot.slane %v2232, %v3316
      %v3318 = vsel %vm2992, %v3317, %v3313
      %v3319 = vlaneseq
      %v3320 = vshrl.u32 %v3319, 7
      %v3321 = vsub.s32 %v2994, %v3320
      %v3322 = vrot.slane %v2245, %v3321
      %v3323 = vsel %vm2999, %v3322, %v3318
      %v3324 = vlaneseq
      %v3325 = vshrl.u32 %v3324, 7
      %v3326 = vsub.s32 %v2975, %v3325
      %v3327 = vrot.slane %v2258, %v3326
      %v3328 = vlaneseq
      %v3329 = vshrl.u32 %v3328, 7
      %v3330 = vsub.s32 %v2980, %v3329
      %v3331 = vrot.slane %v2271, %v3330
      %v3332 = vsel %vm2985, %v3331, %v3327
      %v3333 = vlaneseq
      %v3334 = vshrl.u32 %v3333, 7
      %v3335 = vsub.s32 %v2987, %v3334
      %v3336 = vrot.slane %v2284, %v3335
      %v3337 = vsel %vm2992, %v3336, %v3332
      %v3338 = vlaneseq
      %v3339 = vshrl.u32 %v3338, 7
      %v3340 = vsub.s32 %v2994, %v3339
      %v3341 = vrot.slane %v2297, %v3340
      %v3342 = vsel %vm2999, %v3341, %v3337
      %v3343 = vlaneseq
      %v3344 = vshrl.u32 %v3343, 7
      %v3345 = vsub.s32 %v2975, %v3344
      %v3346 = vrot.slane %v2310, %v3345
      %v3347 = vlaneseq
      %v3348 = vshrl.u32 %v3347, 7
      %v3349 = vsub.s32 %v2980, %v3348
      %v3350 = vrot.slane %v2323, %v3349
      %v3351 = vsel %vm2985, %v3350, %v3346
      %v3352 = vlaneseq
      %v3353 = vshrl.u32 %v3352, 7
      %v3354 = vsub.s32 %v2987, %v3353
      %v3355 = vrot.slane %v2336, %v3354
      %v3356 = vsel %vm2992, %v3355, %v3351
      %v3357 = vlaneseq
      %v3358 = vshrl.u32 %v3357, 7
      %v3359 = vsub.s32 %v2994, %v3358
      %v3360 = vrot.slane %v2349, %v3359
      %v3361 = vsel %vm2999, %v3360, %v3356
      %v3362 = vlaneseq
      %v3363 = vshrl.u32 %v3362, 7
      %v3364 = vsub.s32 %v2975, %v3363
      %v3365 = vrot.slane %v2362, %v3364
      %v3366 = vlaneseq
      %v3367 = vshrl.u32 %v3366, 7
      %v3368 = vsub.s32 %v2980, %v3367
      %v3369 = vrot.slane %v2375, %v3368
      %v3370 = vsel %vm2985, %v3369, %v3365
      %v3371 = vlaneseq
      %v3372 = vshrl.u32 %v3371, 7
      %v3373 = vsub.s32 %v2987, %v3372
      %v3374 = vrot.slane %v2388, %v3373
      %v3375 = vsel %vm2992, %v3374, %v3370
      %v3376 = vlaneseq
      %v3377 = vshrl.u32 %v3376, 7
      %v3378 = vsub.s32 %v2994, %v3377
      %v3379 = vrot.slane %v2401, %v3378
      %v3380 = vsel %vm2999, %v3379, %v3375
      %v3381 = vlaneseq
      %v3382 = vshrl.u32 %v3381, 7
      %v3383 = vsub.s32 %v2975, %v3382
      %v3384 = vrot.slane %v2414, %v3383
      %v3385 = vlaneseq
      %v3386 = vshrl.u32 %v3385, 7
      %v3387 = vsub.s32 %v2980, %v3386
      %v3388 = vrot.slane %v2427, %v3387
      %v3389 = vsel %vm2985, %v3388, %v3384
      %v3390 = vlaneseq
      %v3391 = vshrl.u32 %v3390, 7
      %v3392 = vsub.s32 %v2987, %v3391
      %v3393 = vrot.slane %v2440, %v3392
      %v3394 = vsel %vm2992, %v3393, %v3389
      %v3395 = vlaneseq
      %v3396 = vshrl.u32 %v3395, 7
      %v3397 = vsub.s32 %v2994, %v3396
      %v3398 = vrot.slane %v2453, %v3397
      %v3399 = vsel %vm2999, %v3398, %v3394
      %v3400 = vlaneseq
      %v3401 = vshrl.u32 %v3400, 7
      %v3402 = vsub.s32 %v2975, %v3401
      %v3403 = vrot.slane %v2466, %v3402
      %v3404 = vlaneseq
      %v3405 = vshrl.u32 %v3404, 7
      %v3406 = vsub.s32 %v2980, %v3405
      %v3407 = vrot.slane %v2479, %v3406
      %v3408 = vsel %vm2985, %v3407, %v3403
      %v3409 = vlaneseq
      %v3410 = vshrl.u32 %v3409, 7
      %v3411 = vsub.s32 %v2987, %v3410
      %v3412 = vrot.slane %v2492, %v3411
      %v3413 = vsel %vm2992, %v3412, %v3408
      %v3414 = vlaneseq
      %v3415 = vshrl.u32 %v3414, 7
      %v3416 = vsub.s32 %v2994, %v3415
      %v3417 = vrot.slane %v2505, %v3416
      %v3418 = vsel %vm2999, %v3417, %v3413
      %v3419 = vlaneseq
      %v3420 = vshrl.u32 %v3419, 7
      %v3421 = vsub.s32 %v2975, %v3420
      %v3422 = vrot.slane %v2518, %v3421
      %v3423 = vlaneseq
      %v3424 = vshrl.u32 %v3423, 7
      %v3425 = vsub.s32 %v2980, %v3424
      %v3426 = vrot.slane %v2531, %v3425
      %v3427 = vsel %vm2985, %v3426, %v3422
      %v3428 = vlaneseq
      %v3429 = vshrl.u32 %v3428, 7
      %v3430 = vsub.s32 %v2987, %v3429
      %v3431 = vrot.slane %v2544, %v3430
      %v3432 = vsel %vm2992, %v3431, %v3427
      %v3433 = vlaneseq
      %v3434 = vshrl.u32 %v3433, 7
      %v3435 = vsub.s32 %v2994, %v3434
      %v3436 = vrot.slane %v2557, %v3435
      %v3437 = vsel %vm2999, %v3436, %v3432
      %v3438 = vlaneseq
      %v3439 = vshrl.u32 %v3438, 7
      %v3440 = vsub.s32 %v2975, %v3439
      %v3441 = vrot.slane %v2570, %v3440
      %v3442 = vlaneseq
      %v3443 = vshrl.u32 %v3442, 7
      %v3444 = vsub.s32 %v2980, %v3443
      %v3445 = vrot.slane %v2583, %v3444
      %v3446 = vsel %vm2985, %v3445, %v3441
      %v3447 = vlaneseq
      %v3448 = vshrl.u32 %v3447, 7
      %v3449 = vsub.s32 %v2987, %v3448
      %v3450 = vrot.slane %v2596, %v3449
      %v3451 = vsel %vm2992, %v3450, %v3446
      %v3452 = vlaneseq
      %v3453 = vshrl.u32 %v3452, 7
      %v3454 = vsub.s32 %v2994, %v3453
      %v3455 = vrot.slane %v2609, %v3454
      %v3456 = vsel %vm2999, %v3455, %v3451
      %v3457 = vlaneseq
      %v3458 = vshrl.u32 %v3457, 7
      %v3459 = vsub.s32 %v2975, %v3458
      %v3460 = vrot.slane %v2622, %v3459
      %v3461 = vlaneseq
      %v3462 = vshrl.u32 %v3461, 7
      %v3463 = vsub.s32 %v2980, %v3462
      %v3464 = vrot.slane %v2635, %v3463
      %v3465 = vsel %vm2985, %v3464, %v3460
      %v3466 = vlaneseq
      %v3467 = vshrl.u32 %v3466, 7
      %v3468 = vsub.s32 %v2987, %v3467
      %v3469 = vrot.slane %v2648, %v3468
      %v3470 = vsel %vm2992, %v3469, %v3465
      %v3471 = vlaneseq
      %v3472 = vshrl.u32 %v3471, 7
      %v3473 = vsub.s32 %v2994, %v3472
      %v3474 = vrot.slane %v2661, %v3473
      %v3475 = vsel %vm2999, %v3474, %v3470
      %v3476 = vlaneseq
      %v3477 = vshrl.u32 %v3476, 7
      %v3478 = vsub.s32 %v2975, %v3477
      %v3479 = vrot.slane %v2674, %v3478
      %v3480 = vlaneseq
      %v3481 = vshrl.u32 %v3480, 7
      %v3482 = vsub.s32 %v2980, %v3481
      %v3483 = vrot.slane %v2687, %v3482
      %v3484 = vsel %vm2985, %v3483, %v3479
      %v3485 = vlaneseq
      %v3486 = vshrl.u32 %v3485, 7
      %v3487 = vsub.s32 %v2987, %v3486
      %v3488 = vrot.slane %v2700, %v3487
      %v3489 = vsel %vm2992, %v3488, %v3484
      %v3490 = vlaneseq
      %v3491 = vshrl.u32 %v3490, 7
      %v3492 = vsub.s32 %v2994, %v3491
      %v3493 = vrot.slane %v2713, %v3492
      %v3494 = vsel %vm2999, %v3493, %v3489
      %v3495 = vlaneseq
      %v3496 = vshrl.u32 %v3495, 7
      %v3497 = vsub.s32 %v2975, %v3496
      %v3498 = vrot.slane %v2726, %v3497
      %v3499 = vlaneseq
      %v3500 = vshrl.u32 %v3499, 7
      %v3501 = vsub.s32 %v2980, %v3500
      %v3502 = vrot.slane %v2739, %v3501
      %v3503 = vsel %vm2985, %v3502, %v3498
      %v3504 = vlaneseq
      %v3505 = vshrl.u32 %v3504, 7
      %v3506 = vsub.s32 %v2987, %v3505
      %v3507 = vrot.slane %v2752, %v3506
      %v3508 = vsel %vm2992, %v3507, %v3503
      %v3509 = vlaneseq
      %v3510 = vshrl.u32 %v3509, 7
      %v3511 = vsub.s32 %v2994, %v3510
      %v3512 = vrot.slane %v2765, %v3511
      %v3513 = vsel %vm2999, %v3512, %v3508
      %v3514 = vlaneseq
      %v3515 = vshrl.u32 %v3514, 7
      %v3516 = vsub.s32 %v2975, %v3515
      %v3517 = vrot.slane %v2778, %v3516
      %v3518 = vlaneseq
      %v3519 = vshrl.u32 %v3518, 7
      %v3520 = vsub.s32 %v2980, %v3519
      %v3521 = vrot.slane %v2791, %v3520
      %v3522 = vsel %vm2985, %v3521, %v3517
      %v3523 = vlaneseq
      %v3524 = vshrl.u32 %v3523, 7
      %v3525 = vsub.s32 %v2987, %v3524
      %v3526 = vrot.slane %v2804, %v3525
      %v3527 = vsel %vm2992, %v3526, %v3522
      %v3528 = vlaneseq
      %v3529 = vshrl.u32 %v3528, 7
      %v3530 = vsub.s32 %v2994, %v3529
      %v3531 = vrot.slane %v2817, %v3530
      %v3532 = vsel %vm2999, %v3531, %v3527
      %v3533 = vlaneseq
      %v3534 = vshrl.u32 %v3533, 7
      %v3535 = vsub.s32 %v2975, %v3534
      %v3536 = vrot.slane %v2830, %v3535
      %v3537 = vlaneseq
      %v3538 = vshrl.u32 %v3537, 7
      %v3539 = vsub.s32 %v2980, %v3538
      %v3540 = vrot.slane %v2843, %v3539
      %v3541 = vsel %vm2985, %v3540, %v3536
      %v3542 = vlaneseq
      %v3543 = vshrl.u32 %v3542, 7
      %v3544 = vsub.s32 %v2987, %v3543
      %v3545 = vrot.slane %v2856, %v3544
      %v3546 = vsel %vm2992, %v3545, %v3541
      %v3547 = vlaneseq
      %v3548 = vshrl.u32 %v3547, 7
      %v3549 = vsub.s32 %v2994, %v3548
      %v3550 = vrot.slane %v2869, %v3549
      %v3551 = vsel %vm2999, %v3550, %v3546
      %v3552 = vlaneseq
      %v3553 = vshrl.u32 %v3552, 7
      %v3554 = vsub.s32 %v2975, %v3553
      %v3555 = vrot.slane %v2882, %v3554
      %v3556 = vlaneseq
      %v3557 = vshrl.u32 %v3556, 7
      %v3558 = vsub.s32 %v2980, %v3557
      %v3559 = vrot.slane %v2895, %v3558
      %v3560 = vsel %vm2985, %v3559, %v3555
      %v3561 = vlaneseq
      %v3562 = vshrl.u32 %v3561, 7
      %v3563 = vsub.s32 %v2987, %v3562
      %v3564 = vrot.slane %v2908, %v3563
      %v3565 = vsel %vm2992, %v3564, %v3560
      %v3566 = vlaneseq
      %v3567 = vshrl.u32 %v3566, 7
      %v3568 = vsub.s32 %v2994, %v3567
      %v3569 = vrot.slane %v2921, %v3568
      %v3570 = vsel %vm2999, %v3569, %v3565
      %v3571 = vlaneseq
      %v3572 = vshrl.u32 %v3571, 7
      %v3573 = vsub.s32 %v2975, %v3572
      %v3574 = vrot.slane %v2934, %v3573
      %v3575 = vlaneseq
      %v3576 = vshrl.u32 %v3575, 7
      %v3577 = vsub.s32 %v2980, %v3576
      %v3578 = vrot.slane %v2947, %v3577
      %v3579 = vsel %vm2985, %v3578, %v3574
      %v3580 = vlaneseq
      %v3581 = vshrl.u32 %v3580, 7
      %v3582 = vsub.s32 %v2987, %v3581
      %v3583 = vrot.slane %v2960, %v3582
      %v3584 = vsel %vm2992, %v3583, %v3579
      %v3585 = vlaneseq
      %v3586 = vshrl.u32 %v3585, 7
      %v3587 = vsub.s32 %v2994, %v3586
      %v3588 = vrot.slane %v2973, %v3587
      %v3589 = vsel %vm2999, %v3588, %v3584
      %vm3590 = vcmask 1041409
      %v3591 = vsel %vm3590, %v3019, %v3000
      %vm3592 = vcmask 1042434
      %v3593 = vsel %vm3592, %v3038, %v3591
      %vm3594 = vcmask 1043459
      %v3595 = vsel %vm3594, %v3057, %v3593
      %vm3596 = vcmask 1044484
      %v3597 = vsel %vm3596, %v3076, %v3595
      %vm3598 = vcmask 1045509
      %v3599 = vsel %vm3598, %v3095, %v3597
      %vm3600 = vcmask 1046534
      %v3601 = vsel %vm3600, %v3114, %v3599
      %vm3602 = vcmask 1047559
      %v3603 = vsel %vm3602, %v3133, %v3601
      %v3604 = vsel %vm3590, %v3171, %v3152
      %v3605 = vsel %vm3592, %v3190, %v3604
      %v3606 = vsel %vm3594, %v3209, %v3605
      %v3607 = vsel %vm3596, %v3228, %v3606
      %v3608 = vsel %vm3598, %v3247, %v3607
      %v3609 = vsel %vm3600, %v3266, %v3608
      %v3610 = vsel %vm3602, %v3285, %v3609
      %v3611 = vsel %vm3590, %v3323, %v3304
      %v3612 = vsel %vm3592, %v3342, %v3611
      %v3613 = vsel %vm3594, %v3361, %v3612
      %v3614 = vsel %vm3596, %v3380, %v3613
      %v3615 = vsel %vm3598, %v3399, %v3614
      %v3616 = vsel %vm3600, %v3418, %v3615
      %v3617 = vsel %vm3602, %v3437, %v3616
      %v3618 = vsel %vm3590, %v3475, %v3456
      %v3619 = vsel %vm3592, %v3494, %v3618
      %v3620 = vsel %vm3594, %v3513, %v3619
      %v3621 = vsel %vm3596, %v3532, %v3620
      %v3622 = vsel %vm3598, %v3551, %v3621
      %v3623 = vsel %vm3600, %v3570, %v3622
      %v3624 = vsel %vm3602, %v3589, %v3623
      %3625 = vst.msk [vmem:[%s116] sm:$0xff] %vm1309, %v3603
      %3626 = vst.msk [vmem:[%s116 + $0x8] sm:$0xff] %vm1309, %v3610
      %3627 = vst.msk [vmem:[%s116 + $0x10] sm:$0xff] %vm1309, %v3617
      %3628 = vst.msk [vmem:[%s116 + $0x18] sm:$0xff] %vm1309, %v3624
      %p3629 = scmp.lt.s32.totalorder %s12, 3
      %s3630 = scalar_select %p3629, %s12, 3
      %s3631 = smul.addr %s3630, 4
      %s3632 = smul.addr %s3631, 8
      %s3633 = scalar_lea.vmem %s1, %s3632
      // Predicated region
      $region25: #{lsh_attention_forward.2} parent=23 // pred_check
        %p3634 = pneg %p56
      $region26: #{lsh_attention_forward.2} parent=23 // pred_check_branch
        %3636 = sbr.rel (%p3634) target = $region28
      $region27: #{lsh_attention_forward.2} parent=23 // pred_region
        _
      $region28: #{lsh_attention_forward.2} parent=23 // pred_fallthru
        _
    $region24: #{lsh_attention_forward.2} parent=5 // pred_fallthru
      _
    %p3637 = scmp.le.s32.totalorder 2, %s7
    // Predicated region
    $region29: #{lsh_attention_forward.2} parent=5 // pred_check
      %p3638 = pneg %p3637
    $region30: #{lsh_attention_forward.2} parent=5 // pred_check_branch
      %3640 = sbr.rel (%p3638) target = $region32
    $region31: #{lsh_attention_forward.2} parent=5 // pred_region
      %s3641 = ssub.s32 %s7, 2
      // Predicated region
      $region33: #{lsh_attention_forward.2} parent=31 // pred_check
        %p3642 = pneg %p62
      $region34: #{lsh_attention_forward.2} parent=31 // pred_check_branch
        %3644 = sbr.rel (%p3642) target = $region36
      $region35: #{lsh_attention_forward.2} parent=31 // pred_region
        %p3645 = scmp.lt.s32.totalorder %s13, 3
        %s3646 = scalar_select %p3645, %s13, 3
        %s3647 = smul.addr %s3646, 4
        %s3648 = smul.addr %s3647, 8
        %s3649 = scalar_lea.vmem %s1, %s3648
      $region36: #{lsh_attention_forward.2} parent=31 // pred_fallthru
        _
    $region32: #{lsh_attention_forward.2} parent=5 // pred_fallthru
      _
  $region6: #{lsh_attention_forward.2} parent=0 // loop_footer
    %s11 = sadd.s32 1, %s7
  $region7: #{lsh_attention_forward.2} parent=0 // loop_footer_branch
    %6 = sbr.rel target = $region3
  $region8: #{lsh_attention_forward.2} parent=0 // loop_exit
    _

// kernel: lsh_attention_forward.3
$region0: #{lsh_attention_forward.3}
  #allocation0 [shape = 'u32[]', space=smem, size = 0x4, offset = 0x4, fixed_abs, tag = 'smem constant byte address 0x4 - core index']
  #allocation1 [shape = 'u32[144,128]{1,0:T(1,128)}', space=vmem, size = 0x12000, scoped, tag = 'internal scratch']
  %s0 = inlined_call_operand.vmem [shape: bf16[4,8,8,16], index: 0, kind: input, shape index: {}]
  %s1 = inlined_call_operand.vmem [shape: bf16[4,8,16,16], index: 1, kind: input, shape index: {}]
  %s2 = inlined_call_operand.vmem [shape: bf16[4,8,16,16], index: 2, kind: input, shape index: {}]
  %s3 = inlined_call_operand.vmem [shape: s32[4,8,8], index: 3, kind: input, shape index: {}]
  %s4 = inlined_call_operand.vmem [shape: s32[4,8,16], index: 4, kind: input, shape index: {}]
  %s5 = inlined_call_operand.vmem [shape: s32[4,8,8], index: 5, kind: input, shape index: {}]
  %s6 = inlined_call_operand.vmem [shape: bf16[4,8,8,16], index: 6, kind: input, shape index: {}]
  %s7 = inlined_call_operand.hbm [shape: f32[4,8,8,16], index: 7, kind: output, shape index: {0}]
  %s8 = inlined_call_operand.vmem [shape: f32[4,8,8], index: 8, kind: output, shape index: {1}]
  %9 = xla_tuple %s7, %s8
  %s10 = sld [smem:[#allocation0]]
  $region69: #{lsh_attention_forward.3} parent=0
    _
  %s12 = ssub.s32 1, %s10
  %s13 = scalar_select 0, %s12, %s10
  $region1: #{lsh_attention_forward.3} parent=0
    #allocation2 [shape = 'u8[65536]{0}', space=vmem, size = 0x10000, scoped, tag = 'output window, operand 0']
    #allocation3 [shape = 's32[2]{0}', space=sflag, size = 0x8, scoped, tag = 'scoped memory for lsh_attention_forward.3']
    %14 = vsyncpa [#allocation3], 0
    %s15 = scalar_lea.sflag [#allocation3], 1
    %16 = vsyncpa %s15, 0
    loop: start=0, step=1, limit=6
    $region2: #{lsh_attention_forward.3} parent=1 // loop_pre_header
      _
    $region3: #{lsh_attention_forward.3} parent=1 // loop_header
      %s18 = sphi 0, %s22
      %p19 = scmp.ge.s32.totalorder %s18, 6
      %s25 = sphi 0, %s37
      %s26 = sphi 0, %s33
      %s27 = sphi 0, %s25
      %s28 = sphi 0, %s26
      %s29 = sphi 0, %s27
      %s30 = sphi 0, %s28
      %s42 = sphi 0, %s44
      %s45 = sphi 0, %s42
      %s46 = sphi 0, %s45
      %s62 = sphi 0, %s46
      %s70 = sphi 0, %s72
      %s73 = sphi 0, %s70
      %s74 = sphi 0, %s73
      %s90 = sphi 0, %s74
      %s98 = sphi 0, %s100
      %s101 = sphi 0, %s98
      %s102 = sphi 0, %s101
      %s118 = sphi 0, %s102
      %s126 = sphi 0, %s128
      %s129 = sphi 0, %s126
      %s130 = sphi 0, %s129
      %s146 = sphi 0, %s130
      %s154 = sphi 0, %s156
      %s157 = sphi 0, %s154
      %s158 = sphi 0, %s157
      %s174 = sphi 0, %s158
      %s182 = sphi 0, %s184
      %s185 = sphi 0, %s182
      %s186 = sphi 0, %s185
      %s202 = sphi 0, %s186
      %s210 = sphi 0, %s212
      %s213 = sphi 0, %s210
      %s214 = sphi 0, %s213
      %s230 = sphi 0, %s214
      %s238 = sphi 0, %s240
      %s241 = sphi 0, %s238
      %s242 = sphi 0, %s241
      %s258 = sphi 0, %s242
      %s266 = sphi 0, %s268
      %s269 = sphi 0, %s266
      %s270 = sphi 0, %s269
      %s286 = sphi 0, %s270
    $region4: #{lsh_attention_forward.3} parent=1 // loop_header_branch
      %21 = sbr.rel (%p19) target = $region8
    $region5: #{lsh_attention_forward.3} parent=1 // loop_body
      %s23 = ssub.s32 %s18, 1
      %s24 = ssub.s32 %s18, 2
      %s31 = sadd.s32 1, %s26
      %p32 = scmp.ge.s32.totalorder %s31, 1
      %s33 = scalar_select %p32, 0, %s31
      %s34 = sadd.s32 1, %s25
      %s35 = scalar_select %p32, %s34, %s25
      %p36 = scmp.ge.s32.totalorder %s35, 4
      %s37 = scalar_select %p36, 0, %s35
      %s38 = ssub.s32 %s25, %s37
      %s39 = ssub.s32 %s26, %s33
      %s40 = sor.u32 %s38, %s39
      %p41 = scmp.eq.s32.totalorder %s40, 0
      %s43 = sadd.s32 %s42, 1
      %s44 = scalar_select %p41, %s42, %s43
      %p47 = pneg %p41
      %p48 = scmp.eq.s32.totalorder %s18, 3
      %p49 = por %p47, %p48
      %p50 = scmp.ne.s32.totalorder %s42, %s45
      %p51 = scmp.eq.s32.totalorder %s18, 0
      %p52 = por %p50, %p51
      %p53 = scmp.ne.s32.totalorder %s42, %s45
      %p54 = scmp.eq.s32.totalorder %s23, 3
      %p55 = por %p53, %p54
      %p56 = scmp.ne.s32.totalorder %s45, %s46
      %p57 = scmp.eq.s32.totalorder %s23, 0
      %p58 = por %p56, %p57
      %p59 = scmp.ne.s32.totalorder %s45, %s46
      %p60 = scmp.eq.s32.totalorder %s24, 3
      %p61 = por %p59, %p60
      %p63 = scmp.ne.s32.totalorder %s46, %s62
      %p64 = scmp.eq.s32.totalorder %s24, 0
      %p65 = por %p63, %p64
      %s66 = ssub.s32 %s25, %s37
      %s67 = ssub.s32 %s26, %s33
      %s68 = sor.u32 %s66, %s67
      %p69 = scmp.eq.s32.totalorder %s68, 0
      %s71 = sadd.s32 %s70, 1
      %s72 = scalar_select %p69, %s70, %s71
      %p75 = pneg %p69
      %p76 = scmp.eq.s32.totalorder %s18, 3
      %p77 = por %p75, %p76
      %p78 = scmp.ne.s32.totalorder %s70, %s73
      %p79 = scmp.eq.s32.totalorder %s18, 0
      %p80 = por %p78, %p79
      %p81 = scmp.ne.s32.totalorder %s70, %s73
      %p82 = scmp.eq.s32.totalorder %s23, 3
      %p83 = por %p81, %p82
      %p84 = scmp.ne.s32.totalorder %s73, %s74
      %p85 = scmp.eq.s32.totalorder %s23, 0
      %p86 = por %p84, %p85
      %p87 = scmp.ne.s32.totalorder %s73, %s74
      %p88 = scmp.eq.s32.totalorder %s24, 3
      %p89 = por %p87, %p88
      %p91 = scmp.ne.s32.totalorder %s74, %s90
      %p92 = scmp.eq.s32.totalorder %s24, 0
      %p93 = por %p91, %p92
      %s94 = ssub.s32 %s25, %s37
      %s95 = ssub.s32 %s26, %s33
      %s96 = sor.u32 %s94, %s95
      %p97 = scmp.eq.s32.totalorder %s96, 0
      %s99 = sadd.s32 %s98, 1
      %s100 = scalar_select %p97, %s98, %s99
      %p103 = pneg %p97
      %p104 = scmp.eq.s32.totalorder %s18, 3
      %p105 = por %p103, %p104
      %p106 = scmp.ne.s32.totalorder %s98, %s101
      %p107 = scmp.eq.s32.totalorder %s18, 0
      %p108 = por %p106, %p107
      %p109 = scmp.ne.s32.totalorder %s98, %s101
      %p110 = scmp.eq.s32.totalorder %s23, 3
      %p111 = por %p109, %p110
      %p112 = scmp.ne.s32.totalorder %s101, %s102
      %p113 = scmp.eq.s32.totalorder %s23, 0
      %p114 = por %p112, %p113
      %p115 = scmp.ne.s32.totalorder %s101, %s102
      %p116 = scmp.eq.s32.totalorder %s24, 3
      %p117 = por %p115, %p116
      %p119 = scmp.ne.s32.totalorder %s102, %s118
      %p120 = scmp.eq.s32.totalorder %s24, 0
      %p121 = por %p119, %p120
      %s122 = ssub.s32 %s25, %s37
      %s123 = ssub.s32 %s26, %s33
      %s124 = sor.u32 %s122, %s123
      %p125 = scmp.eq.s32.totalorder %s124, 0
      %s127 = sadd.s32 %s126, 1
      %s128 = scalar_select %p125, %s126, %s127
      %p131 = pneg %p125
      %p132 = scmp.eq.s32.totalorder %s18, 3
      %p133 = por %p131, %p132
      %p134 = scmp.ne.s32.totalorder %s126, %s129
      %p135 = scmp.eq.s32.totalorder %s18, 0
      %p136 = por %p134, %p135
      %p137 = scmp.ne.s32.totalorder %s126, %s129
      %p138 = scmp.eq.s32.totalorder %s23, 3
      %p139 = por %p137, %p138
      %p140 = scmp.ne.s32.totalorder %s129, %s130
      %p141 = scmp.eq.s32.totalorder %s23, 0
      %p142 = por %p140, %p141
      %p143 = scmp.ne.s32.totalorder %s129, %s130
      %p144 = scmp.eq.s32.totalorder %s24, 3
      %p145 = por %p143, %p144
      %p147 = scmp.ne.s32.totalorder %s130, %s146
      %p148 = scmp.eq.s32.totalorder %s24, 0
      %p149 = por %p147, %p148
      %s150 = ssub.s32 %s25, %s37
      %s151 = ssub.s32 %s26, %s33
      %s152 = sor.u32 %s150, %s151
      %p153 = scmp.eq.s32.totalorder %s152, 0
      %s155 = sadd.s32 %s154, 1
      %s156 = scalar_select %p153, %s154, %s155
      %p159 = pneg %p153
      %p160 = scmp.eq.s32.totalorder %s18, 3
      %p161 = por %p159, %p160
      %p162 = scmp.ne.s32.totalorder %s154, %s157
      %p163 = scmp.eq.s32.totalorder %s18, 0
      %p164 = por %p162, %p163
      %p165 = scmp.ne.s32.totalorder %s154, %s157
      %p166 = scmp.eq.s32.totalorder %s23, 3
      %p167 = por %p165, %p166
      %p168 = scmp.ne.s32.totalorder %s157, %s158
      %p169 = scmp.eq.s32.totalorder %s23, 0
      %p170 = por %p168, %p169
      %p171 = scmp.ne.s32.totalorder %s157, %s158
      %p172 = scmp.eq.s32.totalorder %s24, 3
      %p173 = por %p171, %p172
      %p175 = scmp.ne.s32.totalorder %s158, %s174
      %p176 = scmp.eq.s32.totalorder %s24, 0
      %p177 = por %p175, %p176
      %s178 = ssub.s32 %s25, %s37
      %s179 = ssub.s32 %s26, %s33
      %s180 = sor.u32 %s178, %s179
      %p181 = scmp.eq.s32.totalorder %s180, 0
      %s183 = sadd.s32 %s182, 1
      %s184 = scalar_select %p181, %s182, %s183
      %p187 = pneg %p181
      %p188 = scmp.eq.s32.totalorder %s18, 3
      %p189 = por %p187, %p188
      %p190 = scmp.ne.s32.totalorder %s182, %s185
      %p191 = scmp.eq.s32.totalorder %s18, 0
      %p192 = por %p190, %p191
      %p193 = scmp.ne.s32.totalorder %s182, %s185
      %p194 = scmp.eq.s32.totalorder %s23, 3
      %p195 = por %p193, %p194
      %p196 = scmp.ne.s32.totalorder %s185, %s186
      %p197 = scmp.eq.s32.totalorder %s23, 0
      %p198 = por %p196, %p197
      %p199 = scmp.ne.s32.totalorder %s185, %s186
      %p200 = scmp.eq.s32.totalorder %s24, 3
      %p201 = por %p199, %p200
      %p203 = scmp.ne.s32.totalorder %s186, %s202
      %p204 = scmp.eq.s32.totalorder %s24, 0
      %p205 = por %p203, %p204
      %s206 = ssub.s32 %s25, %s37
      %s207 = ssub.s32 %s26, %s33
      %s208 = sor.u32 %s206, %s207
      %p209 = scmp.eq.s32.totalorder %s208, 0
      %s211 = sadd.s32 %s210, 1
      %s212 = scalar_select %p209, %s210, %s211
      %p215 = pneg %p209
      %p216 = scmp.eq.s32.totalorder %s18, 3
      %p217 = por %p215, %p216
      %p218 = scmp.ne.s32.totalorder %s210, %s213
      %p219 = scmp.eq.s32.totalorder %s18, 0
      %p220 = por %p218, %p219
      %p221 = scmp.ne.s32.totalorder %s210, %s213
      %p222 = scmp.eq.s32.totalorder %s23, 3
      %p223 = por %p221, %p222
      %p224 = scmp.ne.s32.totalorder %s213, %s214
      %p225 = scmp.eq.s32.totalorder %s23, 0
      %p226 = por %p224, %p225
      %p227 = scmp.ne.s32.totalorder %s213, %s214
      %p228 = scmp.eq.s32.totalorder %s24, 3
      %p229 = por %p227, %p228
      %p231 = scmp.ne.s32.totalorder %s214, %s230
      %p232 = scmp.eq.s32.totalorder %s24, 0
      %p233 = por %p231, %p232
      %s234 = ssub.s32 %s25, %s37
      %s235 = ssub.s32 %s26, %s33
      %s236 = sor.u32 %s234, %s235
      %p237 = scmp.eq.s32.totalorder %s236, 0
      %s239 = sadd.s32 %s238, 1
      %s240 = scalar_select %p237, %s238, %s239
      %p243 = pneg %p237
      %p244 = scmp.eq.s32.totalorder %s18, 3
      %p245 = por %p243, %p244
      %p246 = scmp.ne.s32.totalorder %s238, %s241
      %p247 = scmp.eq.s32.totalorder %s18, 0
      %p248 = por %p246, %p247
      %p249 = scmp.ne.s32.totalorder %s238, %s241
      %p250 = scmp.eq.s32.totalorder %s23, 3
      %p251 = por %p249, %p250
      %p252 = scmp.ne.s32.totalorder %s241, %s242
      %p253 = scmp.eq.s32.totalorder %s23, 0
      %p254 = por %p252, %p253
      %p255 = scmp.ne.s32.totalorder %s241, %s242
      %p256 = scmp.eq.s32.totalorder %s24, 3
      %p257 = por %p255, %p256
      %p259 = scmp.ne.s32.totalorder %s242, %s258
      %p260 = scmp.eq.s32.totalorder %s24, 0
      %p261 = por %p259, %p260
      %s262 = ssub.s32 %s25, %s37
      %s263 = ssub.s32 %s26, %s33
      %s264 = sor.u32 %s262, %s263
      %p265 = scmp.eq.s32.totalorder %s264, 0
      %s267 = sadd.s32 %s266, 1
      %s268 = scalar_select %p265, %s266, %s267
      %p271 = pneg %p265
      %p272 = scmp.eq.s32.totalorder %s18, 3
      %p273 = por %p271, %p272
      %p274 = scmp.ne.s32.totalorder %s266, %s269
      %p275 = scmp.eq.s32.totalorder %s18, 0
      %p276 = por %p274, %p275
      %p277 = scmp.ne.s32.totalorder %s266, %s269
      %p278 = scmp.eq.s32.totalorder %s23, 3
      %p279 = por %p277, %p278
      %p280 = scmp.ne.s32.totalorder %s269, %s270
      %p281 = scmp.eq.s32.totalorder %s23, 0
      %p282 = por %p280, %p281
      %p283 = scmp.ne.s32.totalorder %s269, %s270
      %p284 = scmp.eq.s32.totalorder %s24, 3
      %p285 = por %p283, %p284
      %p287 = scmp.ne.s32.totalorder %s270, %s286
      %p288 = scmp.eq.s32.totalorder %s24, 0
      %p289 = por %p287, %p288
      %p290 = scmp.le.s32.totalorder 1, %s18
      %p291 = scmp.lt.s32.totalorder %s18, 5
      %p292 = pnand %p290, %p291
      %p293 = pneg %p292
      // Predicated region
      $region9: #{lsh_attention_forward.3} parent=5 // pred_check
        _
      $region10: #{lsh_attention_forward.3} parent=5 // pred_check_branch
        %295 = sbr.rel (%p292) target = $region12
      $region11: #{lsh_attention_forward.3} parent=5 // pred_region
        %s296 = ssub.s32 %s18, 1
      $region12: #{lsh_attention_forward.3} parent=5 // pred_fallthru
        _
      %p297 = scmp.lt.s32.totalorder %s18, 4
      // Predicated region
      $region13: #{lsh_attention_forward.3} parent=5 // pred_check
        %p298 = pneg %p297
      $region14: #{lsh_attention_forward.3} parent=5 // pred_check_branch
        %300 = sbr.rel (%p298) target = $region16
      $region15: #{lsh_attention_forward.3} parent=5 // pred_region
        // Predicated region
        $region17: #{lsh_attention_forward.3} parent=15 // pred_check
          %p301 = pneg %p52
        $region18: #{lsh_attention_forward.3} parent=15 // pred_check_branch
          %303 = sbr.rel (%p301) target = $region20
        $region19: #{lsh_attention_forward.3} parent=15 // pred_region
          %s304 = smul.u32 8, %s26
          %p305 = scmp.lt.s32.totalorder %s25, 3
          %s306 = scalar_select %p305, %s25, 3
          %p307 = scmp.lt.s32.totalorder %s304, 7
          %s308 = scalar_select %p307, %s304, 7
          %s309 = smul.addr %s306, 8
          %s310 = sadd.s32 %s308, %s309
          %s311 = smul.addr %s310, 4
          %s312 = scalar_lea.vmem %s0, %s311
          %s313 = smul.u32 8, %s26
        $region20: #{lsh_attention_forward.3} parent=15 // pred_fallthru
          _
        // Predicated region
        $region21: #{lsh_attention_forward.3} parent=15 // pred_check
          %p314 = pneg %p80
        $region22: #{lsh_attention_forward.3} parent=15 // pred_check_branch
          %316 = sbr.rel (%p314) target = $region24
        $region23: #{lsh_attention_forward.3} parent=15 // pred_region
          %s317 = smul.u32 8, %s26
          %p318 = scmp.lt.s32.totalorder %s25, 3
          %s319 = scalar_select %p318, %s25, 3
          %p320 = scmp.lt.s32.totalorder %s317, 7
          %s321 = scalar_select %p320, %s317, 7
          %s322 = smul.addr %s321, 2
          %s323 = smul.addr %s319, 16
          %s324 = sadd.s32 %s322, %s323
          %s325 = smul.addr %s324, 4
          %s326 = scalar_lea.vmem %s1, %s325
          %s327 = smul.u32 8, %s26
        $region24: #{lsh_attention_forward.3} parent=15 // pred_fallthru
          _
        // Predicated region
        $region25: #{lsh_attention_forward.3} parent=15 // pred_check
          %p328 = pneg %p108
        $region26: #{lsh_attention_forward.3} parent=15 // pred_check_branch
          %330 = sbr.rel (%p328) target = $region28
        $region27: #{lsh_attention_forward.3} parent=15 // pred_region
          %s331 = smul.u32 8, %s26
          %p332 = scmp.lt.s32.totalorder %s25, 3
          %s333 = scalar_select %p332, %s25, 3
          %p334 = scmp.lt.s32.totalorder %s331, 7
          %s335 = scalar_select %p334, %s331, 7
          %s336 = smul.addr %s335, 2
          %s337 = smul.addr %s333, 16
          %s338 = sadd.s32 %s336, %s337
          %s339 = smul.addr %s338, 4
          %s340 = scalar_lea.vmem %s2, %s339
          %s341 = smul.u32 8, %s26
        $region28: #{lsh_attention_forward.3} parent=15 // pred_fallthru
          _
        // Predicated region
        $region29: #{lsh_attention_forward.3} parent=15 // pred_check
          %p342 = pneg %p136
        $region30: #{lsh_attention_forward.3} parent=15 // pred_check_branch
          %344 = sbr.rel (%p342) target = $region32
        $region31: #{lsh_attention_forward.3} parent=15 // pred_region
          %p345 = scmp.lt.s32.totalorder %s25, 3
          %s346 = scalar_select %p345, %s25, 3
          %p347 = scmp.lt.s32.totalorder %s26, 0
          %s348 = scalar_select %p347, %s26, 0
          %s349 = sadd.s32 %s348, %s346
          %s350 = smul.addr %s349, 8
          %s351 = scalar_lea.vmem %s3, %s350
        $region32: #{lsh_attention_forward.3} parent=15 // pred_fallthru
          _
        // Predicated region
        $region33: #{lsh_attention_forward.3} parent=15 // pred_check
          %p352 = pneg %p164
        $region34: #{lsh_attention_forward.3} parent=15 // pred_check_branch
          %354 = sbr.rel (%p352) target = $region36
        $region35: #{lsh_attention_forward.3} parent=15 // pred_region
          %p355 = scmp.lt.s32.totalorder %s25, 3
          %s356 = scalar_select %p355, %s25, 3
          %p357 = scmp.lt.s32.totalorder %s26, 0
          %s358 = scalar_select %p357, %s26, 0
          %s359 = sadd.s32 %s358, %s356
          %s360 = smul.addr %s359, 8
          %s361 = scalar_lea.vmem %s4, %s360
        $region36: #{lsh_attention_forward.3} parent=15 // pred_fallthru
          _
        // Predicated region
        $region37: #{lsh_attention_forward.3} parent=15 // pred_check
          %p362 = pneg %p192
        $region38: #{lsh_attention_forward.3} parent=15 // pred_check_branch
          %364 = sbr.rel (%p362) target = $region40
        $region39: #{lsh_attention_forward.3} parent=15 // pred_region
          %p365 = scmp.lt.s32.totalorder %s25, 3
          %s366 = scalar_select %p365, %s25, 3
          %p367 = scmp.lt.s32.totalorder %s26, 0
          %s368 = scalar_select %p367, %s26, 0
          %s369 = sadd.s32 %s368, %s366
          %s370 = smul.addr %s369, 8
          %s371 = scalar_lea.vmem %s5, %s370
        $region40: #{lsh_attention_forward.3} parent=15 // pred_fallthru
          _
        // Predicated region
        $region41: #{lsh_attention_forward.3} parent=15 // pred_check
          %p372 = pneg %p220
        $region42: #{lsh_attention_forward.3} parent=15 // pred_check_branch
          %374 = sbr.rel (%p372) target = $region44
        $region43: #{lsh_attention_forward.3} parent=15 // pred_region
          %s375 = smul.u32 8, %s26
          %p376 = scmp.lt.s32.totalorder %s25, 3
          %s377 = scalar_select %p376, %s25, 3
          %p378 = scmp.lt.s32.totalorder %s375, 7
          %s379 = scalar_select %p378, %s375, 7
          %s380 = smul.addr %s377, 8
          %s381 = sadd.s32 %s379, %s380
          %s382 = smul.addr %s381, 4
          %s383 = scalar_lea.vmem %s6, %s382
          %s384 = smul.u32 8, %s26
        $region44: #{lsh_attention_forward.3} parent=15 // pred_fallthru
          _
      $region16: #{lsh_attention_forward.3} parent=5 // pred_fallthru
        _
      %p385 = scmp.le.s32.totalorder 1, %s18
      %p386 = scmp.lt.s32.totalorder %s18, 5
      %p387 = pnand %p385, %p386
      %p388 = pneg %p387
      // Predicated region
      $region45: #{lsh_attention_forward.3} parent=5 // pred_check
        _
      $region46: #{lsh_attention_forward.3} parent=5 // pred_check_branch
        %390 = sbr.rel (%p387) target = $region48
      $region47: #{lsh_attention_forward.3} parent=5 // pred_region
        %s391 = ssub.s32 %s18, 1
        %s392 = smul.u32 8, %s28
        %p393 = scmp.lt.s32.totalorder %s27, 3
        %s394 = scalar_select %p393, %s27, 3
        %p395 = scmp.lt.s32.totalorder %s392, 7
        %s396 = scalar_select %p395, %s392, 7
        %s397 = smul.addr %s394, 8
        %s398 = sadd.s32 %s396, %s397
        %s399 = smul.addr %s398, 4
        %s400 = scalar_lea.vmem %s0, %s399
        %p401 = pneg %p58
        %p402 = pneg %p55
        %s403 = smul.u32 8, %s28
        %p404 = scmp.lt.s32.totalorder %s27, 3
        %s405 = scalar_select %p404, %s27, 3
        %p406 = scmp.lt.s32.totalorder %s403, 7
        %s407 = scalar_select %p406, %s403, 7
        %s408 = smul.addr %s407, 2
        %s409 = smul.addr %s405, 16
        %s410 = sadd.s32 %s408, %s409
        %s411 = smul.addr %s410, 4
        %s412 = scalar_lea.vmem %s1, %s411
        %p413 = pneg %p86
        %p414 = pneg %p83
        %s415 = smul.u32 8, %s28
        %p416 = scmp.lt.s32.totalorder %s27, 3
        %s417 = scalar_select %p416, %s27, 3
        %p418 = scmp.lt.s32.totalorder %s415, 7
        %s419 = scalar_select %p418, %s415, 7
        %s420 = smul.addr %s419, 2
        %s421 = smul.addr %s417, 16
        %s422 = sadd.s32 %s420, %s421
        %s423 = smul.addr %s422, 4
        %s424 = scalar_lea.vmem %s2, %s423
        %p425 = pneg %p114
        %p426 = pneg %p111
        %p427 = scmp.lt.s32.totalorder %s27, 3
        %s428 = scalar_select %p427, %s27, 3
        %p429 = scmp.lt.s32.totalorder %s28, 0
        %s430 = scalar_select %p429, %s28, 0
        %s431 = sadd.s32 %s430, %s428
        %s432 = smul.addr %s431, 8
        %s433 = scalar_lea.vmem %s3, %s432
        %p434 = pneg %p142
        %p435 = pneg %p139
        %p436 = scmp.lt.s32.totalorder %s27, 3
        %s437 = scalar_select %p436, %s27, 3
        %p438 = scmp.lt.s32.totalorder %s28, 0
        %s439 = scalar_select %p438, %s28, 0
        %s440 = sadd.s32 %s439, %s437
        %s441 = smul.addr %s440, 8
        %s442 = scalar_lea.vmem %s4, %s441
        %p443 = pneg %p170
        %p444 = pneg %p167
        %p445 = scmp.lt.s32.totalorder %s27, 3
        %s446 = scalar_select %p445, %s27, 3
        %p447 = scmp.lt.s32.totalorder %s28, 0
        %s448 = scalar_select %p447, %s28, 0
        %s449 = sadd.s32 %s448, %s446
        %s450 = smul.addr %s449, 8
        %s451 = scalar_lea.vmem %s5, %s450
        %p452 = pneg %p198
        %p453 = pneg %p195
        %s454 = smul.u32 8, %s28
        %p455 = scmp.lt.s32.totalorder %s27, 3
        %s456 = scalar_select %p455, %s27, 3
        %p457 = scmp.lt.s32.totalorder %s454, 7
        %s458 = scalar_select %p457, %s454, 7
        %s459 = smul.addr %s456, 8
        %s460 = sadd.s32 %s458, %s459
        %s461 = smul.addr %s460, 4
        %s462 = scalar_lea.vmem %s6, %s461
        %p463 = pneg %p226
        %p464 = pneg %p223
        %p465 = pneg %p254
        %p466 = pneg %p251
        %s467 = sand.u32 %s241, 1
        %s468 = scalar_lea.sflag [#allocation3], %s467
        %s469 = sand.u32 %s241, 1
        %s470 = smul.addr %s469, 64
        %s471 = scalar_lea.vmem [#allocation2], %s470
        %p472 = pneg %p282
        %p473 = pneg %p279
        %p474 = scmp.lt.s32.totalorder %s27, 3
        %s475 = scalar_select %p474, %s27, 3
        %p476 = scmp.lt.s32.totalorder %s28, 0
        %s477 = scalar_select %p476, %s28, 0
        %s478 = sadd.s32 %s477, %s475
        %s479 = smul.addr %s478, 8
        %s480 = scalar_lea.vmem %s8, %s479
        %s481 = smul.u32 8, %s28
        %p482 = scmp.lt.s32.totalorder %s27, 3
        %s483 = scalar_select %p482, %s27, 3
        %p484 = scmp.lt.s32.totalorder %s481, 7
        %s485 = scalar_select %p484, %s481, 7
        %s486 = smul.addr %s483, 8
        %s487 = sadd.s32 %s485, %s486
        %s488 = smul.addr %s487, 4
        %s489 = scalar_lea.vmem %s0, %s488
        %s490 = smul.u32 8, %s28
        %s491 = smul.u32 8, %s28
        %p492 = scmp.lt.s32.totalorder %s27, 3
        %s493 = scalar_select %p492, %s27, 3
        %p494 = scmp.lt.s32.totalorder %s491, 7
        %s495 = scalar_select %p494, %s491, 7
        %s496 = smul.addr %s495, 2
        %s497 = smul.addr %s493, 16
        %s498 = sadd.s32 %s496, %s497
        %s499 = smul.addr %s498, 4
        %s500 = scalar_lea.vmem %s1, %s499
        %s501 = smul.u32 8, %s28
        %s502 = smul.u32 8, %s28
        %p503 = scmp.lt.s32.totalorder %s27, 3
        %s504 = scalar_select %p503, %s27, 3
        %p505 = scmp.lt.s32.totalorder %s502, 7
        %s506 = scalar_select %p505, %s502, 7
        %s507 = smul.addr %s506, 2
        %s508 = smul.addr %s504, 16
        %s509 = sadd.s32 %s507, %s508
        %s510 = smul.addr %s509, 4
        %s511 = scalar_lea.vmem %s2, %s510
        %s512 = smul.u32 8, %s28
        %p513 = scmp.lt.s32.totalorder %s27, 3
        %s514 = scalar_select %p513, %s27, 3
        %p515 = scmp.lt.s32.totalorder %s28, 0
        %s516 = scalar_select %p515, %s28, 0
        %s517 = sadd.s32 %s516, %s514
        %s518 = smul.addr %s517, 8
        %s519 = scalar_lea.vmem %s3, %s518
        %p520 = scmp.lt.s32.totalorder %s27, 3
        %s521 = scalar_select %p520, %s27, 3
        %p522 = scmp.lt.s32.totalorder %s28, 0
        %s523 = scalar_select %p522, %s28, 0
        %s524 = sadd.s32 %s523, %s521
        %s525 = smul.addr %s524, 8
        %s526 = scalar_lea.vmem %s4, %s525
        %p527 = scmp.lt.s32.totalorder %s27, 3
        %s528 = scalar_select %p527, %s27, 3
        %p529 = scmp.lt.s32.totalorder %s28, 0
        %s530 = scalar_select %p529, %s28, 0
        %s531 = sadd.s32 %s530, %s528
        %s532 = smul.addr %s531, 8
        %s533 = scalar_lea.vmem %s5, %s532
        %s534 = smul.u32 8, %s28
        %p535 = scmp.lt.s32.totalorder %s27, 3
        %s536 = scalar_select %p535, %s27, 3
        %p537 = scmp.lt.s32.totalorder %s534, 7
        %s538 = scalar_select %p537, %s534, 7
        %s539 = smul.addr %s536, 8
        %s540 = sadd.s32 %s538, %s539
        %s541 = smul.addr %s540, 4
        %s542 = scalar_lea.vmem %s6, %s541
        %s543 = smul.u32 8, %s28
        %s544 = smul.u32 8, %s28
        %p545 = scmp.lt.s32.totalorder %s27, 3
        %s546 = scalar_select %p545, %s27, 3
        %p547 = scmp.lt.s32.totalorder %s28, 0
        %s548 = scalar_select %p547, %s28, 0
        %s549 = sadd.s32 %s548, %s546
        %s550 = smul.addr %s549, 8
        %s551 = scalar_lea.vmem %s8, %s550
        %v553 = vld [vmem:[%s489] sm:$0xf]
        %v554 = vld [vmem:[%s489 + $0x4] sm:$0xf]
        %v555 = vld [vmem:[%s489 + $0x8] sm:$0xf]
        %v556 = vld [vmem:[%s489 + $0xc] sm:$0xf]
        %v557 = vld [vmem:[%s489 + $0x10] sm:$0xf]
        %v558 = vld [vmem:[%s489 + $0x14] sm:$0xf]
        %v559 = vld [vmem:[%s489 + $0x18] sm:$0xf]
        %v560 = vld [vmem:[%s489 + $0x1c] sm:$0xf]
        %v561 = vld [vmem:[%s500] sm:$0xf]
        %v562 = vld [vmem:[%s500 + $0x4] sm:$0xf]
        %v563 = vld [vmem:[%s500 + $0x8] sm:$0xf]
        %v564 = vld [vmem:[%s500 + $0xc] sm:$0xf]
        %v565 = vld [vmem:[%s500 + $0x10] sm:$0xf]
        %v566 = vld [vmem:[%s500 + $0x14] sm:$0xf]
        %v567 = vld [vmem:[%s500 + $0x18] sm:$0xf]
        %v568 = vld [vmem:[%s500 + $0x1c] sm:$0xf]
        %v569 = vld [vmem:[%s500 + $0x20] sm:$0xf]
        %v570 = vld [vmem:[%s500 + $0x24] sm:$0xf]
        %v571 = vld [vmem:[%s500 + $0x28] sm:$0xf]
        %v572 = vld [vmem:[%s500 + $0x2c] sm:$0xf]
        %v573 = vld [vmem:[%s500 + $0x30] sm:$0xf]
        %v574 = vld [vmem:[%s500 + $0x34] sm:$0xf]
        %v575 = vld [vmem:[%s500 + $0x38] sm:$0xf]
        %v576 = vld [vmem:[%s500 + $0x3c] sm:$0xf]
        %v577 = vld [vmem:[%s511] sm:$0xf]
        %v578 = vld [vmem:[%s511 + $0x4] sm:$0xf]
        %v579 = vld [vmem:[%s511 + $0x8] sm:$0xf]
        %v580 = vld [vmem:[%s511 + $0xc] sm:$0xf]
        %v581 = vld [vmem:[%s511 + $0x10] sm:$0xf]
        %v582 = vld [vmem:[%s511 + $0x14] sm:$0xf]
        %v583 = vld [vmem:[%s511 + $0x18] sm:$0xf]
        %v584 = vld [vmem:[%s511 + $0x1c] sm:$0xf]
        %v585 = vld [vmem:[%s511 + $0x20] sm:$0xf]
        %v586 = vld [vmem:[%s511 + $0x24] sm:$0xf]
        %v587 = vld [vmem:[%s511 + $0x28] sm:$0xf]
        %v588 = vld [vmem:[%s511 + $0x2c] sm:$0xf]
        %v589 = vld [vmem:[%s511 + $0x30] sm:$0xf]
        %v590 = vld [vmem:[%s511 + $0x34] sm:$0xf]
        %v591 = vld [vmem:[%s511 + $0x38] sm:$0xf]
        %v592 = vld [vmem:[%s511 + $0x3c] sm:$0xf]
        %v593 = vld [vmem:[%s519] sm:$0xff]
        %v594 = vlaneseq
        %v595 = vshrl.u32 %v594, 7
        %v596 = vsub.s32 0, %v595
        %v597 = vrot.slane %v593, %v596
        %599 = vbcast.lane.b32.xlu0 %v597, 256
        %v600 = vpop.permute.xlu0 %599
        %v601 = vlaneseq
        %v602 = vshrl.u32 %v601, 7
        %v603 = vsub.s32 1, %v602
        %v604 = vrot.slane %v593, %v603
        %606 = vbcast.lane.b32.xlu0 %v604, 256
        %v607 = vpop.permute.xlu0 %606
        %v608 = vlaneseq
        %v609 = vshrl.u32 %v608, 7
        %v610 = vsub.s32 2, %v609
        %v611 = vrot.slane %v593, %v610
        %613 = vbcast.lane.b32.xlu0 %v611, 256
        %v614 = vpop.permute.xlu0 %613
        %v615 = vlaneseq
        %v616 = vshrl.u32 %v615, 7
        %v617 = vsub.s32 3, %v616
        %v618 = vrot.slane %v593, %v617
        %620 = vbcast.lane.b32.xlu0 %v618, 256
        %v621 = vpop.permute.xlu0 %620
        %v622 = vlaneseq
        %v623 = vshrl.u32 %v622, 7
        %v624 = vsub.s32 4, %v623
        %v625 = vrot.slane %v593, %v624
        %627 = vbcast.lane.b32.xlu0 %v625, 256
        %v628 = vpop.permute.xlu0 %627
        %v629 = vlaneseq
        %v630 = vshrl.u32 %v629, 7
        %v631 = vsub.s32 5, %v630
        %v632 = vrot.slane %v593, %v631
        %634 = vbcast.lane.b32.xlu0 %v632, 256
        %v635 = vpop.permute.xlu0 %634
        %v636 = vlaneseq
        %v637 = vshrl.u32 %v636, 7
        %v638 = vsub.s32 6, %v637
        %v639 = vrot.slane %v593, %v638
        %641 = vbcast.lane.b32.xlu0 %v639, 256
        %v642 = vpop.permute.xlu0 %641
        %v643 = vlaneseq
        %v644 = vshrl.u32 %v643, 7
        %v645 = vsub.s32 7, %v644
        %v646 = vrot.slane %v593, %v645
        %648 = vbcast.lane.b32.xlu0 %v646, 256
        %v649 = vpop.permute.xlu0 %648
        %v650 = vld [vmem:[%s526] sm:$0xff]
        %v651 = vcombine.high %v650, %v650
        %v653 = vunpack.c.l.s4 1966171168
        %v654 = vunpack.c.0.s8 %v653
        %v655 = vlaneseq
        %v656 = vshrl.u32 %v655, 7
        %v657 = vsub.s32 %v654, %v656
        %v658 = vrot.slane %v650, %v657
        %v660 = vunpack.c.l.s4 1966171168
        %v661 = vunpack.c.0.s8 %v660
        %v662 = vlaneseq
        %v663 = vshrl.u32 %v662, 7
        %v664 = vsub.s32 %v661, %v663
        %v665 = vrot.slane %v651, %v664
        %v666 = vcombine.high %v658, %v658
        %v667 = vcombine.high %v665, %v665
        %v669 = vunpack.c.l.s4 1966171168
        %v670 = vunpack.c.0.s8 %v669
        %v671 = vlaneseq
        %v672 = vshrl.u32 %v671, 7
        %v673 = vsub.s32 %v670, %v672
        %v674 = vrot.slane %v658, %v673
        %v676 = vunpack.c.l.s4 1966171168
        %v677 = vunpack.c.0.s8 %v676
        %v678 = vlaneseq
        %v679 = vshrl.u32 %v678, 7
        %v680 = vsub.s32 %v677, %v679
        %v681 = vrot.slane %v665, %v680
        %v683 = vunpack.c.l.s4 1966171168
        %v684 = vunpack.c.0.s8 %v683
        %v685 = vlaneseq
        %v686 = vshrl.u32 %v685, 7
        %v687 = vsub.s32 %v684, %v686
        %v688 = vrot.slane %v666, %v687
        %v690 = vunpack.c.l.s4 1966171168
        %v691 = vunpack.c.0.s8 %v690
        %v692 = vlaneseq
        %v693 = vshrl.u32 %v692, 7
        %v694 = vsub.s32 %v691, %v693
        %v695 = vrot.slane %v667, %v694
        %v696 = vcombine.high %v674, %v674
        %v697 = vcombine.high %v681, %v681
        %v698 = vcombine.high %v688, %v688
        %v699 = vcombine.high %v695, %v695
        %v700 = vld [vmem:[%s533] sm:$0xff]
        %v701 = vlaneseq
        %v702 = vshrl.u32 %v701, 7
        %v703 = vsub.s32 0, %v702
        %v704 = vrot.slane %v700, %v703
        %706 = vbcast.lane.b32.xlu0 %v704, 256
        %v707 = vpop.permute.xlu0 %706
        %v708 = vlaneseq
        %v709 = vshrl.u32 %v708, 7
        %v710 = vsub.s32 1, %v709
        %v711 = vrot.slane %v700, %v710
        %713 = vbcast.lane.b32.xlu0 %v711, 256
        %v714 = vpop.permute.xlu0 %713
        %v715 = vlaneseq
        %v716 = vshrl.u32 %v715, 7
        %v717 = vsub.s32 2, %v716
        %v718 = vrot.slane %v700, %v717
        %720 = vbcast.lane.b32.xlu0 %v718, 256
        %v721 = vpop.permute.xlu0 %720
        %v722 = vlaneseq
        %v723 = vshrl.u32 %v722, 7
        %v724 = vsub.s32 3, %v723
        %v725 = vrot.slane %v700, %v724
        %727 = vbcast.lane.b32.xlu0 %v725, 256
        %v728 = vpop.permute.xlu0 %727
        %v729 = vlaneseq
        %v730 = vshrl.u32 %v729, 7
        %v731 = vsub.s32 4, %v730
        %v732 = vrot.slane %v700, %v731
        %734 = vbcast.lane.b32.xlu0 %v732, 256
        %v735 = vpop.permute.xlu0 %734
        %v736 = vlaneseq
        %v737 = vshrl.u32 %v736, 7
        %v738 = vsub.s32 5, %v737
        %v739 = vrot.slane %v700, %v738
        %741 = vbcast.lane.b32.xlu0 %v739, 256
        %v742 = vpop.permute.xlu0 %741
        %v743 = vlaneseq
        %v744 = vshrl.u32 %v743, 7
        %v745 = vsub.s32 6, %v744
        %v746 = vrot.slane %v700, %v745
        %748 = vbcast.lane.b32.xlu0 %v746, 256
        %v749 = vpop.permute.xlu0 %748
        %v750 = vlaneseq
        %v751 = vshrl.u32 %v750, 7
        %v752 = vsub.s32 7, %v751
        %v753 = vrot.slane %v700, %v752
        %755 = vbcast.lane.b32.xlu0 %v753, 256
        %v756 = vpop.permute.xlu0 %755
        %v759 = vunpack.c.l.b16 %v561
        %v760 = vunpack.c.l.b16 %v562
        %v761 = vpack.c.b16 %v760, %v759
        %vm762 = vcmask 130048
        %v764 = vsel %vm762, %v553, 0
        %v767 = vsel %vm762, %v761, 0
        %769 = vmatprep.subr.bf16.mxu0 0
        %770 = vmatpush1.bf16.xpose.msra.mxu0 %v767
        %771 = vmatprep.subr.bf16.mxu0 0
        %772 = vmatpush1.bf16.xpose.msra.mxu0 0
        %773 = vmatprep.subr.bf16.mxu0 0
        %774 = vmatpush1.bf16.xpose.msra.mxu0 0
        %775 = vmatprep.subr.bf16.mxu0 0
        %776 = vmatpush1.bf16.xpose.msra.mxu0 0
        %777 = vmatprep.subr.bf16.mxu0 0
        %778 = vmatpush1.bf16.xpose.msra.mxu0 0
        %779 = vmatprep.subr.bf16.mxu0 0
        %780 = vmatpush1.bf16.xpose.msra.mxu0 0
        %781 = vmatprep.subr.bf16.mxu0 0
        %782 = vmatpush1.bf16.xpose.msra.mxu0 0
        %783 = vmatprep.subr.bf16.mxu0 0
        %784 = vmatpush1.bf16.xpose.msra.mxu0 0
        %785 = vmatprep.subr.bf16.mxu0 0
        %786 = vmatpush1.bf16.xpose.msra.mxu0 0
        %787 = vmatprep.subr.bf16.mxu0 0
        %788 = vmatpush1.bf16.xpose.msra.mxu0 0
        %789 = vmatprep.subr.bf16.mxu0 0
        %790 = vmatpush1.bf16.xpose.msra.mxu0 0
        %791 = vmatprep.subr.bf16.mxu0 0
        %792 = vmatpush1.bf16.xpose.msra.mxu0 0
        %793 = vmatprep.subr.bf16.mxu0 0
        %794 = vmatpush1.bf16.xpose.msra.mxu0 0
        %795 = vmatprep.subr.bf16.mxu0 0
        %796 = vmatpush1.bf16.xpose.msra.mxu0 0
        %797 = vmatprep.subr.bf16.mxu0 0
        %798 = vmatpush1.bf16.xpose.msra.mxu0 0
        %799 = vmatprep.subr.bf16.mxu0 0
        %800 = vmatpush1.bf16.xpose.msra.mxu0 0
        %801 = vmatprep.mubr.bf16.mxu0 0
        %802 = vmatmul.mubr.bf16.gmra.mrb[0].mxu0 %v764
        %v803 = vpop.f32.mrb[0].mxu0
        %v804 = vadd.f32 0.0, %v803
        %v805 = vpop.f32.mrb[0].mxu0
        %v806 = vpop.f32.mrb[0].mxu0
        %v807 = vpop.f32.mrb[0].mxu0
        %808 = vdwg.mxu0
        %v811 = vunpack.c.l.b16 %v563
        %v812 = vunpack.c.l.b16 %v564
        %v813 = vpack.c.b16 %v812, %v811
        %v815 = vsel %vm762, %v554, 0
        %v818 = vsel %vm762, %v813, 0
        %820 = vmatprep.subr.bf16.mxu0 0
        %821 = vmatpush1.bf16.xpose.msra.mxu0 %v818
        %822 = vmatprep.subr.bf16.mxu0 0
        %823 = vmatpush1.bf16.xpose.msra.mxu0 0
        %824 = vmatprep.subr.bf16.mxu0 0
        %825 = vmatpush1.bf16.xpose.msra.mxu0 0
        %826 = vmatprep.subr.bf16.mxu0 0
        %827 = vmatpush1.bf16.xpose.msra.mxu0 0
        %828 = vmatprep.subr.bf16.mxu0 0
        %829 = vmatpush1.bf16.xpose.msra.mxu0 0
        %830 = vmatprep.subr.bf16.mxu0 0
        %831 = vmatpush1.bf16.xpose.msra.mxu0 0
        %832 = vmatprep.subr.bf16.mxu0 0
        %833 = vmatpush1.bf16.xpose.msra.mxu0 0
        %834 = vmatprep.subr.bf16.mxu0 0
        %835 = vmatpush1.bf16.xpose.msra.mxu0 0
        %836 = vmatprep.subr.bf16.mxu0 0
        %837 = vmatpush1.bf16.xpose.msra.mxu0 0
        %838 = vmatprep.subr.bf16.mxu0 0
        %839 = vmatpush1.bf16.xpose.msra.mxu0 0
        %840 = vmatprep.subr.bf16.mxu0 0
        %841 = vmatpush1.bf16.xpose.msra.mxu0 0
        %842 = vmatprep.subr.bf16.mxu0 0
        %843 = vmatpush1.bf16.xpose.msra.mxu0 0
        %844 = vmatprep.subr.bf16.mxu0 0
        %845 = vmatpush1.bf16.xpose.msra.mxu0 0
        %846 = vmatprep.subr.bf16.mxu0 0
        %847 = vmatpush1.bf16.xpose.msra.mxu0 0
        %848 = vmatprep.subr.bf16.mxu0 0
        %849 = vmatpush1.bf16.xpose.msra.mxu0 0
        %850 = vmatprep.subr.bf16.mxu0 0
        %851 = vmatpush1.bf16.xpose.msra.mxu0 0
        %852 = vmatprep.mubr.bf16.mxu0 0
        %853 = vmatmul.mubr.bf16.gmra.mrb[0].mxu0 %v815
        %v854 = vpop.f32.mrb[0].mxu0
        %v855 = vadd.f32 0.0, %v854
        %v856 = vpop.f32.mrb[0].mxu0
        %v857 = vpop.f32.mrb[0].mxu0
        %v858 = vpop.f32.mrb[0].mxu0
        %859 = vdwg.mxu0
        %v862 = vunpack.c.l.b16 %v565
        %v863 = vunpack.c.l.b16 %v566
        %v864 = vpack.c.b16 %v863, %v862
        %v866 = vsel %vm762, %v555, 0
        %v869 = vsel %vm762, %v864, 0
        %871 = vmatprep.subr.bf16.mxu0 0
        %872 = vmatpush1.bf16.xpose.msra.mxu0 %v869
        %873 = vmatprep.subr.bf16.mxu0 0
        %874 = vmatpush1.bf16.xpose.msra.mxu0 0
        %875 = vmatprep.subr.bf16.mxu0 0
        %876 = vmatpush1.bf16.xpose.msra.mxu0 0
        %877 = vmatprep.subr.bf16.mxu0 0
        %878 = vmatpush1.bf16.xpose.msra.mxu0 0
        %879 = vmatprep.subr.bf16.mxu0 0
        %880 = vmatpush1.bf16.xpose.msra.mxu0 0
        %881 = vmatprep.subr.bf16.mxu0 0
        %882 = vmatpush1.bf16.xpose.msra.mxu0 0
        %883 = vmatprep.subr.bf16.mxu0 0
        %884 = vmatpush1.bf16.xpose.msra.mxu0 0
        %885 = vmatprep.subr.bf16.mxu0 0
        %886 = vmatpush1.bf16.xpose.msra.mxu0 0
        %887 = vmatprep.subr.bf16.mxu0 0
        %888 = vmatpush1.bf16.xpose.msra.mxu0 0
        %889 = vmatprep.subr.bf16.mxu0 0
        %890 = vmatpush1.bf16.xpose.msra.mxu0 0
        %891 = vmatprep.subr.bf16.mxu0 0
        %892 = vmatpush1.bf16.xpose.msra.mxu0 0
        %893 = vmatprep.subr.bf16.mxu0 0
        %894 = vmatpush1.bf16.xpose.msra.mxu0 0
        %895 = vmatprep.subr.bf16.mxu0 0
        %896 = vmatpush1.bf16.xpose.msra.mxu0 0
        %897 = vmatprep.subr.bf16.mxu0 0
        %898 = vmatpush1.bf16.xpose.msra.mxu0 0
        %899 = vmatprep.subr.bf16.mxu0 0
        %900 = vmatpush1.bf16.xpose.msra.mxu0 0
        %901 = vmatprep.subr.bf16.mxu0 0
        %902 = vmatpush1.bf16.xpose.msra.mxu0 0
        %903 = vmatprep.mubr.bf16.mxu0 0
        %904 = vmatmul.mubr.bf16.gmra.mrb[0].mxu0 %v866
        %v905 = vpop.f32.mrb[0].mxu0
        %v906 = vadd.f32 0.0, %v905
        %v907 = vpop.f32.mrb[0].mxu0
        %v908 = vpop.f32.mrb[0].mxu0
        %v909 = vpop.f32.mrb[0].mxu0
        %910 = vdwg.mxu0
        %v913 = vunpack.c.l.b16 %v567
        %v914 = vunpack.c.l.b16 %v568
        %v915 = vpack.c.b16 %v914, %v913
        %v917 = vsel %vm762, %v556, 0
        %v920 = vsel %vm762, %v915, 0
        %922 = vmatprep.subr.bf16.mxu0 0
        %923 = vmatpush1.bf16.xpose.msra.mxu0 %v920
        %924 = vmatprep.subr.bf16.mxu0 0
        %925 = vmatpush1.bf16.xpose.msra.mxu0 0
        %926 = vmatprep.subr.bf16.mxu0 0
        %927 = vmatpush1.bf16.xpose.msra.mxu0 0
        %928 = vmatprep.subr.bf16.mxu0 0
        %929 = vmatpush1.bf16.xpose.msra.mxu0 0
        %930 = vmatprep.subr.bf16.mxu0 0
        %931 = vmatpush1.bf16.xpose.msra.mxu0 0
        %932 = vmatprep.subr.bf16.mxu0 0
        %933 = vmatpush1.bf16.xpose.msra.mxu0 0
        %934 = vmatprep.subr.bf16.mxu0 0
        %935 = vmatpush1.bf16.xpose.msra.mxu0 0
        %936 = vmatprep.subr.bf16.mxu0 0
        %937 = vmatpush1.bf16.xpose.msra.mxu0 0
        %938 = vmatprep.subr.bf16.mxu0 0
        %939 = vmatpush1.bf16.xpose.msra.mxu0 0
        %940 = vmatprep.subr.bf16.mxu0 0
        %941 = vmatpush1.bf16.xpose.msra.mxu0 0
        %942 = vmatprep.subr.bf16.mxu0 0
        %943 = vmatpush1.bf16.xpose.msra.mxu0 0
        %944 = vmatprep.subr.bf16.mxu0 0
        %945 = vmatpush1.bf16.xpose.msra.mxu0 0
        %946 = vmatprep.subr.bf16.mxu0 0
        %947 = vmatpush1.bf16.xpose.msra.mxu0 0
        %948 = vmatprep.subr.bf16.mxu0 0
        %949 = vmatpush1.bf16.xpose.msra.mxu0 0
        %950 = vmatprep.subr.bf16.mxu0 0
        %951 = vmatpush1.bf16.xpose.msra.mxu0 0
        %952 = vmatprep.subr.bf16.mxu0 0
        %953 = vmatpush1.bf16.xpose.msra.mxu0 0
        %954 = vmatprep.mubr.bf16.mxu0 0
        %955 = vmatmul.mubr.bf16.gmra.mrb[0].mxu0 %v917
        %v956 = vpop.f32.mrb[0].mxu0
        %v957 = vadd.f32 0.0, %v956
        %v958 = vpop.f32.mrb[0].mxu0
        %v959 = vpop.f32.mrb[0].mxu0
        %v960 = vpop.f32.mrb[0].mxu0
        %961 = vdwg.mxu0
        %v964 = vunpack.c.l.b16 %v569
        %v965 = vunpack.c.l.b16 %v570
        %v966 = vpack.c.b16 %v965, %v964
        %v968 = vsel %vm762, %v557, 0
        %v971 = vsel %vm762, %v966, 0
        %973 = vmatprep.subr.bf16.mxu0 0
        %974 = vmatpush1.bf16.xpose.msra.mxu0 %v971
        %975 = vmatprep.subr.bf16.mxu0 0
        %976 = vmatpush1.bf16.xpose.msra.mxu0 0
        %977 = vmatprep.subr.bf16.mxu0 0
        %978 = vmatpush1.bf16.xpose.msra.mxu0 0
        %979 = vmatprep.subr.bf16.mxu0 0
        %980 = vmatpush1.bf16.xpose.msra.mxu0 0
        %981 = vmatprep.subr.bf16.mxu0 0
        %982 = vmatpush1.bf16.xpose.msra.mxu0 0
        %983 = vmatprep.subr.bf16.mxu0 0
        %984 = vmatpush1.bf16.xpose.msra.mxu0 0
        %985 = vmatprep.subr.bf16.mxu0 0
        %986 = vmatpush1.bf16.xpose.msra.mxu0 0
        %987 = vmatprep.subr.bf16.mxu0 0
        %988 = vmatpush1.bf16.xpose.msra.mxu0 0
        %989 = vmatprep.subr.bf16.mxu0 0
        %990 = vmatpush1.bf16.xpose.msra.mxu0 0
        %991 = vmatprep.subr.bf16.mxu0 0
        %992 = vmatpush1.bf16.xpose.msra.mxu0 0
        %993 = vmatprep.subr.bf16.mxu0 0
        %994 = vmatpush1.bf16.xpose.msra.mxu0 0
        %995 = vmatprep.subr.bf16.mxu0 0
        %996 = vmatpush1.bf16.xpose.msra.mxu0 0
        %997 = vmatprep.subr.bf16.mxu0 0
        %998 = vmatpush1.bf16.xpose.msra.mxu0 0
        %999 = vmatprep.subr.bf16.mxu0 0
        %1000 = vmatpush1.bf16.xpose.msra.mxu0 0
        %1001 = vmatprep.subr.bf16.mxu0 0
        %1002 = vmatpush1.bf16.xpose.msra.mxu0 0
        %1003 = vmatprep.subr.bf16.mxu0 0
        %1004 = vmatpush1.bf16.xpose.msra.mxu0 0
        %1005 = vmatprep.mubr.bf16.mxu0 0
        %1006 = vmatmul.mubr.bf16.gmra.mrb[0].mxu0 %v968
        %v1007 = vpop.f32.mrb[0].mxu0
        %v1008 = vadd.f32 0.0, %v1007
        %v1009 = vpop.f32.mrb[0].mxu0
        %v1010 = vpop.f32.mrb[0].mxu0
        %v1011 = vpop.f32.mrb[0].mxu0
        %1012 = vdwg.mxu0
        %v1015 = vunpack.c.l.b16 %v571
        %v1016 = vunpack.c.l.b16 %v572
        %v1017 = vpack.c.b16 %v1016, %v1015
        %v1019 = vsel %vm762, %v558, 0
        %v1022 = vsel %vm762, %v1017, 0
        %1024 = vmatprep.subr.bf16.mxu0 0
        %1025 = vmatpush1.bf16.xpose.msra.mxu0 %v1022
        %1026 = vmatprep.subr.bf16.mxu0 0
        %1027 = vmatpush1.bf16.xpose.msra.mxu0 0
        %1028 = vmatprep.subr.bf16.mxu0 0
        %1029 = vmatpush1.bf16.xpose.msra.mxu0 0
        %1030 = vmatprep.subr.bf16.mxu0 0
        %1031 = vmatpush1.bf16.xpose.msra.mxu0 0
        %1032 = vmatprep.subr.bf16.mxu0 0
        %1033 = vmatpush1.bf16.xpose.msra.mxu0 0
        %1034 = vmatprep.subr.bf16.mxu0 0
        %1035 = vmatpush1.bf16.xpose.msra.mxu0 0
        %1036 = vmatprep.subr.bf16.mxu0 0
        %1037 = vmatpush1.bf16.xpose.msra.mxu0 0
        %1038 = vmatprep.subr.bf16.mxu0 0
        %1039 = vmatpush1.bf16.xpose.msra.mxu0 0
        %1040 = vmatprep.subr.bf16.mxu0 0
        %1041 = vmatpush1.bf16.xpose.msra.mxu0 0
        %1042 = vmatprep.subr.bf16.mxu0 0
        %1043 = vmatpush1.bf16.xpose.msra.mxu0 0
        %1044 = vmatprep.subr.bf16.mxu0 0
        %1045 = vmatpush1.bf16.xpose.msra.mxu0 0
        %1046 = vmatprep.subr.bf16.mxu0 0
        %1047 = vmatpush1.bf16.xpose.msra.mxu0 0
        %1048 = vmatprep.subr.bf16.mxu0 0
        %1049 = vmatpush1.bf16.xpose.msra.mxu0 0
        %1050 = vmatprep.subr.bf16.mxu0 0
        %1051 = vmatpush1.bf16.xpose.msra.mxu0 0
        %1052 = vmatprep.subr.bf16.mxu0 0
        %1053 = vmatpush1.bf16.xpose.msra.mxu0 0
        %1054 = vmatprep.subr.bf16.mxu0 0
        %1055 = vmatpush1.bf16.xpose.msra.mxu0 0
        %1056 = vmatprep.mubr.bf16.mxu0 0
        %1057 = vmatmul.mubr.bf16.gmra.mrb[0].mxu0 %v1019
        %v1058 = vpop.f32.mrb[0].mxu0
        %v1059 = vadd.f32 0.0, %v1058
        %v1060 = vpop.f32.mrb[0].mxu0
        %v1061 = vpop.f32.mrb[0].mxu0
        %v1062 = vpop.f32.mrb[0].mxu0
        %1063 = vdwg.mxu0
        %v1066 = vunpack.c.l.b16 %v573
        %v1067 = vunpack.c.l.b16 %v574
        %v1068 = vpack.c.b16 %v1067, %v1066
        %v1070 = vsel %vm762, %v559, 0
        %v1073 = vsel %vm762, %v1068, 0
        %1075 = vmatprep.subr.bf16.mxu0 0
        %1076 = vmatpush1.bf16.xpose.msra.mxu0 %v1073
        %1077 = vmatprep.subr.bf16.mxu0 0
        %1078 = vmatpush1.bf16.xpose.msra.mxu0 0
        %1079 = vmatprep.subr.bf16.mxu0 0
        %1080 = vmatpush1.bf16.xpose.msra.mxu0 0
        %1081 = vmatprep.subr.bf16.mxu0 0
        %1082 = vmatpush1.bf16.xpose.msra.mxu0 0
        %1083 = vmatprep.subr.bf16.mxu0 0
        %1084 = vmatpush1.bf16.xpose.msra.mxu0 0
        %1085 = vmatprep.subr.bf16.mxu0 0
        %1086 = vmatpush1.bf16.xpose.msra.mxu0 0
        %1087 = vmatprep.subr.bf16.mxu0 0
        %1088 = vmatpush1.bf16.xpose.msra.mxu0 0
        %1089 = vmatprep.subr.bf16.mxu0 0
        %1090 = vmatpush1.bf16.xpose.msra.mxu0 0
        %1091 = vmatprep.subr.bf16.mxu0 0
        %1092 = vmatpush1.bf16.xpose.msra.mxu0 0
        %1093 = vmatprep.subr.bf16.mxu0 0
        %1094 = vmatpush1.bf16.xpose.msra.mxu0 0
        %1095 = vmatprep.subr.bf16.mxu0 0
        %1096 = vmatpush1.bf16.xpose.msra.mxu0 0
        %1097 = vmatprep.subr.bf16.mxu0 0
        %1098 = vmatpush1.bf16.xpose.msra.mxu0 0
        %1099 = vmatprep.subr.bf16.mxu0 0
        %1100 = vmatpush1.bf16.xpose.msra.mxu0 0
        %1101 = vmatprep.subr.bf16.mxu0 0
        %1102 = vmatpush1.bf16.xpose.msra.mxu0 0
        %1103 = vmatprep.subr.bf16.mxu0 0
        %1104 = vmatpush1.bf16.xpose.msra.mxu0 0
        %1105 = vmatprep.subr.bf16.mxu0 0
        %1106 = vmatpush1.bf16.xpose.msra.mxu0 0
        %1107 = vmatprep.mubr.bf16.mxu0 0
        %1108 = vmatmul.mubr.bf16.gmra.mrb[0].mxu0 %v1070
        %v1109 = vpop.f32.mrb[0].mxu0
        %v1110 = vadd.f32 0.0, %v1109
        %v1111 = vpop.f32.mrb[0].mxu0
        %v1112 = vpop.f32.mrb[0].mxu0
        %v1113 = vpop.f32.mrb[0].mxu0
        %1114 = vdwg.mxu0
        %v1117 = vunpack.c.l.b16 %v575
        %v1118 = vunpack.c.l.b16 %v576
        %v1119 = vpack.c.b16 %v1118, %v1117
        %v1121 = vsel %vm762, %v560, 0
        %v1124 = vsel %vm762, %v1119, 0
        %1126 = vmatprep.subr.bf16.mxu0 0
        %1127 = vmatpush1.bf16.xpose.msra.mxu0 %v1124
        %1128 = vmatprep.subr.bf16.mxu0 0
        %1129 = vmatpush1.bf16.xpose.msra.mxu0 0
        %1130 = vmatprep.subr.bf16.mxu0 0
        %1131 = vmatpush1.bf16.xpose.msra.mxu0 0
        %1132 = vmatprep.subr.bf16.mxu0 0
        %1133 = vmatpush1.bf16.xpose.msra.mxu0 0
        %1134 = vmatprep.subr.bf16.mxu0 0
        %1135 = vmatpush1.bf16.xpose.msra.mxu0 0
        %1136 = vmatprep.subr.bf16.mxu0 0
        %1137 = vmatpush1.bf16.xpose.msra.mxu0 0
        %1138 = vmatprep.subr.bf16.mxu0 0
        %1139 = vmatpush1.bf16.xpose.msra.mxu0 0
        %1140 = vmatprep.subr.bf16.mxu0 0
        %1141 = vmatpush1.bf16.xpose.msra.mxu0 0
        %1142 = vmatprep.subr.bf16.mxu0 0
        %1143 = vmatpush1.bf16.xpose.msra.mxu0 0
        %1144 = vmatprep.subr.bf16.mxu0 0
        %1145 = vmatpush1.bf16.xpose.msra.mxu0 0
        %1146 = vmatprep.subr.bf16.mxu0 0
        %1147 = vmatpush1.bf16.xpose.msra.mxu0 0
        %1148 = vmatprep.subr.bf16.mxu0 0
        %1149 = vmatpush1.bf16.xpose.msra.mxu0 0
        %1150 = vmatprep.subr.bf16.mxu0 0
        %1151 = vmatpush1.bf16.xpose.msra.mxu0 0
        %1152 = vmatprep.subr.bf16.mxu0 0
        %1153 = vmatpush1.bf16.xpose.msra.mxu0 0
        %1154 = vmatprep.subr.bf16.mxu0 0
        %1155 = vmatpush1.bf16.xpose.msra.mxu0 0
        %1156 = vmatprep.subr.bf16.mxu0 0
        %1157 = vmatpush1.bf16.xpose.msra.mxu0 0
        %1158 = vmatprep.mubr.bf16.mxu0 0
        %1159 = vmatmul.mubr.bf16.gmra.mrb[0].mxu0 %v1121
        %v1160 = vpop.f32.mrb[0].mxu0
        %v1161 = vadd.f32 0.0, %v1160
        %v1162 = vpop.f32.mrb[0].mxu0
        %v1163 = vpop.f32.mrb[0].mxu0
        %v1164 = vpop.f32.mrb[0].mxu0
        %1165 = vdwg.mxu0
        %v1166 = vlaneseq
        %v1167 = vshrl.u32 %v1166, 7
        %v1168 = vsub.s32 0, %v1167
        %v1169 = vrot.slane %v674, %v1168
        %v1170 = vlaneseq
        %v1171 = vshrl.u32 %v1170, 7
        %v1172 = vsub.s32 0, %v1171
        %v1173 = vrot.slane %v688, %v1172
        %v1174 = vlaneseq
        %v1175 = vshrl.u32 %v1174, 7
        %v1176 = vsub.s32 0, %v1175
        %v1177 = vrot.slane %v696, %v1176
        %v1178 = vlaneseq
        %v1179 = vshrl.u32 %v1178, 7
        %v1180 = vsub.s32 0, %v1179
        %v1181 = vrot.slane %v698, %v1180
        %v1182 = vlaneseq
        %v1183 = vshrl.u32 %v1182, 7
        %v1184 = vsub.s32 0, %v1183
        %v1185 = vrot.slane %v681, %v1184
        %v1186 = vlaneseq
        %v1187 = vshrl.u32 %v1186, 7
        %v1188 = vsub.s32 0, %v1187
        %v1189 = vrot.slane %v695, %v1188
        %v1190 = vlaneseq
        %v1191 = vshrl.u32 %v1190, 7
        %v1192 = vsub.s32 0, %v1191
        %v1193 = vrot.slane %v697, %v1192
        %v1194 = vlaneseq
        %v1195 = vshrl.u32 %v1194, 7
        %v1196 = vsub.s32 0, %v1195
        %v1197 = vrot.slane %v699, %v1196
        %vm1198 = vcmp.ge.s32.totalorder %v1169, %v707
        %vm1199 = vcmp.ge.s32.totalorder %v1173, %v714
        %vm1200 = vcmp.ge.s32.totalorder %v1177, %v721
        %vm1201 = vcmp.ge.s32.totalorder %v1181, %v728
        %vm1202 = vcmp.ge.s32.totalorder %v1185, %v735
        %vm1203 = vcmp.ge.s32.totalorder %v1189, %v742
        %vm1204 = vcmp.ge.s32.totalorder %v1193, %v749
        %vm1205 = vcmp.ge.s32.totalorder %v1197, %v756
        %vm1206 = vcmp.le.s32.totalorder %v1169, %v600
        %vm1207 = vcmp.le.s32.totalorder %v1173, %v607
        %vm1208 = vcmp.le.s32.totalorder %v1177, %v614
        %vm1209 = vcmp.le.s32.totalorder %v1181, %v621
        %vm1210 = vcmp.le.s32.totalorder %v1185, %v628
        %vm1211 = vcmp.le.s32.totalorder %v1189, %v635
        %vm1212 = vcmp.le.s32.totalorder %v1193, %v642
        %vm1213 = vcmp.le.s32.totalorder %v1197, %v649
        %vm1214 = vmand %vm1198, %vm1206
        %vm1215 = vmand %vm1199, %vm1207
        %vm1216 = vmand %vm1200, %vm1208
        %vm1217 = vmand %vm1201, %vm1209
        %vm1218 = vmand %vm1202, %vm1210
        %vm1219 = vmand %vm1203, %vm1211
        %vm1220 = vmand %vm1204, %vm1212
        %vm1221 = vmand %vm1205, %vm1213
        %v1222 = vsel %vm1214, %v804, -1e+09
        %v1223 = vsel %vm1215, %v855, -1e+09
        %v1224 = vsel %vm1216, %v906, -1e+09
        %v1225 = vsel %vm1217, %v957, -1e+09
        %v1226 = vsel %vm1218, %v1008, -1e+09
        %v1227 = vsel %vm1219, %v1059, -1e+09
        %v1228 = vsel %vm1220, %v1110, -1e+09
        %v1229 = vsel %vm1221, %v1161, -1e+09
        %vm1230 = vcmp.eq.s32.totalorder %v1169, %v600
        %vm1231 = vcmp.eq.s32.totalorder %v1173, %v607
        %vm1232 = vcmp.eq.s32.totalorder %v1177, %v614
        %vm1233 = vcmp.eq.s32.totalorder %v1181, %v621
        %vm1234 = vcmp.eq.s32.totalorder %v1185, %v628
        %vm1235 = vcmp.eq.s32.totalorder %v1189, %v635
        %vm1236 = vcmp.eq.s32.totalorder %v1193, %v642
        %vm1237 = vcmp.eq.s32.totalorder %v1197, %v649
        %v1238 = vsel %vm1230, -100000.0, %v1222
        %v1239 = vsel %vm1231, -100000.0, %v1223
        %v1240 = vsel %vm1232, -100000.0, %v1224
        %v1241 = vsel %vm1233, -100000.0, %v1225
        %v1242 = vsel %vm1234, -100000.0, %v1226
        %v1243 = vsel %vm1235, -100000.0, %v1227
        %v1244 = vsel %vm1236, -100000.0, %v1228
        %v1245 = vsel %vm1237, -100000.0, %v1229
        %v1246 = vsel %vm762, %v1238, -inf
        %1247 = vmax.xlane.f32.xlu0 %v1246
        %v1248 = vpop.xlane.xlu0 %1247
        %v1249 = vsel %vm762, %v1239, -inf
        %1250 = vmax.xlane.f32.xlu0 %v1249
        %v1251 = vpop.xlane.xlu0 %1250
        %v1252 = vsel %vm762, %v1240, -inf
        %1253 = vmax.xlane.f32.xlu0 %v1252
        %v1254 = vpop.xlane.xlu0 %1253
        %v1255 = vsel %vm762, %v1241, -inf
        %1256 = vmax.xlane.f32.xlu0 %v1255
        %v1257 = vpop.xlane.xlu0 %1256
        %v1258 = vsel %vm762, %v1242, -inf
        %1259 = vmax.xlane.f32.xlu0 %v1258
        %v1260 = vpop.xlane.xlu0 %1259
        %v1261 = vsel %vm762, %v1243, -inf
        %1262 = vmax.xlane.f32.xlu0 %v1261
        %v1263 = vpop.xlane.xlu0 %1262
        %v1264 = vsel %vm762, %v1244, -inf
        %1265 = vmax.xlane.f32.xlu0 %v1264
        %v1266 = vpop.xlane.xlu0 %1265
        %v1267 = vsel %vm762, %v1245, -inf
        %1268 = vmax.xlane.f32.xlu0 %v1267
        %v1269 = vpop.xlane.xlu0 %1268
        %v1270 = vsub.f32 %v1238, %v1248
        %v1271 = vsub.f32 %v1239, %v1251
        %v1272 = vsub.f32 %v1240, %v1254
        %v1273 = vsub.f32 %v1241, %v1257
        %v1274 = vsub.f32 %v1242, %v1260
        %v1275 = vsub.f32 %v1243, %v1263
        %v1276 = vsub.f32 %v1244, %v1266
        %v1277 = vsub.f32 %v1245, %v1269
        %v1278 = vmul.f32 %v1270, 1.442695
        %v1279 = vpow.pop %v1278
        %v1280 = vmul.f32 %v1271, 1.442695
        %v1281 = vpow.pop %v1280
        %v1282 = vmul.f32 %v1272, 1.442695
        %v1283 = vpow.pop %v1282
        %v1284 = vmul.f32 %v1273, 1.442695
        %v1285 = vpow.pop %v1284
        %v1286 = vmul.f32 %v1274, 1.442695
        %v1287 = vpow.pop %v1286
        %v1288 = vmul.f32 %v1275, 1.442695
        %v1289 = vpow.pop %v1288
        %v1290 = vmul.f32 %v1276, 1.442695
        %v1291 = vpow.pop %v1290
        %v1292 = vmul.f32 %v1277, 1.442695
        %v1293 = vpow.pop %v1292
        %v1294 = vsel %vm762, %v1279, 0.0
        %1295 = vadd.xlane.f32.xlu0 %v1294
        %v1296 = vpop.xlane.xlu0 %1295
        %v1297 = vsel %vm762, %v1281, 0.0
        %1298 = vadd.xlane.f32.xlu0 %v1297
        %v1299 = vpop.xlane.xlu0 %1298
        %v1300 = vsel %vm762, %v1283, 0.0
        %1301 = vadd.xlane.f32.xlu0 %v1300
        %v1302 = vpop.xlane.xlu0 %1301
        %v1303 = vsel %vm762, %v1285, 0.0
        %1304 = vadd.xlane.f32.xlu0 %v1303
        %v1305 = vpop.xlane.xlu0 %1304
        %v1306 = vsel %vm762, %v1287, 0.0
        %1307 = vadd.xlane.f32.xlu0 %v1306
        %v1308 = vpop.xlane.xlu0 %1307
        %v1309 = vsel %vm762, %v1289, 0.0
        %1310 = vadd.xlane.f32.xlu0 %v1309
        %v1311 = vpop.xlane.xlu0 %1310
        %v1312 = vsel %vm762, %v1291, 0.0
        %1313 = vadd.xlane.f32.xlu0 %v1312
        %v1314 = vpop.xlane.xlu0 %1313
        %v1315 = vsel %vm762, %v1293, 0.0
        %1316 = vadd.xlane.f32.xlu0 %v1315
        %v1317 = vpop.xlane.xlu0 %1316
        %v1318 = vlog2.pop %v1296
        %v1319 = vmul.f32 %v1318, 0.6931472
        %v1320 = vlog2.pop %v1299
        %v1321 = vmul.f32 %v1320, 0.6931472
        %v1322 = vlog2.pop %v1302
        %v1323 = vmul.f32 %v1322, 0.6931472
        %v1324 = vlog2.pop %v1305
        %v1325 = vmul.f32 %v1324, 0.6931472
        %v1326 = vlog2.pop %v1308
        %v1327 = vmul.f32 %v1326, 0.6931472
        %v1328 = vlog2.pop %v1311
        %v1329 = vmul.f32 %v1328, 0.6931472
        %v1330 = vlog2.pop %v1314
        %v1331 = vmul.f32 %v1330, 0.6931472
        %v1332 = vlog2.pop %v1317
        %v1333 = vmul.f32 %v1332, 0.6931472
        %v1334 = vadd.f32 %v1248, %v1319
        %v1335 = vadd.f32 %v1251, %v1321
        %v1336 = vadd.f32 %v1254, %v1323
        %v1337 = vadd.f32 %v1257, %v1325
        %v1338 = vadd.f32 %v1260, %v1327
        %v1339 = vadd.f32 %v1263, %v1329
        %v1340 = vadd.f32 %v1266, %v1331
        %v1341 = vadd.f32 %v1269, %v1333
        %v1342 = vld [vmem:[%s542] sm:$0xf]
        %v1343 = vld [vmem:[%s542 + $0x4] sm:$0xf]
        %v1344 = vld [vmem:[%s542 + $0x8] sm:$0xf]
        %v1345 = vld [vmem:[%s542 + $0xc] sm:$0xf]
        %v1346 = vld [vmem:[%s542 + $0x10] sm:$0xf]
        %v1347 = vld [vmem:[%s542 + $0x14] sm:$0xf]
        %v1348 = vld [vmem:[%s542 + $0x18] sm:$0xf]
        %v1349 = vld [vmem:[%s542 + $0x1c] sm:$0xf]
        %v1350 = vunpack.c.l.bf16 %v1342
        %v1351 = vunpack.c.l.bf16 %v1343
        %v1352 = vunpack.c.l.bf16 %v1344
        %v1353 = vunpack.c.l.bf16 %v1345
        %v1354 = vunpack.c.l.bf16 %v1346
        %v1355 = vunpack.c.l.bf16 %v1347
        %v1356 = vunpack.c.l.bf16 %v1348
        %v1357 = vunpack.c.l.bf16 %v1349
        %v1358 = vmul.f32 %v1279, %v1350
        %v1359 = vmul.f32 %v1281, %v1351
        %v1360 = vmul.f32 %v1283, %v1352
        %v1361 = vmul.f32 %v1285, %v1353
        %v1362 = vmul.f32 %v1287, %v1354
        %v1363 = vmul.f32 %v1289, %v1355
        %v1364 = vmul.f32 %v1291, %v1356
        %v1365 = vmul.f32 %v1293, %v1357
        %v1366 = vrcp.pop %v1296
        %v1367 = vrcp.pop %v1299
        %v1368 = vrcp.pop %v1302
        %v1369 = vrcp.pop %v1305
        %v1370 = vrcp.pop %v1308
        %v1371 = vrcp.pop %v1311
        %v1372 = vrcp.pop %v1314
        %v1373 = vrcp.pop %v1317
        %v1374 = vmul.f32 %v1358, %v1366
        %v1375 = vmul.f32 %v1359, %v1367
        %v1376 = vmul.f32 %v1360, %v1368
        %v1377 = vmul.f32 %v1361, %v1369
        %v1378 = vmul.f32 %v1362, %v1370
        %v1379 = vmul.f32 %v1363, %v1371
        %v1380 = vmul.f32 %v1364, %v1372
        %v1381 = vmul.f32 %v1365, %v1373
        %v1382 = vpack.c.bf16 %v1374, %v1374
        %v1383 = vpack.c.bf16 %v1375, %v1375
        %v1384 = vpack.c.bf16 %v1376, %v1376
        %v1385 = vpack.c.bf16 %v1377, %v1377
        %v1386 = vpack.c.bf16 %v1378, %v1378
        %v1387 = vpack.c.bf16 %v1379, %v1379
        %v1388 = vpack.c.bf16 %v1380, %v1380
        %v1389 = vpack.c.bf16 %v1381, %v1381
        %v1392 = vunpack.c.l.b16 %v577
        %v1393 = vunpack.c.l.b16 %v578
        %v1394 = vpack.c.b16 %v1393, %v1392
        %v1397 = vsel %vm762, %v1382, 0
        %1399 = vmatprep.subr.bf16.mxu0 0
        %1400 = vmatpush1.bf16.msra.mxu0 %v1394
        %1401 = vmatprep.subr.bf16.mxu0 0
        %1402 = vmatpush1.bf16.msra.mxu0 0
        %1403 = vmatprep.subr.bf16.mxu0 0
        %1404 = vmatpush1.bf16.msra.mxu0 0
        %1405 = vmatprep.subr.bf16.mxu0 0
        %1406 = vmatpush1.bf16.msra.mxu0 0
        %1407 = vmatprep.subr.bf16.mxu0 0
        %1408 = vmatpush1.bf16.msra.mxu0 0
        %1409 = vmatprep.subr.bf16.mxu0 0
        %1410 = vmatpush1.bf16.msra.mxu0 0
        %1411 = vmatprep.subr.bf16.mxu0 0
        %1412 = vmatpush1.bf16.msra.mxu0 0
        %1413 = vmatprep.subr.bf16.mxu0 0
        %1414 = vmatpush1.bf16.msra.mxu0 0
        %1415 = vmatprep.subr.bf16.mxu0 0
        %1416 = vmatpush1.bf16.msra.mxu0 0
        %1417 = vmatprep.subr.bf16.mxu0 0
        %1418 = vmatpush1.bf16.msra.mxu0 0
        %1419 = vmatprep.subr.bf16.mxu0 0
        %1420 = vmatpush1.bf16.msra.mxu0 0
        %1421 = vmatprep.subr.bf16.mxu0 0
        %1422 = vmatpush1.bf16.msra.mxu0 0
        %1423 = vmatprep.subr.bf16.mxu0 0
        %1424 = vmatpush1.bf16.msra.mxu0 0
        %1425 = vmatprep.subr.bf16.mxu0 0
        %1426 = vmatpush1.bf16.msra.mxu0 0
        %1427 = vmatprep.subr.bf16.mxu0 0
        %1428 = vmatpush1.bf16.msra.mxu0 0
        %1429 = vmatprep.subr.bf16.mxu0 0
        %1430 = vmatpush1.bf16.msra.mxu0 0
        %1431 = vmatprep.mubr.bf16.mxu0 0
        %1432 = vmatmul.mubr.bf16.gmra.mrb[0].mxu0 %v1397
        %v1433 = vpop.f32.mrb[0].mxu0
        %v1434 = vadd.f32 0.0, %v1433
        %v1435 = vpop.f32.mrb[0].mxu0
        %v1436 = vpop.f32.mrb[0].mxu0
        %v1437 = vpop.f32.mrb[0].mxu0
        %1438 = vdwg.mxu0
        %v1441 = vunpack.c.l.b16 %v579
        %v1442 = vunpack.c.l.b16 %v580
        %v1443 = vpack.c.b16 %v1442, %v1441
        %v1446 = vsel %vm762, %v1383, 0
        %1448 = vmatprep.subr.bf16.mxu0 0
        %1449 = vmatpush1.bf16.msra.mxu0 %v1443
        %1450 = vmatprep.subr.bf16.mxu0 0
        %1451 = vmatpush1.bf16.msra.mxu0 0
        %1452 = vmatprep.subr.bf16.mxu0 0
        %1453 = vmatpush1.bf16.msra.mxu0 0
        %1454 = vmatprep.subr.bf16.mxu0 0
        %1455 = vmatpush1.bf16.msra.mxu0 0
        %1456 = vmatprep.subr.bf16.mxu0 0
        %1457 = vmatpush1.bf16.msra.mxu0 0
        %1458 = vmatprep.subr.bf16.mxu0 0
        %1459 = vmatpush1.bf16.msra.mxu0 0
        %1460 = vmatprep.subr.bf16.mxu0 0
        %1461 = vmatpush1.bf16.msra.mxu0 0
        %1462 = vmatprep.subr.bf16.mxu0 0
        %1463 = vmatpush1.bf16.msra.mxu0 0
        %1464 = vmatprep.subr.bf16.mxu0 0
        %1465 = vmatpush1.bf16.msra.mxu0 0
        %1466 = vmatprep.subr.bf16.mxu0 0
        %1467 = vmatpush1.bf16.msra.mxu0 0
        %1468 = vmatprep.subr.bf16.mxu0 0
        %1469 = vmatpush1.bf16.msra.mxu0 0
        %1470 = vmatprep.subr.bf16.mxu0 0
        %1471 = vmatpush1.bf16.msra.mxu0 0
        %1472 = vmatprep.subr.bf16.mxu0 0
        %1473 = vmatpush1.bf16.msra.mxu0 0
        %1474 = vmatprep.subr.bf16.mxu0 0
        %1475 = vmatpush1.bf16.msra.mxu0 0
        %1476 = vmatprep.subr.bf16.mxu0 0
        %1477 = vmatpush1.bf16.msra.mxu0 0
        %1478 = vmatprep.subr.bf16.mxu0 0
        %1479 = vmatpush1.bf16.msra.mxu0 0
        %1480 = vmatprep.mubr.bf16.mxu0 0
        %1481 = vmatmul.mubr.bf16.gmra.mrb[0].mxu0 %v1446
        %v1482 = vpop.f32.mrb[0].mxu0
        %v1483 = vadd.f32 0.0, %v1482
        %v1484 = vpop.f32.mrb[0].mxu0
        %v1485 = vpop.f32.mrb[0].mxu0
        %v1486 = vpop.f32.mrb[0].mxu0
        %1487 = vdwg.mxu0
        %v1490 = vunpack.c.l.b16 %v581
        %v1491 = vunpack.c.l.b16 %v582
        %v1492 = vpack.c.b16 %v1491, %v1490
        %v1495 = vsel %vm762, %v1384, 0
        %1497 = vmatprep.subr.bf16.mxu0 0
        %1498 = vmatpush1.bf16.msra.mxu0 %v1492
        %1499 = vmatprep.subr.bf16.mxu0 0
        %1500 = vmatpush1.bf16.msra.mxu0 0
        %1501 = vmatprep.subr.bf16.mxu0 0
        %1502 = vmatpush1.bf16.msra.mxu0 0
        %1503 = vmatprep.subr.bf16.mxu0 0
        %1504 = vmatpush1.bf16.msra.mxu0 0
        %1505 = vmatprep.subr.bf16.mxu0 0
        %1506 = vmatpush1.bf16.msra.mxu0 0
        %1507 = vmatprep.subr.bf16.mxu0 0
        %1508 = vmatpush1.bf16.msra.mxu0 0
        %1509 = vmatprep.subr.bf16.mxu0 0
        %1510 = vmatpush1.bf16.msra.mxu0 0
        %1511 = vmatprep.subr.bf16.mxu0 0
        %1512 = vmatpush1.bf16.msra.mxu0 0
        %1513 = vmatprep.subr.bf16.mxu0 0
        %1514 = vmatpush1.bf16.msra.mxu0 0
        %1515 = vmatprep.subr.bf16.mxu0 0
        %1516 = vmatpush1.bf16.msra.mxu0 0
        %1517 = vmatprep.subr.bf16.mxu0 0
        %1518 = vmatpush1.bf16.msra.mxu0 0
        %1519 = vmatprep.subr.bf16.mxu0 0
        %1520 = vmatpush1.bf16.msra.mxu0 0
        %1521 = vmatprep.subr.bf16.mxu0 0
        %1522 = vmatpush1.bf16.msra.mxu0 0
        %1523 = vmatprep.subr.bf16.mxu0 0
        %1524 = vmatpush1.bf16.msra.mxu0 0
        %1525 = vmatprep.subr.bf16.mxu0 0
        %1526 = vmatpush1.bf16.msra.mxu0 0
        %1527 = vmatprep.subr.bf16.mxu0 0
        %1528 = vmatpush1.bf16.msra.mxu0 0
        %1529 = vmatprep.mubr.bf16.mxu0 0
        %1530 = vmatmul.mubr.bf16.gmra.mrb[0].mxu0 %v1495
        %v1531 = vpop.f32.mrb[0].mxu0
        %v1532 = vadd.f32 0.0, %v1531
        %v1533 = vpop.f32.mrb[0].mxu0
        %v1534 = vpop.f32.mrb[0].mxu0
        %v1535 = vpop.f32.mrb[0].mxu0
        %1536 = vdwg.mxu0
        %v1539 = vunpack.c.l.b16 %v583
        %v1540 = vunpack.c.l.b16 %v584
        %v1541 = vpack.c.b16 %v1540, %v1539
        %v1544 = vsel %vm762, %v1385, 0
        %1546 = vmatprep.subr.bf16.mxu0 0
        %1547 = vmatpush1.bf16.msra.mxu0 %v1541
        %1548 = vmatprep.subr.bf16.mxu0 0
        %1549 = vmatpush1.bf16.msra.mxu0 0
        %1550 = vmatprep.subr.bf16.mxu0 0
        %1551 = vmatpush1.bf16.msra.mxu0 0
        %1552 = vmatprep.subr.bf16.mxu0 0
        %1553 = vmatpush1.bf16.msra.mxu0 0
        %1554 = vmatprep.subr.bf16.mxu0 0
        %1555 = vmatpush1.bf16.msra.mxu0 0
        %1556 = vmatprep.subr.bf16.mxu0 0
        %1557 = vmatpush1.bf16.msra.mxu0 0
        %1558 = vmatprep.subr.bf16.mxu0 0
        %1559 = vmatpush1.bf16.msra.mxu0 0
        %1560 = vmatprep.subr.bf16.mxu0 0
        %1561 = vmatpush1.bf16.msra.mxu0 0
        %1562 = vmatprep.subr.bf16.mxu0 0
        %1563 = vmatpush1.bf16.msra.mxu0 0
        %1564 = vmatprep.subr.bf16.mxu0 0
        %1565 = vmatpush1.bf16.msra.mxu0 0
        %1566 = vmatprep.subr.bf16.mxu0 0
        %1567 = vmatpush1.bf16.msra.mxu0 0
        %1568 = vmatprep.subr.bf16.mxu0 0
        %1569 = vmatpush1.bf16.msra.mxu0 0
        %1570 = vmatprep.subr.bf16.mxu0 0
        %1571 = vmatpush1.bf16.msra.mxu0 0
        %1572 = vmatprep.subr.bf16.mxu0 0
        %1573 = vmatpush1.bf16.msra.mxu0 0
        %1574 = vmatprep.subr.bf16.mxu0 0
        %1575 = vmatpush1.bf16.msra.mxu0 0
        %1576 = vmatprep.subr.bf16.mxu0 0
        %1577 = vmatpush1.bf16.msra.mxu0 0
        %1578 = vmatprep.mubr.bf16.mxu0 0
        %1579 = vmatmul.mubr.bf16.gmra.mrb[0].mxu0 %v1544
        %v1580 = vpop.f32.mrb[0].mxu0
        %v1581 = vadd.f32 0.0, %v1580
        %v1582 = vpop.f32.mrb[0].mxu0
        %v1583 = vpop.f32.mrb[0].mxu0
        %v1584 = vpop.f32.mrb[0].mxu0
        %1585 = vdwg.mxu0
        %v1588 = vunpack.c.l.b16 %v585
        %v1589 = vunpack.c.l.b16 %v586
        %v1590 = vpack.c.b16 %v1589, %v1588
        %v1593 = vsel %vm762, %v1386, 0
        %1595 = vmatprep.subr.bf16.mxu0 0
        %1596 = vmatpush1.bf16.msra.mxu0 %v1590
        %1597 = vmatprep.subr.bf16.mxu0 0
        %1598 = vmatpush1.bf16.msra.mxu0 0
        %1599 = vmatprep.subr.bf16.mxu0 0
        %1600 = vmatpush1.bf16.msra.mxu0 0
        %1601 = vmatprep.subr.bf16.mxu0 0
        %1602 = vmatpush1.bf16.msra.mxu0 0
        %1603 = vmatprep.subr.bf16.mxu0 0
        %1604 = vmatpush1.bf16.msra.mxu0 0
        %1605 = vmatprep.subr.bf16.mxu0 0
        %1606 = vmatpush1.bf16.msra.mxu0 0
        %1607 = vmatprep.subr.bf16.mxu0 0
        %1608 = vmatpush1.bf16.msra.mxu0 0
        %1609 = vmatprep.subr.bf16.mxu0 0
        %1610 = vmatpush1.bf16.msra.mxu0 0
        %1611 = vmatprep.subr.bf16.mxu0 0
        %1612 = vmatpush1.bf16.msra.mxu0 0
        %1613 = vmatprep.subr.bf16.mxu0 0
        %1614 = vmatpush1.bf16.msra.mxu0 0
        %1615 = vmatprep.subr.bf16.mxu0 0
        %1616 = vmatpush1.bf16.msra.mxu0 0
        %1617 = vmatprep.subr.bf16.mxu0 0
        %1618 = vmatpush1.bf16.msra.mxu0 0
        %1619 = vmatprep.subr.bf16.mxu0 0
        %1620 = vmatpush1.bf16.msra.mxu0 0
        %1621 = vmatprep.subr.bf16.mxu0 0
        %1622 = vmatpush1.bf16.msra.mxu0 0
        %1623 = vmatprep.subr.bf16.mxu0 0
        %1624 = vmatpush1.bf16.msra.mxu0 0
        %1625 = vmatprep.subr.bf16.mxu0 0
        %1626 = vmatpush1.bf16.msra.mxu0 0
        %1627 = vmatprep.mubr.bf16.mxu0 0
        %1628 = vmatmul.mubr.bf16.gmra.mrb[0].mxu0 %v1593
        %v1629 = vpop.f32.mrb[0].mxu0
        %v1630 = vadd.f32 0.0, %v1629
        %v1631 = vpop.f32.mrb[0].mxu0
        %v1632 = vpop.f32.mrb[0].mxu0
        %v1633 = vpop.f32.mrb[0].mxu0
        %1634 = vdwg.mxu0
        %v1637 = vunpack.c.l.b16 %v587
        %v1638 = vunpack.c.l.b16 %v588
        %v1639 = vpack.c.b16 %v1638, %v1637
        %v1642 = vsel %vm762, %v1387, 0
        %1644 = vmatprep.subr.bf16.mxu0 0
        %1645 = vmatpush1.bf16.msra.mxu0 %v1639
        %1646 = vmatprep.subr.bf16.mxu0 0
        %1647 = vmatpush1.bf16.msra.mxu0 0
        %1648 = vmatprep.subr.bf16.mxu0 0
        %1649 = vmatpush1.bf16.msra.mxu0 0
        %1650 = vmatprep.subr.bf16.mxu0 0
        %1651 = vmatpush1.bf16.msra.mxu0 0
        %1652 = vmatprep.subr.bf16.mxu0 0
        %1653 = vmatpush1.bf16.msra.mxu0 0
        %1654 = vmatprep.subr.bf16.mxu0 0
        %1655 = vmatpush1.bf16.msra.mxu0 0
        %1656 = vmatprep.subr.bf16.mxu0 0
        %1657 = vmatpush1.bf16.msra.mxu0 0
        %1658 = vmatprep.subr.bf16.mxu0 0
        %1659 = vmatpush1.bf16.msra.mxu0 0
        %1660 = vmatprep.subr.bf16.mxu0 0
        %1661 = vmatpush1.bf16.msra.mxu0 0
        %1662 = vmatprep.subr.bf16.mxu0 0
        %1663 = vmatpush1.bf16.msra.mxu0 0
        %1664 = vmatprep.subr.bf16.mxu0 0
        %1665 = vmatpush1.bf16.msra.mxu0 0
        %1666 = vmatprep.subr.bf16.mxu0 0
        %1667 = vmatpush1.bf16.msra.mxu0 0
        %1668 = vmatprep.subr.bf16.mxu0 0
        %1669 = vmatpush1.bf16.msra.mxu0 0
        %1670 = vmatprep.subr.bf16.mxu0 0
        %1671 = vmatpush1.bf16.msra.mxu0 0
        %1672 = vmatprep.subr.bf16.mxu0 0
        %1673 = vmatpush1.bf16.msra.mxu0 0
        %1674 = vmatprep.subr.bf16.mxu0 0
        %1675 = vmatpush1.bf16.msra.mxu0 0
        %1676 = vmatprep.mubr.bf16.mxu0 0
        %1677 = vmatmul.mubr.bf16.gmra.mrb[0].mxu0 %v1642
        %v1678 = vpop.f32.mrb[0].mxu0
        %v1679 = vadd.f32 0.0, %v1678
        %v1680 = vpop.f32.mrb[0].mxu0
        %v1681 = vpop.f32.mrb[0].mxu0
        %v1682 = vpop.f32.mrb[0].mxu0
        %1683 = vdwg.mxu0
        %v1686 = vunpack.c.l.b16 %v589
        %v1687 = vunpack.c.l.b16 %v590
        %v1688 = vpack.c.b16 %v1687, %v1686
        %v1691 = vsel %vm762, %v1388, 0
        %1693 = vmatprep.subr.bf16.mxu0 0
        %1694 = vmatpush1.bf16.msra.mxu0 %v1688
        %1695 = vmatprep.subr.bf16.mxu0 0
        %1696 = vmatpush1.bf16.msra.mxu0 0
        %1697 = vmatprep.subr.bf16.mxu0 0
        %1698 = vmatpush1.bf16.msra.mxu0 0
        %1699 = vmatprep.subr.bf16.mxu0 0
        %1700 = vmatpush1.bf16.msra.mxu0 0
        %1701 = vmatprep.subr.bf16.mxu0 0
        %1702 = vmatpush1.bf16.msra.mxu0 0
        %1703 = vmatprep.subr.bf16.mxu0 0
        %1704 = vmatpush1.bf16.msra.mxu0 0
        %1705 = vmatprep.subr.bf16.mxu0 0
        %1706 = vmatpush1.bf16.msra.mxu0 0
        %1707 = vmatprep.subr.bf16.mxu0 0
        %1708 = vmatpush1.bf16.msra.mxu0 0
        %1709 = vmatprep.subr.bf16.mxu0 0
        %1710 = vmatpush1.bf16.msra.mxu0 0
        %1711 = vmatprep.subr.bf16.mxu0 0
        %1712 = vmatpush1.bf16.msra.mxu0 0
        %1713 = vmatprep.subr.bf16.mxu0 0
        %1714 = vmatpush1.bf16.msra.mxu0 0
        %1715 = vmatprep.subr.bf16.mxu0 0
        %1716 = vmatpush1.bf16.msra.mxu0 0
        %1717 = vmatprep.subr.bf16.mxu0 0
        %1718 = vmatpush1.bf16.msra.mxu0 0
        %1719 = vmatprep.subr.bf16.mxu0 0
        %1720 = vmatpush1.bf16.msra.mxu0 0
        %1721 = vmatprep.subr.bf16.mxu0 0
        %1722 = vmatpush1.bf16.msra.mxu0 0
        %1723 = vmatprep.subr.bf16.mxu0 0
        %1724 = vmatpush1.bf16.msra.mxu0 0
        %1725 = vmatprep.mubr.bf16.mxu0 0
        %1726 = vmatmul.mubr.bf16.gmra.mrb[0].mxu0 %v1691
        %v1727 = vpop.f32.mrb[0].mxu0
        %v1728 = vadd.f32 0.0, %v1727
        %v1729 = vpop.f32.mrb[0].mxu0
        %v1730 = vpop.f32.mrb[0].mxu0
        %v1731 = vpop.f32.mrb[0].mxu0
        %1732 = vdwg.mxu0
        %v1735 = vunpack.c.l.b16 %v591
        %v1736 = vunpack.c.l.b16 %v592
        %v1737 = vpack.c.b16 %v1736, %v1735
        %v1740 = vsel %vm762, %v1389, 0
        %1742 = vmatprep.subr.bf16.mxu0 0
        %1743 = vmatpush1.bf16.msra.mxu0 %v1737
        %1744 = vmatprep.subr.bf16.mxu0 0
        %1745 = vmatpush1.bf16.msra.mxu0 0
        %1746 = vmatprep.subr.bf16.mxu0 0
        %1747 = vmatpush1.bf16.msra.mxu0 0
        %1748 = vmatprep.subr.bf16.mxu0 0
        %1749 = vmatpush1.bf16.msra.mxu0 0
        %1750 = vmatprep.subr.bf16.mxu0 0
        %1751 = vmatpush1.bf16.msra.mxu0 0
        %1752 = vmatprep.subr.bf16.mxu0 0
        %1753 = vmatpush1.bf16.msra.mxu0 0
        %1754 = vmatprep.subr.bf16.mxu0 0
        %1755 = vmatpush1.bf16.msra.mxu0 0
        %1756 = vmatprep.subr.bf16.mxu0 0
        %1757 = vmatpush1.bf16.msra.mxu0 0
        %1758 = vmatprep.subr.bf16.mxu0 0
        %1759 = vmatpush1.bf16.msra.mxu0 0
        %1760 = vmatprep.subr.bf16.mxu0 0
        %1761 = vmatpush1.bf16.msra.mxu0 0
        %1762 = vmatprep.subr.bf16.mxu0 0
        %1763 = vmatpush1.bf16.msra.mxu0 0
        %1764 = vmatprep.subr.bf16.mxu0 0
        %1765 = vmatpush1.bf16.msra.mxu0 0
        %1766 = vmatprep.subr.bf16.mxu0 0
        %1767 = vmatpush1.bf16.msra.mxu0 0
        %1768 = vmatprep.subr.bf16.mxu0 0
        %1769 = vmatpush1.bf16.msra.mxu0 0
        %1770 = vmatprep.subr.bf16.mxu0 0
        %1771 = vmatpush1.bf16.msra.mxu0 0
        %1772 = vmatprep.subr.bf16.mxu0 0
        %1773 = vmatpush1.bf16.msra.mxu0 0
        %1774 = vmatprep.mubr.bf16.mxu0 0
        %1775 = vmatmul.mubr.bf16.gmra.mrb[0].mxu0 %v1740
        %v1776 = vpop.f32.mrb[0].mxu0
        %v1777 = vadd.f32 0.0, %v1776
        %v1778 = vpop.f32.mrb[0].mxu0
        %v1779 = vpop.f32.mrb[0].mxu0
        %v1780 = vpop.f32.mrb[0].mxu0
        %1781 = vdwg.mxu0
        %1782 = vst.msk [vmem:[%s471] sm:$0xff] %vm762, %v1434
        %1783 = vst.msk [vmem:[%s471 + $0x8] sm:$0xff] %vm762, %v1483
        %1784 = vst.msk [vmem:[%s471 + $0x10] sm:$0xff] %vm762, %v1532
        %1785 = vst.msk [vmem:[%s471 + $0x18] sm:$0xff] %vm762, %v1581
        %1786 = vst.msk [vmem:[%s471 + $0x20] sm:$0xff] %vm762, %v1630
        %1787 = vst.msk [vmem:[%s471 + $0x28] sm:$0xff] %vm762, %v1679
        %1788 = vst.msk [vmem:[%s471 + $0x30] sm:$0xff] %vm762, %v1728
        %1789 = vst.msk [vmem:[%s471 + $0x38] sm:$0xff] %vm762, %v1777
        %v1798 = vlaneseq
        %v1799 = vand.u32 %v1798, 127
        %v1800 = vlaneseq
        %v1801 = vshrl.u32 %v1800, 7
        %v1802 = vsub.s32 %v1799, %v1801
        %v1803 = vrot.slane %v1334, %v1802
        %v1804 = vlaneseq
        %v1805 = vshrl.u32 %v1804, 7
        %v1806 = vsub.s32 %v1799, %v1805
        %v1807 = vrot.slane %v1335, %v1806
        %v1808 = vlaneseq
        %v1809 = vshrl.u32 %v1808, 7
        %v1810 = vsub.s32 %v1799, %v1809
        %v1811 = vrot.slane %v1336, %v1810
        %v1812 = vlaneseq
        %v1813 = vshrl.u32 %v1812, 7
        %v1814 = vsub.s32 %v1799, %v1813
        %v1815 = vrot.slane %v1337, %v1814
        %v1816 = vlaneseq
        %v1817 = vshrl.u32 %v1816, 7
        %v1818 = vsub.s32 %v1799, %v1817
        %v1819 = vrot.slane %v1338, %v1818
        %v1820 = vlaneseq
        %v1821 = vshrl.u32 %v1820, 7
        %v1822 = vsub.s32 %v1799, %v1821
        %v1823 = vrot.slane %v1339, %v1822
        %v1824 = vlaneseq
        %v1825 = vshrl.u32 %v1824, 7
        %v1826 = vsub.s32 %v1799, %v1825
        %v1827 = vrot.slane %v1340, %v1826
        %v1828 = vlaneseq
        %v1829 = vshrl.u32 %v1828, 7
        %v1830 = vsub.s32 %v1799, %v1829
        %v1831 = vrot.slane %v1341, %v1830
        %vm1832 = vcmask 1041409
        %v1833 = vsel %vm1832, %v1807, %v1803
        %vm1834 = vcmask 1042434
        %v1835 = vsel %vm1834, %v1811, %v1833
        %vm1836 = vcmask 1043459
        %v1837 = vsel %vm1836, %v1815, %v1835
        %vm1838 = vcmask 1044484
        %v1839 = vsel %vm1838, %v1819, %v1837
        %vm1840 = vcmask 1045509
        %v1841 = vsel %vm1840, %v1823, %v1839
        %vm1842 = vcmask 1046534
        %v1843 = vsel %vm1842, %v1827, %v1841
        %vm1844 = vcmask 1047559
        %v1845 = vsel %vm1844, %v1831, %v1843
        %vm1847 = vcmask 64512
        %1848 = vst.msk [vmem:[%s551] sm:$0xff] %vm1847, %v1845
        %s1849 = sand.u32 %s241, 1
        %s1850 = scalar_lea.sflag [#allocation3], %s1849
        %s1851 = sand.u32 %s241, 1
        %s1852 = smul.addr %s1851, 64
        %s1853 = scalar_lea.vmem [#allocation2], %s1852
        %p1854 = scmp.lt.s32.totalorder %s27, 3
        %s1855 = scalar_select %p1854, %s27, 3
        %p1856 = scmp.lt.s32.totalorder %s28, 0
        %s1857 = scalar_select %p1856, %s28, 0
        %s1858 = sadd.s32 %s1857, %s1855
        %s1859 = smul.addr %s1858, 8
        %s1860 = scalar_lea.vmem %s8, %s1859
        // Predicated region
        $region49: #{lsh_attention_forward.3} parent=47 // pred_check
          %p1861 = pneg %p251
        $region50: #{lsh_attention_forward.3} parent=47 // pred_check_branch
          %1863 = sbr.rel (%p1861) target = $region52
        $region51: #{lsh_attention_forward.3} parent=47 // pred_region
          %s1864 = smul.u32 8, %s28
          %s1866 = ssub.s32 1024, 1024
          %1867 = vsyncadd %s1850, %s1866
          %s1868 = smul.addr %s27, 8
          %s1869 = sadd.s32 %s1864, %s1868
          %s1870 = smul.addr %s1869, 128
          %s1871 = scalar_lea.hbm %s7, %s1870
          %s1872 = sshll.u32 %s1853, 4
          %s1873 = int_to_ptr.vmem [resolvable:$true] %s1872
          %1878 = dma.vmem_to_hbm [thread:$0]  %s1873, 1024, %s1871, %s1850, 128, 128, 8
        $region52: #{lsh_attention_forward.3} parent=47 // pred_fallthru
          _
        // Predicated region
        $region53: #{lsh_attention_forward.3} parent=47 // pred_check
          %p1879 = pneg %p279
        $region54: #{lsh_attention_forward.3} parent=47 // pred_check_branch
          %1881 = sbr.rel (%p1879) target = $region56
        $region55: #{lsh_attention_forward.3} parent=47 // pred_region
          _
        $region56: #{lsh_attention_forward.3} parent=47 // pred_fallthru
          _
      $region48: #{lsh_attention_forward.3} parent=5 // pred_fallthru
        _
      %p1882 = scmp.le.s32.totalorder 2, %s18
      // Predicated region
      $region57: #{lsh_attention_forward.3} parent=5 // pred_check
        %p1883 = pneg %p1882
      $region58: #{lsh_attention_forward.3} parent=5 // pred_check_branch
        %1885 = sbr.rel (%p1883) target = $region60
      $region59: #{lsh_attention_forward.3} parent=5 // pred_region
        %s1886 = ssub.s32 %s18, 2
        // Predicated region
        $region61: #{lsh_attention_forward.3} parent=59 // pred_check
          %p1887 = pneg %p257
        $region62: #{lsh_attention_forward.3} parent=59 // pred_check_branch
          %1889 = sbr.rel (%p1887) target = $region64
        $region63: #{lsh_attention_forward.3} parent=59 // pred_region
          %s1890 = sand.u32 %s242, 1
          %s1891 = scalar_lea.sflag [#allocation3], %s1890
          %s1892 = sand.u32 %s242, 1
          %s1893 = smul.addr %s1892, 64
          %s1894 = scalar_lea.vmem [#allocation2], %s1893
          %1895 = dma.done %s1891, 1024
        $region64: #{lsh_attention_forward.3} parent=59 // pred_fallthru
          _
        // Predicated region
        $region65: #{lsh_attention_forward.3} parent=59 // pred_check
          %p1896 = pneg %p285
        $region66: #{lsh_attention_forward.3} parent=59 // pred_check_branch
          %1898 = sbr.rel (%p1896) target = $region68
        $region67: #{lsh_attention_forward.3} parent=59 // pred_region
          %p1899 = scmp.lt.s32.totalorder %s29, 3
          %s1900 = scalar_select %p1899, %s29, 3
          %p1901 = scmp.lt.s32.totalorder %s30, 0
          %s1902 = scalar_select %p1901, %s30, 0
          %s1903 = sadd.s32 %s1902, %s1900
          %s1904 = smul.addr %s1903, 8
          %s1905 = scalar_lea.vmem %s8, %s1904
        $region68: #{lsh_attention_forward.3} parent=59 // pred_fallthru
          _
      $region60: #{lsh_attention_forward.3} parent=5 // pred_fallthru
        _
    $region6: #{lsh_attention_forward.3} parent=1 // loop_footer
      %s22 = sadd.s32 1, %s18
    $region7: #{lsh_attention_forward.3} parent=1 // loop_footer_branch
      %17 = sbr.rel target = $region3
    $region8: #{lsh_attention_forward.3} parent=1 // loop_exit
      _
    %1906 = vsyncpa [#allocation3], 1
    %s1907 = scalar_lea.sflag [#allocation3], 1
    %1908 = vsyncpa %s1907, 1

</llo_original>
